<compile_context>
chip_gen: v7x
topology: tpu7x:2x2x1
jax: 0.10.0
libtpu: 0.0.40
codegen_flags: <defaults>
</compile_context>

<pallas_src>
import numpy as np

import jax
import jax.numpy as jnp
from jax.experimental import pallas as pl
from jax.experimental.pallas import tpu as pltpu

# ---------------- model dimensions (small, synthetic) ----------------
T = 8            # number of phones per utterance
F = 64           # articulatory feature dimension of a phone vector
H = 32           # encoder hidden dim
MEL = 80         # mel bins
E = 192          # utterance (speaker) embedding dim (ECAPA gives 192)
P = 8            # prosody head width (col 0=duration, 1=pitch, 2=energy)
R = 4            # frames per phone (fixed length regulation, see TODO below)
TM = T * R       # mel frames per utterance after length regulation
C = 32           # vocoder conv channels
K = 3            # vocoder conv kernel size (time axis)
U = 8            # upsample factor
N = TM * U       # wave samples per utterance
LANE = 128       # TPU lane width; packed acoustic-slab width
B = 16           # utterances per call (batched generation)
BB = 8           # utterances per grid step (block batch)
NB = B // BB     # grid size
TARGET_DB = -24.0     # loudness_in_db default of forward()
SR = 24000

# ---------------- packed bf16 weight-slab row offsets ----------------
R_W1 = 0
R_WU = R_W1 + F                  # 64
R_WOUT = R_WU + E                # 256
R_WK = R_WOUT + H                # 288   (K blocks of [128, C])
R_WO = R_WK + K * LANE           # 672
R_XSEL = R_WO + C                # 704   speaker-broadcast selector
R_SEL = R_XSEL + BB * T          # 768   K block-diag regulate selectors
WROWS = R_SEL + K * BB * TM      # 1536

# ---------------- packed f32 constant-slab row offsets ----------------
R_Q = 0                          # phase spread  [U, N]
R_F = R_Q + U                    # 8   per-utterance row-sum  [BB, BB*TM]
R_M = R_F + BB                   # 16  frame gate  [BB*TM, N]
R_BIAS = R_M + BB * TM           # 272 bias rows (b1, bout, bc, bo)
CROWS = R_BIAS + 8               # 280
CW = N                           # 256 constant-slab lane width
assert BB * TM <= CW and BB * T <= LANE


# ---------------- the single fused kernel (one grid step = BB utterances) ----
def fused_tts_kernel(phones_ref, utt_ref, w_ref, c_ref, acoustic_ref, wave_ref):
    f32, bf16 = jnp.float32, jnp.bfloat16

    # ---- static views into the packed slabs (no per-call iota rebuilding) ----
    w1 = w_ref[R_W1:R_W1 + F, 0:H]                    # [F, H]
    wu = w_ref[R_WU:R_WU + E, 0:H]                    # [E, H]
    wout = w_ref[R_WOUT:R_WOUT + H, :]                # [H, 128] mel|prosody packed
    wo = w_ref[R_WO:R_WO + C, 0:U]                    # [C, U]
    xsel = w_ref[R_XSEL:R_XSEL + BB * T, 0:BB]        # [BB*T, BB] speaker broadcast

    bias = c_ref[R_BIAS:R_BIAS + 8, :]                # [8, CW]
    b1, bout = bias[0:1, 0:H], bias[1:2, 0:LANE]
    bc, bo = bias[2:3, 0:C], bias[3:4, 0:U]

    # ---------------- acoustic model (phone2mel), bf16 MXU / f32 accum -------
    h = jnp.dot(phones_ref[...], w1, preferred_element_type=f32) + b1      # [BB*T, H]
    hu = jnp.dot(utt_ref[...], wu, preferred_element_type=f32)             # [BB, H]
    h = h + jnp.dot(xsel, hu.astype(bf16), preferred_element_type=f32)     # per-utt cond.
    h = jnp.tanh(h)
    # packed projection: lanes [0:MEL)=mel, [MEL:MEL+P)=raw prosody, rest zero
    mp = jnp.dot(h.astype(bf16), wout, preferred_element_type=f32) + bout  # [BB*T, 128]
    acoustic_ref[...] = mp                                                 # lane-dense store

    # ------------- length regulation + "same" conv, reordered contraction ----
    # tap_k = mp @ wk_k is computed once per phone (R-fold reuse); the
    # block-diagonal selectors S_k (constants) scatter phone rows to frame
    # rows and implement the left/right zero padding of the conv.
    mp_b = mp.astype(bf16)
    conv = bc                                                              # [1, C] -> bcast
    for k in range(K):
        wk_k = w_ref[R_WK + k * LANE:R_WK + (k + 1) * LANE, 0:C]           # [128, C]
        s_k = w_ref[R_SEL + k * BB * TM:R_SEL + (k + 1) * BB * TM, 0:BB * T]
        tap = jnp.dot(mp_b, wk_k, preferred_element_type=f32)              # [BB*T, C]
        conv = conv + jnp.dot(s_k, tap.astype(bf16),
                              preferred_element_type=f32)                  # [BB*TM, C]
    hc = jnp.where(conv > 0, conv, 0.1 * conv)                             # LeakyReLU(0.1)

    # ---------------- pointwise upsample head --------------------------------
    g = jnp.tanh(jnp.dot(hc.astype(bf16), wo,
                         preferred_element_type=f32) + bo)                 # [BB*TM, U]

    # -------- frame/phase interleave [BB*TM, U] -> [BB, N], all on the MXU ---
    q_sel = c_ref[R_Q:R_Q + U, 0:N]                   # [U, N]       phase spread
    f_sel = c_ref[R_F:R_F + BB, 0:BB * TM]            # [BB, BB*TM]  per-utterance sum
    m_sel = c_ref[R_M:R_M + BB * TM, 0:N]             # [BB*TM, N]   frame gate
    gtile = jnp.dot(g, q_sel, preferred_element_type=f32)                 # [BB*TM, N]
    wave_pre = jnp.dot(f_sel, gtile * m_sel,
                       preferred_element_type=f32)                        # [BB, N]

    # ---------------- per-utterance loudness normalization (fused) -----------
    # TODO(synk): pyloudnorm uses K-weighted, block-gated BS.1770 integrated
    #             loudness; RMS-based dB is used here.
    ms = jnp.mean(wave_pre * wave_pre, axis=1, keepdims=True)             # [BB, 1]
    loud_db = -0.691 + 10.0 * jnp.log10(ms + 1e-9)
    gain = 10.0 ** ((TARGET_DB - loud_db) / 20.0)
    wave_ref[...] = wave_pre * gain                                        # lane-dense [BB, N]


def run_fused(phones, utt, wslab, cslab):
    return pl.pallas_call(
        fused_tts_kernel,
        out_shape=(jax.ShapeDtypeStruct((B * T, LANE), jnp.float32),   # mel|prosody slab
                   jax.ShapeDtypeStruct((B, N), jnp.float32)),         # normalized waves
        grid_spec=pltpu.PrefetchScalarGridSpec(
            num_scalar_prefetch=0,
            grid=(NB,),
            in_specs=[
                pl.BlockSpec((BB * T, F), lambda i: (i, 0)),           # phones (batched)
                pl.BlockSpec((BB, E), lambda i: (i, 0)),               # speaker embeddings
                pl.BlockSpec((WROWS, LANE), lambda i: (0, 0)),         # bf16 weight slab (DMA'd once)
                pl.BlockSpec((CROWS, CW), lambda i: (0, 0)),           # f32 selector/bias slab
            ],
            out_specs=(
                pl.BlockSpec((BB * T, LANE), lambda i: (i, 0)),
                pl.BlockSpec((BB, N), lambda i: (i, 0)),
            ),
        ),
        compiler_params=pltpu.CompilerParams(
            dimension_semantics=("parallel",)),    # megacore sharding on v7x
    )(phones, utt, wslab, cslab)


# ---------------- full forward ----------------
@jax.jit
def _forward_arrays(phones, utt, wslab, cslab):
    acoustic, wave = run_fused(phones, utt, wslab, cslab)
    ac = acoustic.reshape(B, T, LANE)
    mel_phone = ac[:, :, :MEL]                        # [B, T, MEL]
    pros = ac[:, :, MEL:MEL + P]                      # [B, T, P] raw prosody
    durations = jax.nn.softplus(pros[..., 0])         # predicted durations [B, T]
    pitch = pros[..., 1]
    energy = pros[..., 2]
    # TODO(synk): real length regulation repeats each phone by its rounded
    # (data-dependent) duration; a fixed factor R keeps shapes static. This
    # repeat only rebuilds the regulated mel for plotting -- off the wave path.
    mel = jnp.repeat(mel_phone, R, axis=1)            # [B, TM, MEL]
    return wave, mel, durations, pitch, energy


def toucan_forward(phones, utt, wslab, cslab):
    wave, mel, durations, pitch, energy = _forward_arrays(phones, utt, wslab, cslab)
    return wave, SR, mel, durations, pitch, energy


# ---------------- deterministic parameter init & packing ----------------
def make_raw_params(key):
    ks = jax.random.split(key, 6)
    s = 0.1
    raw = {
        "w1": s * jax.random.normal(ks[0], (F, H), jnp.float32),
        "b1": jnp.zeros((1, H), jnp.float32),
        "wu": s * jax.random.normal(ks[1], (E, H), jnp.float32),
        "w2": s * jax.random.normal(ks[2], (H, MEL), jnp.float32),
        "b2": jnp.zeros((1, MEL), jnp.float32),
        "wp": s * jax.random.normal(ks[3], (H, P), jnp.float32),
        "bp": jnp.zeros((1, P), jnp.float32),
        "wk": s * jax.random.normal(ks[4], (K, MEL, C), jnp.float32),
        "bc": jnp.zeros((1, C), jnp.float32),
        "wo": s * jax.random.normal(ks[5], (C, U), jnp.float32),
        "bo": jnp.zeros((1, U), jnp.float32),
    }
    # round once to bf16 so the bf16 kernel and the f32 numpy reference share
    # exactly the same parameter values
    return {k: v.astype(jnp.bfloat16).astype(jnp.float32) for k, v in raw.items()}


def pack_params(raw):
    """One-time host-side packing into two lane-friendly kernel operands."""
    rw = {k: np.asarray(v, np.float32) for k, v in raw.items()}

    # ---- bf16 weight slab: weights + 0/1 selectors ----
    w = np.zeros((WROWS, LANE), np.float32)
    w[R_W1:R_W1 + F, 0:H] = rw["w1"]
    w[R_WU:R_WU + E, 0:H] = rw["wu"]
    w[R_WOUT:R_WOUT + H, 0:MEL] = rw["w2"]
    w[R_WOUT:R_WOUT + H, MEL:MEL + P] = rw["wp"]
    for k in range(K):                               # conv taps, mel rows only
        w[R_WK + k * LANE:R_WK + k * LANE + MEL, 0:C] = rw["wk"][k]
    w[R_WO:R_WO + C, 0:U] = rw["wo"]
    ii = np.arange(BB * T)
    w[R_XSEL:R_XSEL + BB * T, 0:BB] = (ii[:, None] // T == np.arange(BB)[None, :])
    # block-diagonal length-regulation + "same"-pad selectors, one per tap:
    # S_k[b*TM+m, b'*T+j] = 1 iff b==b' and j*R+1 <= m+k <= j*R+R
    fi = np.arange(BB * TM)
    pj = np.arange(BB * T)
    bi, m = fi // TM, fi % TM
    bj, p = pj // T, pj % T
    for k in range(K):
        sel = ((bi[:, None] == bj[None, :])
               & (m[:, None] + k >= p[None, :] * R + 1)
               & (m[:, None] + k <= p[None, :] * R + R))
        w[R_SEL + k * BB * TM:R_SEL + (k + 1) * BB * TM, 0:BB * T] = sel
    wslab = jnp.asarray(w, jnp.bfloat16)

    # ---- f32 constant slab: interleave selectors + biases ----
    c = np.zeros((CROWS, CW), np.float32)
    nn = np.arange(N)
    c[R_Q:R_Q + U, 0:N] = (nn[None, :] % U == np.arange(U)[:, None])           # Q
    c[R_F:R_F + BB, 0:BB * TM] = (fi[None, :] // TM == np.arange(BB)[:, None])  # F
    c[R_M:R_M + BB * TM, 0:N] = (nn[None, :] // U == (fi % TM)[:, None])        # M
    c[R_BIAS + 0, 0:H] = rw["b1"][0]
    c[R_BIAS + 1, 0:MEL] = rw["b2"][0]
    c[R_BIAS + 1, MEL:MEL + P] = rw["bp"][0]
    c[R_BIAS + 2, 0:C] = rw["bc"][0]
    c[R_BIAS + 3, 0:U] = rw["bo"][0]
    cslab = jnp.asarray(c, jnp.float32)
    return wslab, cslab


# ---------------- plain numpy reference (same synthetic model) ----------------
def reference_forward(phones_flat, utt, raw):
    ph = np.asarray(phones_flat, np.float32).reshape(B, T, F)
    ut = np.asarray(utt, np.float32)
    rw = {k: np.asarray(v, np.float32) for k, v in raw.items()}
    waves, mels, pross = [], [], []
    for b in range(B):
        h = np.tanh(ph[b] @ rw["w1"] + rw["b1"] + ut[b:b + 1] @ rw["wu"])
        mel_phone = h @ rw["w2"] + rw["b2"]
        pros = h @ rw["wp"] + rw["bp"]
        mel = np.repeat(mel_phone, R, axis=0)
        melp = np.pad(mel, ((1, 1), (0, 0)))
        acc = np.zeros((TM, C), np.float32) + rw["bc"]
        for k in range(K):
            acc = acc + melp[k:k + TM] @ rw["wk"][k]
        hc = np.where(acc > 0, acc, 0.1 * acc)
        g = np.tanh(hc @ rw["wo"] + rw["bo"])
        wave = g.reshape(N)
        ms = np.mean(wave * wave)
        loud_db = -0.691 + 10.0 * np.log10(ms + 1e-9)
        gain = 10.0 ** ((TARGET_DB - loud_db) / 20.0)
        waves.append((wave * gain).astype(np.float32))
        mels.append(mel.astype(np.float32))
        pross.append(pros.astype(np.float32))
    return np.stack(waves), np.stack(mels), np.stack(pross)


if __name__ == "__main__":
    key = jax.random.PRNGKey(0)
    k_phones, k_utt, k_params = jax.random.split(key, 3)

    # articulatory phone feature vectors (binary -> exact in bf16), speaker embeddings
    phones = (jax.random.uniform(k_phones, (B, T, F)) > 0.7).astype(jnp.float32)
    phones_flat = phones.reshape(B * T, F)
    utt_emb = (0.1 * jax.random.normal(k_utt, (B, E), jnp.float32)).astype(jnp.bfloat16)

    raw = make_raw_params(k_params)
    wslab, cslab = pack_params(raw)

    wave, sr, mel, durations, pitch, energy = toucan_forward(
        phones_flat.astype(jnp.bfloat16), utt_emb, wslab, cslab)
    jax.block_until_ready((wave, mel, durations, pitch, energy))

    assert wave.shape == (B, N)
    assert mel.shape == (B, TM, MEL)
    assert durations.shape == (B, T)
    assert sr == SR

    ref_wave, ref_mel, ref_pros = reference_forward(
        np.asarray(phones_flat), np.asarray(utt_emb.astype(jnp.float32)), raw)
    assert np.allclose(np.asarray(wave), ref_wave, rtol=5e-2, atol=1e-2), "wave mismatch"
    assert np.allclose(np.asarray(mel), ref_mel, rtol=5e-2, atol=1e-2), "mel mismatch"
    assert np.allclose(np.asarray(pitch), ref_pros[:, :, 1], rtol=5e-2, atol=1e-2), "prosody mismatch"

    print("KERNEL_OK")
</pallas_src>

<mosaic_0001>
module attributes {stable_mosaic.version = 11 : i64} {
  func.func @fused_tts_kernel(%arg0: i32, %arg1: memref<64x64xbf16, #tpu.memory_space<vmem>>, %arg2: memref<8x192xbf16, #tpu.memory_space<vmem>>, %arg3: memref<1536x128xbf16, #tpu.memory_space<vmem>>, %arg4: memref<280x256xf32, #tpu.memory_space<vmem>>, %arg5: memref<64x128xf32, #tpu.memory_space<vmem>>, %arg6: memref<8x256xf32, #tpu.memory_space<vmem>>) attributes {dimension_semantics = [#tpu.dimension_semantics<parallel>], iteration_bounds = array<i64: 2>, scalar_prefetch = 0 : i64, scratch_operands = 0 : i64, tpu.core_type = #tpu.core_type<tc>, window_params = [{transform_indices = @transform_0, window_bounds = array<i64: 64, 64>}, {transform_indices = @transform_1, window_bounds = array<i64: 8, 192>}, {pipeline_mode = #tpu.pipeline_mode<synchronous>, transform_indices = @transform_2, window_bounds = array<i64: 1536, 128>}, {pipeline_mode = #tpu.pipeline_mode<synchronous>, transform_indices = @transform_3, window_bounds = array<i64: 280, 256>}, {transform_indices = @transform_4, window_bounds = array<i64: 64, 128>}, {transform_indices = @transform_5, window_bounds = array<i64: 8, 256>}]} {
    %c0 = arith.constant 0 : index
    %c0_0 = arith.constant 0 : index
    %0 = vector.load %arg3[%c0, %c0_0] : memref<1536x128xbf16, #tpu.memory_space<vmem>>, vector<64x32xbf16>
    %c64 = arith.constant 64 : index
    %c0_1 = arith.constant 0 : index
    %1 = vector.load %arg3[%c64, %c0_1] : memref<1536x128xbf16, #tpu.memory_space<vmem>>, vector<192x32xbf16>
    %c256 = arith.constant 256 : index
    %c0_2 = arith.constant 0 : index
    %2 = vector.load %arg3[%c256, %c0_2] : memref<1536x128xbf16, #tpu.memory_space<vmem>>, vector<32x128xbf16>
    %c672 = arith.constant 672 : index
    %c0_3 = arith.constant 0 : index
    %3 = vector.load %arg3[%c672, %c0_3] : memref<1536x128xbf16, #tpu.memory_space<vmem>>, vector<32x8xbf16>
    %c704 = arith.constant 704 : index
    %c0_4 = arith.constant 0 : index
    %4 = vector.load %arg3[%c704, %c0_4] : memref<1536x128xbf16, #tpu.memory_space<vmem>>, vector<64x8xbf16>
    %c272 = arith.constant 272 : index
    %c0_5 = arith.constant 0 : index
    %5 = vector.load %arg4[%c272, %c0_5] : memref<280x256xf32, #tpu.memory_space<vmem>>, vector<8x256xf32>
    %6 = vector.extract_strided_slice %5 {offsets = [0, 0], sizes = [1, 32], strides = [1, 1]} : vector<8x256xf32> to vector<1x32xf32>
    %7 = vector.extract_strided_slice %5 {offsets = [1, 0], sizes = [1, 128], strides = [1, 1]} : vector<8x256xf32> to vector<1x128xf32>
    %8 = vector.extract_strided_slice %5 {offsets = [2, 0], sizes = [1, 32], strides = [1, 1]} : vector<8x256xf32> to vector<1x32xf32>
    %9 = vector.extract_strided_slice %5 {offsets = [3, 0], sizes = [1, 8], strides = [1, 1]} : vector<8x256xf32> to vector<1x8xf32>
    %c0_6 = arith.constant 0 : index
    %c0_7 = arith.constant 0 : index
    %10 = vector.load %arg1[%c0_6, %c0_7] : memref<64x64xbf16, #tpu.memory_space<vmem>>, vector<64x64xbf16>
    %cst = arith.constant dense<0.000000e+00> : vector<64x32xf32>
    %11 = tpu.matmul %10, %0, %cst {dimension_numbers = #tpu.dot_dimension_numbers<[1], [0], [0], [1], [0, 0, 1, 1], [], []>} : vector<64x64xbf16>, vector<64x32xbf16>, vector<64x32xf32> -> vector<64x32xf32>
    %12 = vector.broadcast %6 : vector<1x32xf32> to vector<64x32xf32>
    %13 = arith.addf %11, %12 : vector<64x32xf32>
    %c0_8 = arith.constant 0 : index
    %c0_9 = arith.constant 0 : index
    %14 = vector.load %arg2[%c0_8, %c0_9] : memref<8x192xbf16, #tpu.memory_space<vmem>>, vector<8x192xbf16>
    %cst_10 = arith.constant dense<0.000000e+00> : vector<8x32xf32>
    %15 = tpu.matmul %14, %1, %cst_10 {dimension_numbers = #tpu.dot_dimension_numbers<[1], [0], [0], [1], [0, 0, 1, 1], [], []>} : vector<8x192xbf16>, vector<192x32xbf16>, vector<8x32xf32> -> vector<8x32xf32>
    %16 = arith.truncf %15 : vector<8x32xf32> to vector<8x32xbf16>
    %cst_11 = arith.constant dense<0.000000e+00> : vector<64x32xf32>
    %17 = tpu.matmul %4, %16, %cst_11 {dimension_numbers = #tpu.dot_dimension_numbers<[1], [0], [0], [1], [0, 0, 1, 1], [], []>} : vector<64x8xbf16>, vector<8x32xbf16>, vector<64x32xf32> -> vector<64x32xf32>
    %18 = arith.addf %13, %17 : vector<64x32xf32>
    %19 = math.tanh %18 : vector<64x32xf32>
    %20 = arith.truncf %19 : vector<64x32xf32> to vector<64x32xbf16>
    %cst_12 = arith.constant dense<0.000000e+00> : vector<64x128xf32>
    %21 = tpu.matmul %20, %2, %cst_12 {dimension_numbers = #tpu.dot_dimension_numbers<[1], [0], [0], [1], [0, 0, 1, 1], [], []>} : vector<64x32xbf16>, vector<32x128xbf16>, vector<64x128xf32> -> vector<64x128xf32>
    %22 = vector.broadcast %7 : vector<1x128xf32> to vector<64x128xf32>
    %23 = arith.addf %21, %22 : vector<64x128xf32>
    %c0_13 = arith.constant 0 : index
    %c0_14 = arith.constant 0 : index
    %24 = vector.load %arg5[%c0_13, %c0_14] : memref<64x128xf32, #tpu.memory_space<vmem>>, vector<64x128xf32>
    tpu.vector_store %arg5[%c0_13, %c0_14], %23 {strides = array<i32>} : memref<64x128xf32, #tpu.memory_space<vmem>>, vector<64x128xf32>,
    %25 = arith.truncf %23 : vector<64x128xf32> to vector<64x128xbf16>
    %c288 = arith.constant 288 : index
    %c0_15 = arith.constant 0 : index
    %26 = vector.load %arg3[%c288, %c0_15] : memref<1536x128xbf16, #tpu.memory_space<vmem>>, vector<128x32xbf16>
    %c768 = arith.constant 768 : index
    %c0_16 = arith.constant 0 : index
    %27 = vector.load %arg3[%c768, %c0_16] : memref<1536x128xbf16, #tpu.memory_space<vmem>>, vector<256x64xbf16>
    %cst_17 = arith.constant dense<0.000000e+00> : vector<64x32xf32>
    %28 = tpu.matmul %25, %26, %cst_17 {dimension_numbers = #tpu.dot_dimension_numbers<[1], [0], [0], [1], [0, 0, 1, 1], [], []>} : vector<64x128xbf16>, vector<128x32xbf16>, vector<64x32xf32> -> vector<64x32xf32>
    %29 = arith.truncf %28 : vector<64x32xf32> to vector<64x32xbf16>
    %cst_18 = arith.constant dense<0.000000e+00> : vector<256x32xf32>
    %30 = tpu.matmul %27, %29, %cst_18 {dimension_numbers = #tpu.dot_dimension_numbers<[1], [0], [0], [1], [0, 0, 1, 1], [], []>} : vector<256x64xbf16>, vector<64x32xbf16>, vector<256x32xf32> -> vector<256x32xf32>
    %31 = vector.broadcast %8 : vector<1x32xf32> to vector<256x32xf32>
    %32 = arith.addf %31, %30 : vector<256x32xf32>
    %c416 = arith.constant 416 : index
    %c0_19 = arith.constant 0 : index
    %33 = vector.load %arg3[%c416, %c0_19] : memref<1536x128xbf16, #tpu.memory_space<vmem>>, vector<128x32xbf16>
    %c1024 = arith.constant 1024 : index
    %c0_20 = arith.constant 0 : index
    %34 = vector.load %arg3[%c1024, %c0_20] : memref<1536x128xbf16, #tpu.memory_space<vmem>>, vector<256x64xbf16>
    %cst_21 = arith.constant dense<0.000000e+00> : vector<64x32xf32>
    %35 = tpu.matmul %25, %33, %cst_21 {dimension_numbers = #tpu.dot_dimension_numbers<[1], [0], [0], [1], [0, 0, 1, 1], [], []>} : vector<64x128xbf16>, vector<128x32xbf16>, vector<64x32xf32> -> vector<64x32xf32>
    %36 = arith.truncf %35 : vector<64x32xf32> to vector<64x32xbf16>
    %cst_22 = arith.constant dense<0.000000e+00> : vector<256x32xf32>
    %37 = tpu.matmul %34, %36, %cst_22 {dimension_numbers = #tpu.dot_dimension_numbers<[1], [0], [0], [1], [0, 0, 1, 1], [], []>} : vector<256x64xbf16>, vector<64x32xbf16>, vector<256x32xf32> -> vector<256x32xf32>
    %38 = arith.addf %32, %37 : vector<256x32xf32>
    %c544 = arith.constant 544 : index
    %c0_23 = arith.constant 0 : index
    %39 = vector.load %arg3[%c544, %c0_23] : memref<1536x128xbf16, #tpu.memory_space<vmem>>, vector<128x32xbf16>
    %c1280 = arith.constant 1280 : index
    %c0_24 = arith.constant 0 : index
    %40 = vector.load %arg3[%c1280, %c0_24] : memref<1536x128xbf16, #tpu.memory_space<vmem>>, vector<256x64xbf16>
    %cst_25 = arith.constant dense<0.000000e+00> : vector<64x32xf32>
    %41 = tpu.matmul %25, %39, %cst_25 {dimension_numbers = #tpu.dot_dimension_numbers<[1], [0], [0], [1], [0, 0, 1, 1], [], []>} : vector<64x128xbf16>, vector<128x32xbf16>, vector<64x32xf32> -> vector<64x32xf32>
    %42 = arith.truncf %41 : vector<64x32xf32> to vector<64x32xbf16>
    %cst_26 = arith.constant dense<0.000000e+00> : vector<256x32xf32>
    %43 = tpu.matmul %40, %42, %cst_26 {dimension_numbers = #tpu.dot_dimension_numbers<[1], [0], [0], [1], [0, 0, 1, 1], [], []>} : vector<256x64xbf16>, vector<64x32xbf16>, vector<256x32xf32> -> vector<256x32xf32>
    %44 = arith.addf %38, %43 : vector<256x32xf32>
    %cst_27 = arith.constant 0.000000e+00 : f32
    %45 = vector.broadcast %cst_27 : f32 to vector<256x32xf32>
    %46 = arith.cmpf ogt, %44, %45 : vector<256x32xf32>
    %cst_28 = arith.constant 1.000000e-01 : f32
    %47 = vector.broadcast %cst_28 : f32 to vector<256x32xf32>
    %48 = arith.mulf %47, %44 : vector<256x32xf32>
    %49 = arith.select %46, %44, %48 : vector<256x32xi1>, vector<256x32xf32>
    %50 = arith.truncf %49 : vector<256x32xf32> to vector<256x32xbf16>
    %cst_29 = arith.constant dense<0.000000e+00> : vector<256x8xf32>
    %51 = tpu.matmul %50, %3, %cst_29 {dimension_numbers = #tpu.dot_dimension_numbers<[1], [0], [0], [1], [0, 0, 1, 1], [], []>} : vector<256x32xbf16>, vector<32x8xbf16>, vector<256x8xf32> -> vector<256x8xf32>
    %52 = vector.broadcast %9 : vector<1x8xf32> to vector<256x8xf32>
    %53 = arith.addf %51, %52 : vector<256x8xf32>
    %54 = math.tanh %53 : vector<256x8xf32>
    %c0_30 = arith.constant 0 : index
    %c0_31 = arith.constant 0 : index
    %55 = vector.load %arg4[%c0_30, %c0_31] : memref<280x256xf32, #tpu.memory_space<vmem>>, vector<8x256xf32>
    %c8 = arith.constant 8 : index
    %c0_32 = arith.constant 0 : index
    %56 = vector.load %arg4[%c8, %c0_32] : memref<280x256xf32, #tpu.memory_space<vmem>>, vector<8x256xf32>
    %c16 = arith.constant 16 : index
    %c0_33 = arith.constant 0 : index
    %57 = vector.load %arg4[%c16, %c0_33] : memref<280x256xf32, #tpu.memory_space<vmem>>, vector<256x256xf32>
    %cst_34 = arith.constant dense<0.000000e+00> : vector<256x256xf32>
    %58 = tpu.matmul %54, %55, %cst_34 {dimension_numbers = #tpu.dot_dimension_numbers<[1], [0], [0], [1], [0, 0, 1, 1], [], []>} : vector<256x8xf32>, vector<8x256xf32>, vector<256x256xf32> -> vector<256x256xf32>
    %59 = arith.mulf %58, %57 : vector<256x256xf32>
    %cst_35 = arith.constant dense<0.000000e+00> : vector<8x256xf32>
    %60 = tpu.matmul %56, %59, %cst_35 {dimension_numbers = #tpu.dot_dimension_numbers<[1], [0], [0], [1], [0, 0, 1, 1], [], []>} : vector<8x256xf32>, vector<256x256xf32>, vector<8x256xf32> -> vector<8x256xf32>
    %61 = arith.mulf %60, %60 : vector<8x256xf32>
    %cst_36 = arith.constant dense<0.000000e+00> : vector<8xf32>
    %62 = vector.multi_reduction <add>, %61, %cst_36 [1] : vector<8x256xf32> to vector<8xf32>
    %63 = vector.shape_cast %62 : vector<8xf32> to vector<8x1xf32>
    %cst_37 = arith.constant 2.560000e+02 : f32
    %64 = vector.broadcast %cst_37 : f32 to vector<8x1xf32>
    %65 = arith.divf %63, %64 : vector<8x1xf32>
    %cst_38 = arith.constant 9.99999971E-10 : f32
    %66 = vector.broadcast %cst_38 : f32 to vector<8x1xf32>
    %67 = arith.addf %65, %66 : vector<8x1xf32>
    %68 = math.log %67 : vector<8x1xf32>
    %cst_39 = arith.constant 0.434294492 : f32
    %69 = vector.broadcast %cst_39 : f32 to vector<8x1xf32>
    %70 = arith.mulf %68, %69 : vector<8x1xf32>
    %cst_40 = arith.constant 1.000000e+01 : f32
    %71 = vector.broadcast %cst_40 : f32 to vector<8x1xf32>
    %72 = arith.mulf %71, %70 : vector<8x1xf32>
    %cst_41 = arith.constant -6.910000e-01 : f32
    %73 = vector.broadcast %cst_41 : f32 to vector<8x1xf32>
    %74 = arith.addf %73, %72 : vector<8x1xf32>
    %cst_42 = arith.constant -2.400000e+01 : f32
    %75 = vector.broadcast %cst_42 : f32 to vector<8x1xf32>
    %76 = arith.subf %75, %74 : vector<8x1xf32>
    %cst_43 = arith.constant 2.000000e+01 : f32
    %77 = vector.broadcast %cst_43 : f32 to vector<8x1xf32>
    %78 = arith.divf %76, %77 : vector<8x1xf32>
    %cst_44 = arith.constant 1.000000e+01 : f32
    %79 = vector.broadcast %cst_44 : f32 to vector<8x1xf32>
    %80 = math.powf %79, %78 : vector<8x1xf32>
    %81 = vector.broadcast %80 : vector<8x1xf32> to vector<8x256xf32>
    %82 = arith.mulf %60, %81 : vector<8x256xf32>
    %c0_45 = arith.constant 0 : index
    %c0_46 = arith.constant 0 : index
    %83 = vector.load %arg6[%c0_45, %c0_46] : memref<8x256xf32, #tpu.memory_space<vmem>>, vector<8x256xf32>
    tpu.vector_store %arg6[%c0_45, %c0_46], %82 {strides = array<i32>} : memref<8x256xf32, #tpu.memory_space<vmem>>, vector<8x256xf32>,
    return
  }
  func.func @transform_0(%arg0: i32) -> (i32, i32) {
    %c0_i32 = arith.constant 0 : i32
    %c0_i32_0 = arith.constant 0 : i32
    return %arg0, %c0_i32 : i32, i32
  }
  func.func @transform_1(%arg0: i32) -> (i32, i32) {
    %c0_i32 = arith.constant 0 : i32
    %c0_i32_0 = arith.constant 0 : i32
    return %arg0, %c0_i32 : i32, i32
  }
  func.func @transform_2(%arg0: i32) -> (i32, i32) {
    %c0_i32 = arith.constant 0 : i32
    %c0_i32_0 = arith.constant 0 : i32
    %c0_i32_1 = arith.constant 0 : i32
    return %c0_i32, %c0_i32_0 : i32, i32
  }
  func.func @transform_3(%arg0: i32) -> (i32, i32) {
    %c0_i32 = arith.constant 0 : i32
    %c0_i32_0 = arith.constant 0 : i32
    %c0_i32_1 = arith.constant 0 : i32
    return %c0_i32, %c0_i32_0 : i32, i32
  }
  func.func @transform_4(%arg0: i32) -> (i32, i32) {
    %c0_i32 = arith.constant 0 : i32
    %c0_i32_0 = arith.constant 0 : i32
    return %arg0, %c0_i32 : i32, i32
  }
  func.func @transform_5(%arg0: i32) -> (i32, i32) {
    %c0_i32 = arith.constant 0 : i32
    %c0_i32_0 = arith.constant 0 : i32
    return %arg0, %c0_i32 : i32, i32
  }
}

</mosaic_0001>

<llo_original>
// kernel: _forward_arrays.1
$region0: #{_forward_arrays.1}
  #allocation0 [shape = 'u32[]', space=smem, size = 0x4, offset = 0x4, fixed_abs, tag = 'smem constant byte address 0x4 - core index']
  #allocation1 [shape = 'u32[144,128]{1,0:T(1,128)}', space=vmem, size = 0x12000, scoped, tag = 'internal scratch']
  %s0 = inlined_call_operand.vmem [shape: bf16[128,64], index: 0, kind: input, shape index: {}]
  %s1 = inlined_call_operand.vmem [shape: bf16[16,192], index: 1, kind: input, shape index: {}]
  %s2 = inlined_call_operand.hbm [shape: bf16[1536,128], index: 2, kind: input, shape index: {}]
  %s3 = inlined_call_operand.hbm [shape: f32[280,256], index: 3, kind: input, shape index: {}]
  %s4 = inlined_call_operand.vmem [shape: f32[128,128], index: 4, kind: output, shape index: {0}]
  %s5 = inlined_call_operand.hbm [shape: f32[16,256], index: 5, kind: output, shape index: {1}]
  %6 = xla_tuple %s4, %s5
  %s7 = sld [smem:[#allocation0]]
  $region65: #{_forward_arrays.1} parent=0
    _
  %s9 = ssub.s32 1, %s7
  %s10 = scalar_select 0, %s9, %s7
  $region1: #{_forward_arrays.1} parent=0
    #allocation2 [shape = 'u8[393216]{0}', space=vmem, size = 0x60000, scoped, tag = 'input window, operand 2, single buffered']
    #allocation3 [shape = 's32[2]{0}', space=sflag, size = 0x8, scoped, tag = 'scoped memory for _forward_arrays.1']
    #allocation4 [shape = 's32[2]{0}', space=sflag, size = 0x8, scoped, tag = 'scoped memory for _forward_arrays.1']
    #allocation5 [shape = 'u8[286720]{0}', space=vmem, size = 0x46000, scoped, tag = 'input window, operand 3, single buffered']
    #allocation6 [shape = 's32[1]{0}', space=sflag, size = 0x4, scoped, tag = 'scoped memory for _forward_arrays.1']
    #allocation7 [shape = 'u8[16384]{0}', space=vmem, size = 0x4000, scoped, tag = 'output window, operand 1']
    %11 = vsyncpa [#allocation3], 0
    %12 = vsyncpa [#allocation6], 0
    %13 = vsyncpa [#allocation4], 0
    %s14 = scalar_lea.sflag [#allocation4], 1
    %15 = vsyncpa %s14, 0
    loop: start=0, step=1, limit=4
    $region2: #{_forward_arrays.1} parent=1 // loop_pre_header
      _
    $region3: #{_forward_arrays.1} parent=1 // loop_header
      %s17 = sphi 0, %s21
      %p18 = scmp.ge.s32.totalorder %s17, 4
      %s27 = sphi 0, %s29
      %s30 = sphi 0, %s27
      %s31 = sphi 0, %s30
      %s47 = sphi 0, %s31
      %s53 = sphi 0, %s55
      %s56 = sphi 0, %s53
      %s57 = sphi 0, %s56
      %s73 = sphi 0, %s57
      %s77 = sphi 0, %s77
      %s79 = sphi 0, %s77
      %s80 = sphi 0, %s79
      %s94 = sphi 0, %s80
      %s98 = sphi 0, %s98
      %s100 = sphi 0, %s98
      %s101 = sphi 0, %s100
      %s115 = sphi 0, %s101
      %s121 = sphi 0, %s123
      %s124 = sphi 0, %s121
      %s125 = sphi 0, %s124
      %s141 = sphi 0, %s125
      %s147 = sphi 0, %s149
      %s150 = sphi 0, %s147
      %s151 = sphi 0, %s150
      %s167 = sphi 0, %s151
    $region4: #{_forward_arrays.1} parent=1 // loop_header_branch
      %20 = sbr.rel (%p18) target = $region8
    $region5: #{_forward_arrays.1} parent=1 // loop_body
      %s22 = ssub.s32 %s17, 1
      %s23 = ssub.s32 %s17, 2
      %s24 = sadd.s32 %s17, 1
      %s25 = ssub.s32 %s17, %s24
      %p26 = scmp.eq.s32.totalorder %s25, 0
      %s28 = sadd.s32 %s27, 1
      %s29 = scalar_select %p26, %s27, %s28
      %p32 = pneg %p26
      %p33 = scmp.eq.s32.totalorder %s17, 1
      %p34 = por %p32, %p33
      %p35 = scmp.ne.s32.totalorder %s27, %s30
      %p36 = scmp.eq.s32.totalorder %s17, 0
      %p37 = por %p35, %p36
      %p38 = scmp.ne.s32.totalorder %s27, %s30
      %p39 = scmp.eq.s32.totalorder %s22, 1
      %p40 = por %p38, %p39
      %p41 = scmp.ne.s32.totalorder %s30, %s31
      %p42 = scmp.eq.s32.totalorder %s22, 0
      %p43 = por %p41, %p42
      %p44 = scmp.ne.s32.totalorder %s30, %s31
      %p45 = scmp.eq.s32.totalorder %s23, 1
      %p46 = por %p44, %p45
      %p48 = scmp.ne.s32.totalorder %s31, %s47
      %p49 = scmp.eq.s32.totalorder %s23, 0
      %p50 = por %p48, %p49
      %s51 = ssub.s32 %s17, %s24
      %p52 = scmp.eq.s32.totalorder %s51, 0
      %s54 = sadd.s32 %s53, 1
      %s55 = scalar_select %p52, %s53, %s54
      %p58 = pneg %p52
      %p59 = scmp.eq.s32.totalorder %s17, 1
      %p60 = por %p58, %p59
      %p61 = scmp.ne.s32.totalorder %s53, %s56
      %p62 = scmp.eq.s32.totalorder %s17, 0
      %p63 = por %p61, %p62
      %p64 = scmp.ne.s32.totalorder %s53, %s56
      %p65 = scmp.eq.s32.totalorder %s22, 1
      %p66 = por %p64, %p65
      %p67 = scmp.ne.s32.totalorder %s56, %s57
      %p68 = scmp.eq.s32.totalorder %s22, 0
      %p69 = por %p67, %p68
      %p70 = scmp.ne.s32.totalorder %s56, %s57
      %p71 = scmp.eq.s32.totalorder %s23, 1
      %p72 = por %p70, %p71
      %p74 = scmp.ne.s32.totalorder %s57, %s73
      %p75 = scmp.eq.s32.totalorder %s23, 0
      %p76 = por %p74, %p75
      %s78 = sadd.s32 %s77, 1
      %p81 = scmp.eq.s32.totalorder %s17, 1
      %p82 = scmp.ne.s32.totalorder %s77, %s79
      %p83 = scmp.eq.s32.totalorder %s17, 0
      %p84 = por %p82, %p83
      %p85 = scmp.ne.s32.totalorder %s77, %s79
      %p86 = scmp.eq.s32.totalorder %s22, 1
      %p87 = por %p85, %p86
      %p88 = scmp.ne.s32.totalorder %s79, %s80
      %p89 = scmp.eq.s32.totalorder %s22, 0
      %p90 = por %p88, %p89
      %p91 = scmp.ne.s32.totalorder %s79, %s80
      %p92 = scmp.eq.s32.totalorder %s23, 1
      %p93 = por %p91, %p92
      %p95 = scmp.ne.s32.totalorder %s80, %s94
      %p96 = scmp.eq.s32.totalorder %s23, 0
      %p97 = por %p95, %p96
      %s99 = sadd.s32 %s98, 1
      %p102 = scmp.eq.s32.totalorder %s17, 1
      %p103 = scmp.ne.s32.totalorder %s98, %s100
      %p104 = scmp.eq.s32.totalorder %s17, 0
      %p105 = por %p103, %p104
      %p106 = scmp.ne.s32.totalorder %s98, %s100
      %p107 = scmp.eq.s32.totalorder %s22, 1
      %p108 = por %p106, %p107
      %p109 = scmp.ne.s32.totalorder %s100, %s101
      %p110 = scmp.eq.s32.totalorder %s22, 0
      %p111 = por %p109, %p110
      %p112 = scmp.ne.s32.totalorder %s100, %s101
      %p113 = scmp.eq.s32.totalorder %s23, 1
      %p114 = por %p112, %p113
      %p116 = scmp.ne.s32.totalorder %s101, %s115
      %p117 = scmp.eq.s32.totalorder %s23, 0
      %p118 = por %p116, %p117
      %s119 = ssub.s32 %s17, %s24
      %p120 = scmp.eq.s32.totalorder %s119, 0
      %s122 = sadd.s32 %s121, 1
      %s123 = scalar_select %p120, %s121, %s122
      %p126 = pneg %p120
      %p127 = scmp.eq.s32.totalorder %s17, 1
      %p128 = por %p126, %p127
      %p129 = scmp.ne.s32.totalorder %s121, %s124
      %p130 = scmp.eq.s32.totalorder %s17, 0
      %p131 = por %p129, %p130
      %p132 = scmp.ne.s32.totalorder %s121, %s124
      %p133 = scmp.eq.s32.totalorder %s22, 1
      %p134 = por %p132, %p133
      %p135 = scmp.ne.s32.totalorder %s124, %s125
      %p136 = scmp.eq.s32.totalorder %s22, 0
      %p137 = por %p135, %p136
      %p138 = scmp.ne.s32.totalorder %s124, %s125
      %p139 = scmp.eq.s32.totalorder %s23, 1
      %p140 = por %p138, %p139
      %p142 = scmp.ne.s32.totalorder %s125, %s141
      %p143 = scmp.eq.s32.totalorder %s23, 0
      %p144 = por %p142, %p143
      %s145 = ssub.s32 %s17, %s24
      %p146 = scmp.eq.s32.totalorder %s145, 0
      %s148 = sadd.s32 %s147, 1
      %s149 = scalar_select %p146, %s147, %s148
      %p152 = pneg %p146
      %p153 = scmp.eq.s32.totalorder %s17, 1
      %p154 = por %p152, %p153
      %p155 = scmp.ne.s32.totalorder %s147, %s150
      %p156 = scmp.eq.s32.totalorder %s17, 0
      %p157 = por %p155, %p156
      %p158 = scmp.ne.s32.totalorder %s147, %s150
      %p159 = scmp.eq.s32.totalorder %s22, 1
      %p160 = por %p158, %p159
      %p161 = scmp.ne.s32.totalorder %s150, %s151
      %p162 = scmp.eq.s32.totalorder %s22, 0
      %p163 = por %p161, %p162
      %p164 = scmp.ne.s32.totalorder %s150, %s151
      %p165 = scmp.eq.s32.totalorder %s23, 1
      %p166 = por %p164, %p165
      %p168 = scmp.ne.s32.totalorder %s151, %s167
      %p169 = scmp.eq.s32.totalorder %s23, 0
      %p170 = por %p168, %p169
      %p171 = scmp.le.s32.totalorder 1, %s17
      %p172 = scmp.lt.s32.totalorder %s17, 3
      %p173 = pnand %p171, %p172
      %p174 = pneg %p173
      // Predicated region
      $region9: #{_forward_arrays.1} parent=5 // pred_check
        _
      $region10: #{_forward_arrays.1} parent=5 // pred_check_branch
        %176 = sbr.rel (%p173) target = $region12
      $region11: #{_forward_arrays.1} parent=5 // pred_region
        %s177 = ssub.s32 %s17, 1
        // Predicated region
        $region13: #{_forward_arrays.1} parent=11 // pred_check
          %p178 = pneg %p90
        $region14: #{_forward_arrays.1} parent=11 // pred_check_branch
          %180 = sbr.rel (%p178) target = $region16
        $region15: #{_forward_arrays.1} parent=11 // pred_region
          %s182 = ssub.s32 12288, 12288
          %183 = vsyncadd [#allocation3], %s182
          %s184 = sshll.u32 [#allocation2], 4
          %s185 = int_to_ptr.vmem [resolvable:$true] %s184
          %190 = dma.hbm_to_vmem [thread:$0]  %s2, 12288, %s185, [#allocation3], 64, 64, 4
        $region16: #{_forward_arrays.1} parent=11 // pred_fallthru
          _
        // Predicated region
        $region17: #{_forward_arrays.1} parent=11 // pred_check
          %p191 = pneg %p111
        $region18: #{_forward_arrays.1} parent=11 // pred_check_branch
          %193 = sbr.rel (%p191) target = $region20
        $region19: #{_forward_arrays.1} parent=11 // pred_region
          %s195 = ssub.s32 8960, 8960
          %196 = vsyncadd [#allocation6], %s195
          %s197 = sshll.u32 [#allocation5], 4
          %s198 = int_to_ptr.vmem [resolvable:$true] %s197
          %203 = dma.hbm_to_vmem [thread:$0]  %s3, 8960, %s198, [#allocation6], 256, 256, 16
        $region20: #{_forward_arrays.1} parent=11 // pred_fallthru
          _
      $region12: #{_forward_arrays.1} parent=5 // pred_fallthru
        _
      %p204 = scmp.lt.s32.totalorder %s17, 2
      // Predicated region
      $region21: #{_forward_arrays.1} parent=5 // pred_check
        %p205 = pneg %p204
      $region22: #{_forward_arrays.1} parent=5 // pred_check_branch
        %207 = sbr.rel (%p205) target = $region24
      $region23: #{_forward_arrays.1} parent=5 // pred_region
        // Predicated region
        $region25: #{_forward_arrays.1} parent=23 // pred_check
          %p208 = pneg %p37
        $region26: #{_forward_arrays.1} parent=23 // pred_check_branch
          %210 = sbr.rel (%p208) target = $region28
        $region27: #{_forward_arrays.1} parent=23 // pred_region
          %s211 = smul.u32 8, %s17
          %p212 = scmp.lt.s32.totalorder %s211, 15
          %s213 = scalar_select %p212, %s211, 15
          %s214 = smul.addr %s213, 4
          %s215 = scalar_lea.vmem %s0, %s214
          %s216 = smul.u32 8, %s17
        $region28: #{_forward_arrays.1} parent=23 // pred_fallthru
          _
        // Predicated region
        $region29: #{_forward_arrays.1} parent=23 // pred_check
          %p217 = pneg %p63
        $region30: #{_forward_arrays.1} parent=23 // pred_check_branch
          %219 = sbr.rel (%p217) target = $region32
        $region31: #{_forward_arrays.1} parent=23 // pred_region
          %p220 = scmp.lt.s32.totalorder %s17, 1
          %s221 = scalar_select %p220, %s17, 1
          %s222 = smul.addr %s221, 2
          %s223 = smul.addr %s222, 4
          %s224 = scalar_lea.vmem %s1, %s223
        $region32: #{_forward_arrays.1} parent=23 // pred_fallthru
          _
      $region24: #{_forward_arrays.1} parent=5 // pred_fallthru
        _
      %p225 = scmp.le.s32.totalorder 1, %s17
      %p226 = scmp.lt.s32.totalorder %s17, 3
      %p227 = pnand %p225, %p226
      %p228 = pneg %p227
      // Predicated region
      $region33: #{_forward_arrays.1} parent=5 // pred_check
        _
      $region34: #{_forward_arrays.1} parent=5 // pred_check_branch
        %230 = sbr.rel (%p227) target = $region36
      $region35: #{_forward_arrays.1} parent=5 // pred_region
        %s231 = ssub.s32 %s17, 1
        // Predicated region
        $region37: #{_forward_arrays.1} parent=35 // pred_check
          %p232 = pneg %p90
        $region38: #{_forward_arrays.1} parent=35 // pred_check_branch
          %234 = sbr.rel (%p232) target = $region40
        $region39: #{_forward_arrays.1} parent=35 // pred_region
          %235 = dma.done [#allocation3], 12288
        $region40: #{_forward_arrays.1} parent=35 // pred_fallthru
          _
        // Predicated region
        $region41: #{_forward_arrays.1} parent=35 // pred_check
          %p236 = pneg %p111
        $region42: #{_forward_arrays.1} parent=35 // pred_check_branch
          %238 = sbr.rel (%p236) target = $region44
        $region43: #{_forward_arrays.1} parent=35 // pred_region
          %239 = dma.done [#allocation6], 8960
        $region44: #{_forward_arrays.1} parent=35 // pred_fallthru
          _
        %s240 = smul.u32 8, %s22
        %p241 = scmp.lt.s32.totalorder %s240, 15
        %s242 = scalar_select %p241, %s240, 15
        %s243 = smul.addr %s242, 4
        %s244 = scalar_lea.vmem %s0, %s243
        %p245 = pneg %p43
        %p246 = pneg %p40
        %p247 = scmp.lt.s32.totalorder %s22, 1
        %s248 = scalar_select %p247, %s22, 1
        %s249 = smul.addr %s248, 2
        %s250 = smul.addr %s249, 4
        %s251 = scalar_lea.vmem %s1, %s250
        %p252 = pneg %p69
        %p253 = pneg %p66
        %p254 = pneg %p90
        %p255 = pneg %p87
        %p256 = pneg %p111
        %p257 = pneg %p108
        %p258 = pneg %p137
        %p259 = pneg %p134
        %s260 = smul.u32 8, %s22
        %p261 = scmp.lt.s32.totalorder %s260, 15
        %s262 = scalar_select %p261, %s260, 15
        %s263 = smul.addr %s262, 8
        %s264 = scalar_lea.vmem %s4, %s263
        %p265 = pneg %p163
        %p266 = pneg %p160
        %s267 = sand.u32 %s150, 1
        %s268 = scalar_lea.sflag [#allocation4], %s267
        %s269 = sand.u32 %s150, 1
        %s270 = smul.addr %s269, 16
        %s271 = scalar_lea.vmem [#allocation7], %s270
        %s272 = smul.u32 8, %s22
        %p273 = scmp.lt.s32.totalorder %s272, 15
        %s274 = scalar_select %p273, %s272, 15
        %s275 = smul.addr %s274, 4
        %s276 = scalar_lea.vmem %s0, %s275
        %s277 = smul.u32 8, %s22
        %p278 = scmp.lt.s32.totalorder %s22, 1
        %s279 = scalar_select %p278, %s22, 1
        %s280 = smul.addr %s279, 2
        %s281 = smul.addr %s280, 4
        %s282 = scalar_lea.vmem %s1, %s281
        %s283 = smul.u32 8, %s22
        %p284 = scmp.lt.s32.totalorder %s283, 15
        %s285 = scalar_select %p284, %s283, 15
        %s286 = smul.addr %s285, 8
        %s287 = scalar_lea.vmem %s4, %s286
        %s288 = smul.u32 8, %s22
        %v290 = vld [vmem:[#allocation2] sm:$0xf]
        %v291 = vld [vmem:[#allocation2 + $0x4] sm:$0xf]
        %v292 = vld [vmem:[#allocation2 + $0x8] sm:$0xf]
        %v293 = vld [vmem:[#allocation2 + $0xc] sm:$0xf]
        %v294 = vld [vmem:[#allocation2 + $0x10] sm:$0xf]
        %v295 = vld [vmem:[#allocation2 + $0x14] sm:$0xf]
        %v296 = vld [vmem:[#allocation2 + $0x18] sm:$0xf]
        %v297 = vld [vmem:[#allocation2 + $0x1c] sm:$0xf]
        %v298 = vld [vmem:[#allocation2 + $0x20] sm:$0xf]
        %v299 = vld [vmem:[#allocation2 + $0x24] sm:$0xf]
        %v300 = vld [vmem:[#allocation2 + $0x28] sm:$0xf]
        %v301 = vld [vmem:[#allocation2 + $0x2c] sm:$0xf]
        %v302 = vld [vmem:[#allocation2 + $0x30] sm:$0xf]
        %v303 = vld [vmem:[#allocation2 + $0x34] sm:$0xf]
        %v304 = vld [vmem:[#allocation2 + $0x38] sm:$0xf]
        %v305 = vld [vmem:[#allocation2 + $0x3c] sm:$0xf]
        %v306 = vld [vmem:[#allocation2 + $0x40] sm:$0xf]
        %v307 = vld [vmem:[#allocation2 + $0x44] sm:$0xf]
        %v308 = vld [vmem:[#allocation2 + $0x48] sm:$0xf]
        %v309 = vld [vmem:[#allocation2 + $0x4c] sm:$0xf]
        %v310 = vld [vmem:[#allocation2 + $0x50] sm:$0xf]
        %v311 = vld [vmem:[#allocation2 + $0x54] sm:$0xf]
        %v312 = vld [vmem:[#allocation2 + $0x58] sm:$0xf]
        %v313 = vld [vmem:[#allocation2 + $0x5c] sm:$0xf]
        %v314 = vld [vmem:[#allocation2 + $0x60] sm:$0xf]
        %v315 = vld [vmem:[#allocation2 + $0x64] sm:$0xf]
        %v316 = vld [vmem:[#allocation2 + $0x68] sm:$0xf]
        %v317 = vld [vmem:[#allocation2 + $0x6c] sm:$0xf]
        %v318 = vld [vmem:[#allocation2 + $0x70] sm:$0xf]
        %v319 = vld [vmem:[#allocation2 + $0x74] sm:$0xf]
        %v320 = vld [vmem:[#allocation2 + $0x78] sm:$0xf]
        %v321 = vld [vmem:[#allocation2 + $0x7c] sm:$0xf]
        %v322 = vld [vmem:[#allocation2 + $0x80] sm:$0xf]
        %v323 = vld [vmem:[#allocation2 + $0x84] sm:$0xf]
        %v324 = vld [vmem:[#allocation2 + $0x88] sm:$0xf]
        %v325 = vld [vmem:[#allocation2 + $0x8c] sm:$0xf]
        %v326 = vld [vmem:[#allocation2 + $0x150] sm:$0xf]
        %v327 = vld [vmem:[#allocation2 + $0x154] sm:$0xf]
        %v328 = vld [vmem:[#allocation2 + $0x158] sm:$0xf]
        %v329 = vld [vmem:[#allocation2 + $0x15c] sm:$0xf]
        %v330 = vld [vmem:[#allocation2 + $0x160] sm:$0xf]
        %v331 = vld [vmem:[#allocation2 + $0x164] sm:$0xf]
        %v332 = vld [vmem:[#allocation2 + $0x168] sm:$0xf]
        %v333 = vld [vmem:[#allocation2 + $0x16c] sm:$0xf]
        %v334 = vld [vmem:[#allocation2 + $0x170] sm:$0xf]
        %v335 = vld [vmem:[#allocation2 + $0x174] sm:$0xf]
        %v336 = vld [vmem:[#allocation2 + $0x178] sm:$0xf]
        %v337 = vld [vmem:[#allocation2 + $0x17c] sm:$0xf]
        %v338 = vld [vmem:[#allocation5 + $0x220] sm:$0xff]
        %v339 = vld [vmem:[%s276] sm:$0xf]
        %v340 = vld [vmem:[%s276 + $0x4] sm:$0xf]
        %v341 = vld [vmem:[%s276 + $0x8] sm:$0xf]
        %v342 = vld [vmem:[%s276 + $0xc] sm:$0xf]
        %v343 = vld [vmem:[%s276 + $0x10] sm:$0xf]
        %v344 = vld [vmem:[%s276 + $0x14] sm:$0xf]
        %v345 = vld [vmem:[%s276 + $0x18] sm:$0xf]
        %v346 = vld [vmem:[%s276 + $0x1c] sm:$0xf]
        %v347 = vlaneseq
        %v348 = vshrl.u32 %v347, 7
        %v349 = vsub.s32 0, %v348
        %v350 = vrot.slane %v338, %v349
        %v359 = vunpack.c.l.b16 %v339
        %v360 = vunpack.c.l.b16 %v340
        %v361 = vunpack.c.l.b16 %v341
        %v362 = vunpack.c.l.b16 %v342
        %v363 = vunpack.c.l.b16 %v343
        %v364 = vunpack.c.l.b16 %v344
        %v365 = vunpack.c.l.b16 %v345
        %v366 = vunpack.c.l.b16 %v346
        %v367 = vpack.c.b16 %v360, %v359
        %v368 = vpack.c.b16 %v362, %v361
        %v369 = vpack.c.b16 %v364, %v363
        %v370 = vpack.c.b16 %v366, %v365
        %v379 = vunpack.c.l.b16 %v290
        %v380 = vunpack.c.l.b16 %v291
        %v381 = vunpack.c.l.b16 %v292
        %v382 = vunpack.c.l.b16 %v293
        %v383 = vunpack.c.l.b16 %v294
        %v384 = vunpack.c.l.b16 %v295
        %v385 = vunpack.c.l.b16 %v296
        %v386 = vunpack.c.l.b16 %v297
        %v387 = vpack.c.b16 %v380, %v379
        %v388 = vpack.c.b16 %v382, %v381
        %v389 = vpack.c.b16 %v384, %v383
        %v390 = vpack.c.b16 %v386, %v385
        %vm395 = vcmask 523264
        %v397 = vsel %vm395, %v367, 0
        %v400 = vsel %vm395, %v368, 0
        %v403 = vsel %vm395, %v369, 0
        %v406 = vsel %vm395, %v370, 0
        %408 = vmatprep.subr.bf16.mxu0 0
        %409 = vmatpush1.bf16.msra.mxu0 %v387
        %410 = vmatprep.subr.bf16.mxu0 0
        %411 = vmatpush1.bf16.msra.mxu0 %v388
        %412 = vmatprep.subr.bf16.mxu0 0
        %413 = vmatpush1.bf16.msra.mxu0 %v389
        %414 = vmatprep.subr.bf16.mxu0 0
        %415 = vmatpush1.bf16.msra.mxu0 %v390
        %416 = vmatprep.subr.bf16.mxu0 0
        %417 = vmatpush1.bf16.msra.mxu0 0
        %418 = vmatprep.subr.bf16.mxu0 0
        %419 = vmatpush1.bf16.msra.mxu0 0
        %420 = vmatprep.subr.bf16.mxu0 0
        %421 = vmatpush1.bf16.msra.mxu0 0
        %422 = vmatprep.subr.bf16.mxu0 0
        %423 = vmatpush1.bf16.msra.mxu0 0
        %424 = vmatprep.subr.bf16.mxu0 0
        %425 = vmatpush1.bf16.msra.mxu0 0
        %426 = vmatprep.subr.bf16.mxu0 0
        %427 = vmatpush1.bf16.msra.mxu0 0
        %428 = vmatprep.subr.bf16.mxu0 0
        %429 = vmatpush1.bf16.msra.mxu0 0
        %430 = vmatprep.subr.bf16.mxu0 0
        %431 = vmatpush1.bf16.msra.mxu0 0
        %432 = vmatprep.subr.bf16.mxu0 0
        %433 = vmatpush1.bf16.msra.mxu0 0
        %434 = vmatprep.subr.bf16.mxu0 0
        %435 = vmatpush1.bf16.msra.mxu0 0
        %436 = vmatprep.subr.bf16.mxu0 0
        %437 = vmatpush1.bf16.msra.mxu0 0
        %438 = vmatprep.subr.bf16.mxu0 0
        %439 = vmatpush1.bf16.msra.mxu0 0
        %440 = vmatprep.mubr.bf16.mxu0 0
        %441 = vmatmul.mubr.bf16.gmra.mrb[0].mxu0 %v397
        %v442 = vpop.f32.mrb[0].mxu0
        %v443 = vadd.f32 %v350, %v442
        %v444 = vpop.f32.mrb[0].mxu0
        %v445 = vpop.f32.mrb[0].mxu0
        %v446 = vadd.f32 %v350, %v445
        %v447 = vpop.f32.mrb[0].mxu0
        %448 = vmatprep.mubr.bf16.mxu0 0
        %449 = vmatmul.mubr.bf16.gmra.mrb[0].mxu0 %v400
        %v450 = vpop.f32.mrb[0].mxu0
        %v451 = vadd.f32 %v350, %v450
        %v452 = vpop.f32.mrb[0].mxu0
        %v453 = vpop.f32.mrb[0].mxu0
        %v454 = vadd.f32 %v350, %v453
        %v455 = vpop.f32.mrb[0].mxu0
        %456 = vmatprep.mubr.bf16.mxu0 0
        %457 = vmatmul.mubr.bf16.gmra.mrb[0].mxu0 %v403
        %v458 = vpop.f32.mrb[0].mxu0
        %v459 = vadd.f32 %v350, %v458
        %v460 = vpop.f32.mrb[0].mxu0
        %v461 = vpop.f32.mrb[0].mxu0
        %v462 = vadd.f32 %v350, %v461
        %v463 = vpop.f32.mrb[0].mxu0
        %464 = vmatprep.mubr.bf16.mxu0 0
        %465 = vmatmul.mubr.bf16.gmra.mrb[0].mxu0 %v406
        %v466 = vpop.f32.mrb[0].mxu0
        %v467 = vadd.f32 %v350, %v466
        %v468 = vpop.f32.mrb[0].mxu0
        %v469 = vpop.f32.mrb[0].mxu0
        %v470 = vadd.f32 %v350, %v469
        %v471 = vpop.f32.mrb[0].mxu0
        %472 = vdwg.mxu0
        %v473 = vld [vmem:[%s282] sm:$0xff]
        %v475 = vunpack.c.l.b16 %v473
        %v476 = vunpack.c.h.b16 %v473
        %v477 = vpack.c.b16 %v475, %v475
        %v478 = vpack.c.b16 %v476, %v476
        %v504 = vunpack.c.l.b16 %v298
        %v505 = vunpack.c.l.b16 %v299
        %v506 = vunpack.c.l.b16 %v300
        %v507 = vunpack.c.l.b16 %v301
        %v508 = vunpack.c.l.b16 %v302
        %v509 = vunpack.c.l.b16 %v303
        %v510 = vunpack.c.l.b16 %v304
        %v511 = vunpack.c.l.b16 %v305
        %v512 = vunpack.c.l.b16 %v306
        %v513 = vunpack.c.l.b16 %v307
        %v514 = vunpack.c.l.b16 %v308
        %v515 = vunpack.c.l.b16 %v309
        %v516 = vunpack.c.l.b16 %v310
        %v517 = vunpack.c.l.b16 %v311
        %v518 = vunpack.c.l.b16 %v312
        %v519 = vunpack.c.l.b16 %v313
        %v520 = vunpack.c.l.b16 %v314
        %v521 = vunpack.c.l.b16 %v315
        %v522 = vunpack.c.l.b16 %v316
        %v523 = vunpack.c.l.b16 %v317
        %v524 = vunpack.c.l.b16 %v318
        %v525 = vunpack.c.l.b16 %v319
        %v526 = vunpack.c.l.b16 %v320
        %v527 = vunpack.c.l.b16 %v321
        %v528 = vpack.c.b16 %v505, %v504
        %v529 = vpack.c.b16 %v507, %v506
        %v530 = vpack.c.b16 %v509, %v508
        %v531 = vpack.c.b16 %v511, %v510
        %v532 = vpack.c.b16 %v513, %v512
        %v533 = vpack.c.b16 %v515, %v514
        %v534 = vpack.c.b16 %v517, %v516
        %v535 = vpack.c.b16 %v519, %v518
        %v536 = vpack.c.b16 %v521, %v520
        %v537 = vpack.c.b16 %v523, %v522
        %v538 = vpack.c.b16 %v525, %v524
        %v539 = vpack.c.b16 %v527, %v526
        %v553 = vsel %vm395, %v478, 0
        %555 = vmatprep.subr.bf16.mxu0 0
        %556 = vmatpush1.bf16.msra.mxu0 %v528
        %557 = vmatprep.subr.bf16.mxu0 0
        %558 = vmatpush1.bf16.msra.mxu0 %v529
        %559 = vmatprep.subr.bf16.mxu0 0
        %560 = vmatpush1.bf16.msra.mxu0 %v530
        %561 = vmatprep.subr.bf16.mxu0 0
        %562 = vmatpush1.bf16.msra.mxu0 %v531
        %563 = vmatprep.subr.bf16.mxu0 0
        %564 = vmatpush1.bf16.msra.mxu0 %v532
        %565 = vmatprep.subr.bf16.mxu0 0
        %566 = vmatpush1.bf16.msra.mxu0 %v533
        %567 = vmatprep.subr.bf16.mxu0 0
        %568 = vmatpush1.bf16.msra.mxu0 %v534
        %569 = vmatprep.subr.bf16.mxu0 0
        %570 = vmatpush1.bf16.msra.mxu0 %v535
        %571 = vmatprep.subr.bf16.mxu0 0
        %572 = vmatpush1.bf16.msra.mxu0 %v536
        %573 = vmatprep.subr.bf16.mxu0 0
        %574 = vmatpush1.bf16.msra.mxu0 %v537
        %575 = vmatprep.subr.bf16.mxu0 0
        %576 = vmatpush1.bf16.msra.mxu0 %v538
        %577 = vmatprep.subr.bf16.mxu0 0
        %578 = vmatpush1.bf16.msra.mxu0 %v539
        %579 = vmatprep.subr.bf16.mxu0 0
        %580 = vmatpush1.bf16.msra.mxu0 0
        %581 = vmatprep.subr.bf16.mxu0 0
        %582 = vmatpush1.bf16.msra.mxu0 0
        %583 = vmatprep.subr.bf16.mxu0 0
        %584 = vmatpush1.bf16.msra.mxu0 0
        %585 = vmatprep.subr.bf16.mxu0 0
        %586 = vmatpush1.bf16.msra.mxu0 0
        %587 = vmatprep.mubr.bf16.mxu0 %v553
        %588 = vmatmul.mubr.bf16.gmra.mrb[0].mxu0 %v477
        %v589 = vpop.f32.mrb[0].mxu0
        %v590 = vadd.f32 0.0, %v589
        %v591 = vpop.f32.mrb[0].mxu0
        %v592 = vpop.f32.mrb[0].mxu0
        %v593 = vpop.f32.mrb[0].mxu0
        %594 = vdwg.mxu0
        %v595 = vpack.c.bf16 %v590, %v590
        %v604 = vunpack.c.l.b16 %v330
        %v605 = vunpack.c.l.b16 %v331
        %v606 = vunpack.c.l.b16 %v332
        %v607 = vunpack.c.l.b16 %v333
        %v608 = vunpack.c.l.b16 %v334
        %v609 = vunpack.c.l.b16 %v335
        %v610 = vunpack.c.l.b16 %v336
        %v611 = vunpack.c.l.b16 %v337
        %v612 = vpack.c.b16 %v605, %v604
        %v613 = vpack.c.b16 %v607, %v606
        %v614 = vpack.c.b16 %v609, %v608
        %v615 = vpack.c.b16 %v611, %v610
        %vm616 = vcmask 64512
        %v618 = vsel %vm616, %v612, 0
        %v621 = vsel %vm616, %v613, 0
        %v624 = vsel %vm616, %v614, 0
        %v627 = vsel %vm616, %v615, 0
        %vm629 = vcmask 1043456
        %v631 = vsel %vm629, %v595, 0
        %633 = vmatprep.subr.bf16.mxu0 0
        %634 = vmatpush1.bf16.msra.mxu0 %v631
        %635 = vmatprep.subr.bf16.mxu0 0
        %636 = vmatpush1.bf16.msra.mxu0 0
        %637 = vmatprep.subr.bf16.mxu0 0
        %638 = vmatpush1.bf16.msra.mxu0 0
        %639 = vmatprep.subr.bf16.mxu0 0
        %640 = vmatpush1.bf16.msra.mxu0 0
        %641 = vmatprep.subr.bf16.mxu0 0
        %642 = vmatpush1.bf16.msra.mxu0 0
        %643 = vmatprep.subr.bf16.mxu0 0
        %644 = vmatpush1.bf16.msra.mxu0 0
        %645 = vmatprep.subr.bf16.mxu0 0
        %646 = vmatpush1.bf16.msra.mxu0 0
        %647 = vmatprep.subr.bf16.mxu0 0
        %648 = vmatpush1.bf16.msra.mxu0 0
        %649 = vmatprep.subr.bf16.mxu0 0
        %650 = vmatpush1.bf16.msra.mxu0 0
        %651 = vmatprep.subr.bf16.mxu0 0
        %652 = vmatpush1.bf16.msra.mxu0 0
        %653 = vmatprep.subr.bf16.mxu0 0
        %654 = vmatpush1.bf16.msra.mxu0 0
        %655 = vmatprep.subr.bf16.mxu0 0
        %656 = vmatpush1.bf16.msra.mxu0 0
        %657 = vmatprep.subr.bf16.mxu0 0
        %658 = vmatpush1.bf16.msra.mxu0 0
        %659 = vmatprep.subr.bf16.mxu0 0
        %660 = vmatpush1.bf16.msra.mxu0 0
        %661 = vmatprep.subr.bf16.mxu0 0
        %662 = vmatpush1.bf16.msra.mxu0 0
        %663 = vmatprep.subr.bf16.mxu0 0
        %664 = vmatpush1.bf16.msra.mxu0 0
        %665 = vmatprep.mubr.bf16.mxu0 0
        %666 = vmatmul.mubr.bf16.gmra.mrb[0].mxu0 %v618
        %v667 = vpop.f32.mrb[0].mxu0
        %v668 = vadd.f32 0.0, %v667
        %v669 = vpop.f32.mrb[0].mxu0
        %v670 = vpop.f32.mrb[0].mxu0
        %v671 = vadd.f32 0.0, %v670
        %v672 = vpop.f32.mrb[0].mxu0
        %673 = vmatprep.mubr.bf16.mxu0 0
        %674 = vmatmul.mubr.bf16.gmra.mrb[0].mxu0 %v621
        %v675 = vpop.f32.mrb[0].mxu0
        %v676 = vadd.f32 0.0, %v675
        %v677 = vpop.f32.mrb[0].mxu0
        %v678 = vpop.f32.mrb[0].mxu0
        %v679 = vadd.f32 0.0, %v678
        %v680 = vpop.f32.mrb[0].mxu0
        %681 = vmatprep.mubr.bf16.mxu0 0
        %682 = vmatmul.mubr.bf16.gmra.mrb[0].mxu0 %v624
        %v683 = vpop.f32.mrb[0].mxu0
        %v684 = vadd.f32 0.0, %v683
        %v685 = vpop.f32.mrb[0].mxu0
        %v686 = vpop.f32.mrb[0].mxu0
        %v687 = vadd.f32 0.0, %v686
        %v688 = vpop.f32.mrb[0].mxu0
        %689 = vmatprep.mubr.bf16.mxu0 0
        %690 = vmatmul.mubr.bf16.gmra.mrb[0].mxu0 %v627
        %v691 = vpop.f32.mrb[0].mxu0
        %v692 = vadd.f32 0.0, %v691
        %v693 = vpop.f32.mrb[0].mxu0
        %v694 = vpop.f32.mrb[0].mxu0
        %v695 = vadd.f32 0.0, %v694
        %v696 = vpop.f32.mrb[0].mxu0
        %697 = vdwg.mxu0
        %v698 = vadd.f32 %v443, %v668
        %v699 = vadd.f32 %v446, %v671
        %v700 = vadd.f32 %v451, %v676
        %v701 = vadd.f32 %v454, %v679
        %v702 = vadd.f32 %v459, %v684
        %v703 = vadd.f32 %v462, %v687
        %v704 = vadd.f32 %v467, %v692
        %v705 = vadd.f32 %v470, %v695
        %v706 = vtanh.pop %v698
        %v707 = vtanh.pop %v699
        %v708 = vtanh.pop %v700
        %v709 = vtanh.pop %v701
        %v710 = vtanh.pop %v702
        %v711 = vtanh.pop %v703
        %v712 = vtanh.pop %v704
        %v713 = vtanh.pop %v705
        %v714 = vpack.c.bf16 %v707, %v706
        %v715 = vpack.c.bf16 %v709, %v708
        %v716 = vpack.c.bf16 %v711, %v710
        %v717 = vpack.c.bf16 %v713, %v712
        %v718 = vlaneseq
        %v719 = vshrl.u32 %v718, 7
        %v720 = vsub.s32 1, %v719
        %v721 = vrot.slane %v338, %v720
        %v726 = vunpack.c.l.b16 %v322
        %v727 = vunpack.c.l.b16 %v323
        %v728 = vunpack.c.l.b16 %v324
        %v729 = vunpack.c.l.b16 %v325
        %v730 = vpack.c.b16 %v727, %v726
        %v731 = vpack.c.b16 %v729, %v728
        %vm734 = vcmask 261120
        %v736 = vsel %vm734, %v714, 0
        %v739 = vsel %vm734, %v715, 0
        %v742 = vsel %vm734, %v716, 0
        %v745 = vsel %vm734, %v717, 0
        %747 = vmatprep.subr.bf16.mxu0 0
        %748 = vmatpush1.bf16.msra.mxu0 %v730
        %749 = vmatprep.subr.bf16.mxu0 0
        %750 = vmatpush1.bf16.msra.mxu0 %v731
        %751 = vmatprep.subr.bf16.mxu0 0
        %752 = vmatpush1.bf16.msra.mxu0 0
        %753 = vmatprep.subr.bf16.mxu0 0
        %754 = vmatpush1.bf16.msra.mxu0 0
        %755 = vmatprep.subr.bf16.mxu0 0
        %756 = vmatpush1.bf16.msra.mxu0 0
        %757 = vmatprep.subr.bf16.mxu0 0
        %758 = vmatpush1.bf16.msra.mxu0 0
        %759 = vmatprep.subr.bf16.mxu0 0
        %760 = vmatpush1.bf16.msra.mxu0 0
        %761 = vmatprep.subr.bf16.mxu0 0
        %762 = vmatpush1.bf16.msra.mxu0 0
        %763 = vmatprep.subr.bf16.mxu0 0
        %764 = vmatpush1.bf16.msra.mxu0 0
        %765 = vmatprep.subr.bf16.mxu0 0
        %766 = vmatpush1.bf16.msra.mxu0 0
        %767 = vmatprep.subr.bf16.mxu0 0
        %768 = vmatpush1.bf16.msra.mxu0 0
        %769 = vmatprep.subr.bf16.mxu0 0
        %770 = vmatpush1.bf16.msra.mxu0 0
        %771 = vmatprep.subr.bf16.mxu0 0
        %772 = vmatpush1.bf16.msra.mxu0 0
        %773 = vmatprep.subr.bf16.mxu0 0
        %774 = vmatpush1.bf16.msra.mxu0 0
        %775 = vmatprep.subr.bf16.mxu0 0
        %776 = vmatpush1.bf16.msra.mxu0 0
        %777 = vmatprep.subr.bf16.mxu0 0
        %778 = vmatpush1.bf16.msra.mxu0 0
        %779 = vmatprep.mubr.bf16.mxu0 0
        %780 = vmatmul.mubr.bf16.gmra.mrb[0].mxu0 %v736
        %v781 = vpop.f32.mrb[0].mxu0
        %v782 = vadd.f32 %v721, %v781
        %v783 = vpop.f32.mrb[0].mxu0
        %v784 = vpop.f32.mrb[0].mxu0
        %v785 = vadd.f32 %v721, %v784
        %v786 = vpop.f32.mrb[0].mxu0
        %787 = vmatprep.mubr.bf16.mxu0 0
        %788 = vmatmul.mubr.bf16.gmra.mrb[0].mxu0 %v739
        %v789 = vpop.f32.mrb[0].mxu0
        %v790 = vadd.f32 %v721, %v789
        %v791 = vpop.f32.mrb[0].mxu0
        %v792 = vpop.f32.mrb[0].mxu0
        %v793 = vadd.f32 %v721, %v792
        %v794 = vpop.f32.mrb[0].mxu0
        %795 = vmatprep.mubr.bf16.mxu0 0
        %796 = vmatmul.mubr.bf16.gmra.mrb[0].mxu0 %v742
        %v797 = vpop.f32.mrb[0].mxu0
        %v798 = vadd.f32 %v721, %v797
        %v799 = vpop.f32.mrb[0].mxu0
        %v800 = vpop.f32.mrb[0].mxu0
        %v801 = vadd.f32 %v721, %v800
        %v802 = vpop.f32.mrb[0].mxu0
        %803 = vmatprep.mubr.bf16.mxu0 0
        %804 = vmatmul.mubr.bf16.gmra.mrb[0].mxu0 %v745
        %v805 = vpop.f32.mrb[0].mxu0
        %v806 = vadd.f32 %v721, %v805
        %v807 = vpop.f32.mrb[0].mxu0
        %v808 = vpop.f32.mrb[0].mxu0
        %v809 = vadd.f32 %v721, %v808
        %v810 = vpop.f32.mrb[0].mxu0
        %811 = vdwg.mxu0
        %812 = vst [vmem:[%s287] sm:$0xff] %v782
        %813 = vst [vmem:[%s287 + $0x8] sm:$0xff] %v785
        %814 = vst [vmem:[%s287 + $0x10] sm:$0xff] %v790
        %815 = vst [vmem:[%s287 + $0x18] sm:$0xff] %v793
        %816 = vst [vmem:[%s287 + $0x20] sm:$0xff] %v798
        %817 = vst [vmem:[%s287 + $0x28] sm:$0xff] %v801
        %818 = vst [vmem:[%s287 + $0x30] sm:$0xff] %v806
        %819 = vst [vmem:[%s287 + $0x38] sm:$0xff] %v809
        %v820 = vpack.c.bf16 %v785, %v782
        %v821 = vpack.c.bf16 %v793, %v790
        %v822 = vpack.c.bf16 %v801, %v798
        %v823 = vpack.c.bf16 %v809, %v806
        %v824 = vld [vmem:[#allocation2 + $0x90] sm:$0xf]
        %v825 = vld [vmem:[#allocation2 + $0x94] sm:$0xf]
        %v826 = vld [vmem:[#allocation2 + $0x98] sm:$0xf]
        %v827 = vld [vmem:[#allocation2 + $0x9c] sm:$0xf]
        %v828 = vld [vmem:[#allocation2 + $0xa0] sm:$0xf]
        %v829 = vld [vmem:[#allocation2 + $0xa4] sm:$0xf]
        %v830 = vld [vmem:[#allocation2 + $0xa8] sm:$0xf]
        %v831 = vld [vmem:[#allocation2 + $0xac] sm:$0xf]
        %v832 = vld [vmem:[#allocation2 + $0xb0] sm:$0xf]
        %v833 = vld [vmem:[#allocation2 + $0xb4] sm:$0xf]
        %v834 = vld [vmem:[#allocation2 + $0xb8] sm:$0xf]
        %v835 = vld [vmem:[#allocation2 + $0xbc] sm:$0xf]
        %v836 = vld [vmem:[#allocation2 + $0xc0] sm:$0xf]
        %v837 = vld [vmem:[#allocation2 + $0xc4] sm:$0xf]
        %v838 = vld [vmem:[#allocation2 + $0xc8] sm:$0xf]
        %v839 = vld [vmem:[#allocation2 + $0xcc] sm:$0xf]
        %v840 = vld [vmem:[#allocation2 + $0x180] sm:$0xf]
        %v841 = vld [vmem:[#allocation2 + $0x184] sm:$0xf]
        %v842 = vld [vmem:[#allocation2 + $0x188] sm:$0xf]
        %v843 = vld [vmem:[#allocation2 + $0x18c] sm:$0xf]
        %v844 = vld [vmem:[#allocation2 + $0x190] sm:$0xf]
        %v845 = vld [vmem:[#allocation2 + $0x194] sm:$0xf]
        %v846 = vld [vmem:[#allocation2 + $0x198] sm:$0xf]
        %v847 = vld [vmem:[#allocation2 + $0x19c] sm:$0xf]
        %v848 = vld [vmem:[#allocation2 + $0x1a0] sm:$0xf]
        %v849 = vld [vmem:[#allocation2 + $0x1a4] sm:$0xf]
        %v850 = vld [vmem:[#allocation2 + $0x1a8] sm:$0xf]
        %v851 = vld [vmem:[#allocation2 + $0x1ac] sm:$0xf]
        %v852 = vld [vmem:[#allocation2 + $0x1b0] sm:$0xf]
        %v853 = vld [vmem:[#allocation2 + $0x1b4] sm:$0xf]
        %v854 = vld [vmem:[#allocation2 + $0x1b8] sm:$0xf]
        %v855 = vld [vmem:[#allocation2 + $0x1bc] sm:$0xf]
        %v856 = vld [vmem:[#allocation2 + $0x1c0] sm:$0xf]
        %v857 = vld [vmem:[#allocation2 + $0x1c4] sm:$0xf]
        %v858 = vld [vmem:[#allocation2 + $0x1c8] sm:$0xf]
        %v859 = vld [vmem:[#allocation2 + $0x1cc] sm:$0xf]
        %v860 = vld [vmem:[#allocation2 + $0x1d0] sm:$0xf]
        %v861 = vld [vmem:[#allocation2 + $0x1d4] sm:$0xf]
        %v862 = vld [vmem:[#allocation2 + $0x1d8] sm:$0xf]
        %v863 = vld [vmem:[#allocation2 + $0x1dc] sm:$0xf]
        %v864 = vld [vmem:[#allocation2 + $0x1e0] sm:$0xf]
        %v865 = vld [vmem:[#allocation2 + $0x1e4] sm:$0xf]
        %v866 = vld [vmem:[#allocation2 + $0x1e8] sm:$0xf]
        %v867 = vld [vmem:[#allocation2 + $0x1ec] sm:$0xf]
        %v868 = vld [vmem:[#allocation2 + $0x1f0] sm:$0xf]
        %v869 = vld [vmem:[#allocation2 + $0x1f4] sm:$0xf]
        %v870 = vld [vmem:[#allocation2 + $0x1f8] sm:$0xf]
        %v871 = vld [vmem:[#allocation2 + $0x1fc] sm:$0xf]
        %v888 = vunpack.c.l.b16 %v824
        %v889 = vunpack.c.l.b16 %v825
        %v890 = vunpack.c.l.b16 %v826
        %v891 = vunpack.c.l.b16 %v827
        %v892 = vunpack.c.l.b16 %v828
        %v893 = vunpack.c.l.b16 %v829
        %v894 = vunpack.c.l.b16 %v830
        %v895 = vunpack.c.l.b16 %v831
        %v896 = vunpack.c.l.b16 %v832
        %v897 = vunpack.c.l.b16 %v833
        %v898 = vunpack.c.l.b16 %v834
        %v899 = vunpack.c.l.b16 %v835
        %v900 = vunpack.c.l.b16 %v836
        %v901 = vunpack.c.l.b16 %v837
        %v902 = vunpack.c.l.b16 %v838
        %v903 = vunpack.c.l.b16 %v839
        %v904 = vpack.c.b16 %v889, %v888
        %v905 = vpack.c.b16 %v891, %v890
        %v906 = vpack.c.b16 %v893, %v892
        %v907 = vpack.c.b16 %v895, %v894
        %v908 = vpack.c.b16 %v897, %v896
        %v909 = vpack.c.b16 %v899, %v898
        %v910 = vpack.c.b16 %v901, %v900
        %v911 = vpack.c.b16 %v903, %v902
        %920 = vmatprep.subr.bf16.mxu0 0
        %921 = vmatpush1.bf16.msra.mxu0 %v904
        %922 = vmatprep.subr.bf16.mxu0 0
        %923 = vmatpush1.bf16.msra.mxu0 %v905
        %924 = vmatprep.subr.bf16.mxu0 0
        %925 = vmatpush1.bf16.msra.mxu0 %v906
        %926 = vmatprep.subr.bf16.mxu0 0
        %927 = vmatpush1.bf16.msra.mxu0 %v907
        %928 = vmatprep.subr.bf16.mxu0 0
        %929 = vmatpush1.bf16.msra.mxu0 %v908
        %930 = vmatprep.subr.bf16.mxu0 0
        %931 = vmatpush1.bf16.msra.mxu0 %v909
        %932 = vmatprep.subr.bf16.mxu0 0
        %933 = vmatpush1.bf16.msra.mxu0 %v910
        %934 = vmatprep.subr.bf16.mxu0 0
        %935 = vmatpush1.bf16.msra.mxu0 %v911
        %936 = vmatprep.subr.bf16.mxu0 0
        %937 = vmatpush1.bf16.msra.mxu0 0
        %938 = vmatprep.subr.bf16.mxu0 0
        %939 = vmatpush1.bf16.msra.mxu0 0
        %940 = vmatprep.subr.bf16.mxu0 0
        %941 = vmatpush1.bf16.msra.mxu0 0
        %942 = vmatprep.subr.bf16.mxu0 0
        %943 = vmatpush1.bf16.msra.mxu0 0
        %944 = vmatprep.subr.bf16.mxu0 0
        %945 = vmatpush1.bf16.msra.mxu0 0
        %946 = vmatprep.subr.bf16.mxu0 0
        %947 = vmatpush1.bf16.msra.mxu0 0
        %948 = vmatprep.subr.bf16.mxu0 0
        %949 = vmatpush1.bf16.msra.mxu0 0
        %950 = vmatprep.subr.bf16.mxu0 0
        %951 = vmatpush1.bf16.msra.mxu0 0
        %952 = vmatprep.mubr.bf16.mxu0 0
        %953 = vmatmul.mubr.bf16.gmra.mrb[0].mxu0 %v820
        %v954 = vpop.f32.mrb[0].mxu0
        %v955 = vadd.f32 0.0, %v954
        %v956 = vpop.f32.mrb[0].mxu0
        %v957 = vpop.f32.mrb[0].mxu0
        %v958 = vadd.f32 0.0, %v957
        %v959 = vpop.f32.mrb[0].mxu0
        %960 = vmatprep.mubr.bf16.mxu0 0
        %961 = vmatmul.mubr.bf16.gmra.mrb[0].mxu0 %v821
        %v962 = vpop.f32.mrb[0].mxu0
        %v963 = vadd.f32 0.0, %v962
        %v964 = vpop.f32.mrb[0].mxu0
        %v965 = vpop.f32.mrb[0].mxu0
        %v966 = vadd.f32 0.0, %v965
        %v967 = vpop.f32.mrb[0].mxu0
        %968 = vmatprep.mubr.bf16.mxu0 0
        %969 = vmatmul.mubr.bf16.gmra.mrb[0].mxu0 %v822
        %v970 = vpop.f32.mrb[0].mxu0
        %v971 = vadd.f32 0.0, %v970
        %v972 = vpop.f32.mrb[0].mxu0
        %v973 = vpop.f32.mrb[0].mxu0
        %v974 = vadd.f32 0.0, %v973
        %v975 = vpop.f32.mrb[0].mxu0
        %976 = vmatprep.mubr.bf16.mxu0 0
        %977 = vmatmul.mubr.bf16.gmra.mrb[0].mxu0 %v823
        %v978 = vpop.f32.mrb[0].mxu0
        %v979 = vadd.f32 0.0, %v978
        %v980 = vpop.f32.mrb[0].mxu0
        %v981 = vpop.f32.mrb[0].mxu0
        %v982 = vadd.f32 0.0, %v981
        %v983 = vpop.f32.mrb[0].mxu0
        %984 = vdwg.mxu0
        %v985 = vpack.c.bf16 %v958, %v955
        %v986 = vpack.c.bf16 %v966, %v963
        %v987 = vpack.c.bf16 %v974, %v971
        %v988 = vpack.c.bf16 %v982, %v979
        %v1021 = vunpack.c.l.b16 %v840
        %v1022 = vunpack.c.l.b16 %v841
        %v1023 = vunpack.c.l.b16 %v842
        %v1024 = vunpack.c.l.b16 %v843
        %v1025 = vunpack.c.l.b16 %v844
        %v1026 = vunpack.c.l.b16 %v845
        %v1027 = vunpack.c.l.b16 %v846
        %v1028 = vunpack.c.l.b16 %v847
        %v1029 = vunpack.c.l.b16 %v848
        %v1030 = vunpack.c.l.b16 %v849
        %v1031 = vunpack.c.l.b16 %v850
        %v1032 = vunpack.c.l.b16 %v851
        %v1033 = vunpack.c.l.b16 %v852
        %v1034 = vunpack.c.l.b16 %v853
        %v1035 = vunpack.c.l.b16 %v854
        %v1036 = vunpack.c.l.b16 %v855
        %v1037 = vunpack.c.l.b16 %v856
        %v1038 = vunpack.c.l.b16 %v857
        %v1039 = vunpack.c.l.b16 %v858
        %v1040 = vunpack.c.l.b16 %v859
        %v1041 = vunpack.c.l.b16 %v860
        %v1042 = vunpack.c.l.b16 %v861
        %v1043 = vunpack.c.l.b16 %v862
        %v1044 = vunpack.c.l.b16 %v863
        %v1045 = vunpack.c.l.b16 %v864
        %v1046 = vunpack.c.l.b16 %v865
        %v1047 = vunpack.c.l.b16 %v866
        %v1048 = vunpack.c.l.b16 %v867
        %v1049 = vunpack.c.l.b16 %v868
        %v1050 = vunpack.c.l.b16 %v869
        %v1051 = vunpack.c.l.b16 %v870
        %v1052 = vunpack.c.l.b16 %v871
        %v1053 = vpack.c.b16 %v1022, %v1021
        %v1054 = vpack.c.b16 %v1024, %v1023
        %v1055 = vpack.c.b16 %v1026, %v1025
        %v1056 = vpack.c.b16 %v1028, %v1027
        %v1057 = vpack.c.b16 %v1030, %v1029
        %v1058 = vpack.c.b16 %v1032, %v1031
        %v1059 = vpack.c.b16 %v1034, %v1033
        %v1060 = vpack.c.b16 %v1036, %v1035
        %v1061 = vpack.c.b16 %v1038, %v1037
        %v1062 = vpack.c.b16 %v1040, %v1039
        %v1063 = vpack.c.b16 %v1042, %v1041
        %v1064 = vpack.c.b16 %v1044, %v1043
        %v1065 = vpack.c.b16 %v1046, %v1045
        %v1066 = vpack.c.b16 %v1048, %v1047
        %v1067 = vpack.c.b16 %v1050, %v1049
        %v1068 = vpack.c.b16 %v1052, %v1051
        %v1070 = vsel %vm395, %v1053, 0
        %v1073 = vsel %vm395, %v1054, 0
        %v1076 = vsel %vm395, %v1055, 0
        %v1079 = vsel %vm395, %v1056, 0
        %v1082 = vsel %vm395, %v1057, 0
        %v1085 = vsel %vm395, %v1058, 0
        %v1088 = vsel %vm395, %v1059, 0
        %v1091 = vsel %vm395, %v1060, 0
        %v1094 = vsel %vm395, %v1061, 0
        %v1097 = vsel %vm395, %v1062, 0
        %v1100 = vsel %vm395, %v1063, 0
        %v1103 = vsel %vm395, %v1064, 0
        %v1106 = vsel %vm395, %v1065, 0
        %v1109 = vsel %vm395, %v1066, 0
        %v1112 = vsel %vm395, %v1067, 0
        %v1115 = vsel %vm395, %v1068, 0
        %1117 = vmatprep.subr.bf16.mxu0 0
        %1118 = vmatpush1.bf16.msra.mxu0 %v985
        %1119 = vmatprep.subr.bf16.mxu0 0
        %1120 = vmatpush1.bf16.msra.mxu0 %v986
        %1121 = vmatprep.subr.bf16.mxu0 0
        %1122 = vmatpush1.bf16.msra.mxu0 %v987
        %1123 = vmatprep.subr.bf16.mxu0 0
        %1124 = vmatpush1.bf16.msra.mxu0 %v988
        %1125 = vmatprep.subr.bf16.mxu0 0
        %1126 = vmatpush1.bf16.msra.mxu0 0
        %1127 = vmatprep.subr.bf16.mxu0 0
        %1128 = vmatpush1.bf16.msra.mxu0 0
        %1129 = vmatprep.subr.bf16.mxu0 0
        %1130 = vmatpush1.bf16.msra.mxu0 0
        %1131 = vmatprep.subr.bf16.mxu0 0
        %1132 = vmatpush1.bf16.msra.mxu0 0
        %1133 = vmatprep.subr.bf16.mxu0 0
        %1134 = vmatpush1.bf16.msra.mxu0 0
        %1135 = vmatprep.subr.bf16.mxu0 0
        %1136 = vmatpush1.bf16.msra.mxu0 0
        %1137 = vmatprep.subr.bf16.mxu0 0
        %1138 = vmatpush1.bf16.msra.mxu0 0
        %1139 = vmatprep.subr.bf16.mxu0 0
        %1140 = vmatpush1.bf16.msra.mxu0 0
        %1141 = vmatprep.subr.bf16.mxu0 0
        %1142 = vmatpush1.bf16.msra.mxu0 0
        %1143 = vmatprep.subr.bf16.mxu0 0
        %1144 = vmatpush1.bf16.msra.mxu0 0
        %1145 = vmatprep.subr.bf16.mxu0 0
        %1146 = vmatpush1.bf16.msra.mxu0 0
        %1147 = vmatprep.subr.bf16.mxu0 0
        %1148 = vmatpush1.bf16.msra.mxu0 0
        %1149 = vmatprep.mubr.bf16.mxu0 0
        %1150 = vmatmul.mubr.bf16.gmra.mrb[0].mxu0 %v1070
        %v1151 = vpop.f32.mrb[0].mxu0
        %v1152 = vadd.f32 0.0, %v1151
        %v1153 = vpop.f32.mrb[0].mxu0
        %v1154 = vpop.f32.mrb[0].mxu0
        %v1155 = vadd.f32 0.0, %v1154
        %v1156 = vpop.f32.mrb[0].mxu0
        %1157 = vmatprep.mubr.bf16.mxu0 0
        %1158 = vmatmul.mubr.bf16.gmra.mrb[0].mxu0 %v1073
        %v1159 = vpop.f32.mrb[0].mxu0
        %v1160 = vadd.f32 0.0, %v1159
        %v1161 = vpop.f32.mrb[0].mxu0
        %v1162 = vpop.f32.mrb[0].mxu0
        %v1163 = vadd.f32 0.0, %v1162
        %v1164 = vpop.f32.mrb[0].mxu0
        %1165 = vmatprep.mubr.bf16.mxu0 0
        %1166 = vmatmul.mubr.bf16.gmra.mrb[0].mxu0 %v1076
        %v1167 = vpop.f32.mrb[0].mxu0
        %v1168 = vadd.f32 0.0, %v1167
        %v1169 = vpop.f32.mrb[0].mxu0
        %v1170 = vpop.f32.mrb[0].mxu0
        %v1171 = vadd.f32 0.0, %v1170
        %v1172 = vpop.f32.mrb[0].mxu0
        %1173 = vmatprep.mubr.bf16.mxu0 0
        %1174 = vmatmul.mubr.bf16.gmra.mrb[0].mxu0 %v1079
        %v1175 = vpop.f32.mrb[0].mxu0
        %v1176 = vadd.f32 0.0, %v1175
        %v1177 = vpop.f32.mrb[0].mxu0
        %v1178 = vpop.f32.mrb[0].mxu0
        %v1179 = vadd.f32 0.0, %v1178
        %v1180 = vpop.f32.mrb[0].mxu0
        %1181 = vmatprep.mubr.bf16.mxu0 0
        %1182 = vmatmul.mubr.bf16.gmra.mrb[0].mxu0 %v1082
        %v1183 = vpop.f32.mrb[0].mxu0
        %v1184 = vadd.f32 0.0, %v1183
        %v1185 = vpop.f32.mrb[0].mxu0
        %v1186 = vpop.f32.mrb[0].mxu0
        %v1187 = vadd.f32 0.0, %v1186
        %v1188 = vpop.f32.mrb[0].mxu0
        %1189 = vmatprep.mubr.bf16.mxu0 0
        %1190 = vmatmul.mubr.bf16.gmra.mrb[0].mxu0 %v1085
        %v1191 = vpop.f32.mrb[0].mxu0
        %v1192 = vadd.f32 0.0, %v1191
        %v1193 = vpop.f32.mrb[0].mxu0
        %v1194 = vpop.f32.mrb[0].mxu0
        %v1195 = vadd.f32 0.0, %v1194
        %v1196 = vpop.f32.mrb[0].mxu0
        %1197 = vmatprep.mubr.bf16.mxu0 0
        %1198 = vmatmul.mubr.bf16.gmra.mrb[0].mxu0 %v1088
        %v1199 = vpop.f32.mrb[0].mxu0
        %v1200 = vadd.f32 0.0, %v1199
        %v1201 = vpop.f32.mrb[0].mxu0
        %v1202 = vpop.f32.mrb[0].mxu0
        %v1203 = vadd.f32 0.0, %v1202
        %v1204 = vpop.f32.mrb[0].mxu0
        %1205 = vmatprep.mubr.bf16.mxu0 0
        %1206 = vmatmul.mubr.bf16.gmra.mrb[0].mxu0 %v1091
        %v1207 = vpop.f32.mrb[0].mxu0
        %v1208 = vadd.f32 0.0, %v1207
        %v1209 = vpop.f32.mrb[0].mxu0
        %v1210 = vpop.f32.mrb[0].mxu0
        %v1211 = vadd.f32 0.0, %v1210
        %v1212 = vpop.f32.mrb[0].mxu0
        %1213 = vmatprep.mubr.bf16.mxu0 0
        %1214 = vmatmul.mubr.bf16.gmra.mrb[0].mxu0 %v1094
        %v1215 = vpop.f32.mrb[0].mxu0
        %v1216 = vadd.f32 0.0, %v1215
        %v1217 = vpop.f32.mrb[0].mxu0
        %v1218 = vpop.f32.mrb[0].mxu0
        %v1219 = vadd.f32 0.0, %v1218
        %v1220 = vpop.f32.mrb[0].mxu0
        %1221 = vmatprep.mubr.bf16.mxu0 0
        %1222 = vmatmul.mubr.bf16.gmra.mrb[0].mxu0 %v1097
        %v1223 = vpop.f32.mrb[0].mxu0
        %v1224 = vadd.f32 0.0, %v1223
        %v1225 = vpop.f32.mrb[0].mxu0
        %v1226 = vpop.f32.mrb[0].mxu0
        %v1227 = vadd.f32 0.0, %v1226
        %v1228 = vpop.f32.mrb[0].mxu0
        %1229 = vmatprep.mubr.bf16.mxu0 0
        %1230 = vmatmul.mubr.bf16.gmra.mrb[0].mxu0 %v1100
        %v1231 = vpop.f32.mrb[0].mxu0
        %v1232 = vadd.f32 0.0, %v1231
        %v1233 = vpop.f32.mrb[0].mxu0
        %v1234 = vpop.f32.mrb[0].mxu0
        %v1235 = vadd.f32 0.0, %v1234
        %v1236 = vpop.f32.mrb[0].mxu0
        %1237 = vmatprep.mubr.bf16.mxu0 0
        %1238 = vmatmul.mubr.bf16.gmra.mrb[0].mxu0 %v1103
        %v1239 = vpop.f32.mrb[0].mxu0
        %v1240 = vadd.f32 0.0, %v1239
        %v1241 = vpop.f32.mrb[0].mxu0
        %v1242 = vpop.f32.mrb[0].mxu0
        %v1243 = vadd.f32 0.0, %v1242
        %v1244 = vpop.f32.mrb[0].mxu0
        %1245 = vmatprep.mubr.bf16.mxu0 0
        %1246 = vmatmul.mubr.bf16.gmra.mrb[0].mxu0 %v1106
        %v1247 = vpop.f32.mrb[0].mxu0
        %v1248 = vadd.f32 0.0, %v1247
        %v1249 = vpop.f32.mrb[0].mxu0
        %v1250 = vpop.f32.mrb[0].mxu0
        %v1251 = vadd.f32 0.0, %v1250
        %v1252 = vpop.f32.mrb[0].mxu0
        %1253 = vmatprep.mubr.bf16.mxu0 0
        %1254 = vmatmul.mubr.bf16.gmra.mrb[0].mxu0 %v1109
        %v1255 = vpop.f32.mrb[0].mxu0
        %v1256 = vadd.f32 0.0, %v1255
        %v1257 = vpop.f32.mrb[0].mxu0
        %v1258 = vpop.f32.mrb[0].mxu0
        %v1259 = vadd.f32 0.0, %v1258
        %v1260 = vpop.f32.mrb[0].mxu0
        %1261 = vmatprep.mubr.bf16.mxu0 0
        %1262 = vmatmul.mubr.bf16.gmra.mrb[0].mxu0 %v1112
        %v1263 = vpop.f32.mrb[0].mxu0
        %v1264 = vadd.f32 0.0, %v1263
        %v1265 = vpop.f32.mrb[0].mxu0
        %v1266 = vpop.f32.mrb[0].mxu0
        %v1267 = vadd.f32 0.0, %v1266
        %v1268 = vpop.f32.mrb[0].mxu0
        %1269 = vmatprep.mubr.bf16.mxu0 0
        %1270 = vmatmul.mubr.bf16.gmra.mrb[0].mxu0 %v1115
        %v1271 = vpop.f32.mrb[0].mxu0
        %v1272 = vadd.f32 0.0, %v1271
        %v1273 = vpop.f32.mrb[0].mxu0
        %v1274 = vpop.f32.mrb[0].mxu0
        %v1275 = vadd.f32 0.0, %v1274
        %v1276 = vpop.f32.mrb[0].mxu0
        %1277 = vdwg.mxu0
        %v1278 = vlaneseq
        %v1279 = vshrl.u32 %v1278, 7
        %v1280 = vsub.s32 2, %v1279
        %v1281 = vrot.slane %v338, %v1280
        %v1282 = vadd.f32 %v1281, %v1152
        %v1283 = vadd.f32 %v1281, %v1155
        %v1284 = vadd.f32 %v1281, %v1160
        %v1285 = vadd.f32 %v1281, %v1163
        %v1286 = vadd.f32 %v1281, %v1168
        %v1287 = vadd.f32 %v1281, %v1171
        %v1288 = vadd.f32 %v1281, %v1176
        %v1289 = vadd.f32 %v1281, %v1179
        %v1290 = vadd.f32 %v1281, %v1184
        %v1291 = vadd.f32 %v1281, %v1187
        %v1292 = vadd.f32 %v1281, %v1192
        %v1293 = vadd.f32 %v1281, %v1195
        %v1294 = vadd.f32 %v1281, %v1200
        %v1295 = vadd.f32 %v1281, %v1203
        %v1296 = vadd.f32 %v1281, %v1208
        %v1297 = vadd.f32 %v1281, %v1211
        %v1298 = vadd.f32 %v1281, %v1216
        %v1299 = vadd.f32 %v1281, %v1219
        %v1300 = vadd.f32 %v1281, %v1224
        %v1301 = vadd.f32 %v1281, %v1227
        %v1302 = vadd.f32 %v1281, %v1232
        %v1303 = vadd.f32 %v1281, %v1235
        %v1304 = vadd.f32 %v1281, %v1240
        %v1305 = vadd.f32 %v1281, %v1243
        %v1306 = vadd.f32 %v1281, %v1248
        %v1307 = vadd.f32 %v1281, %v1251
        %v1308 = vadd.f32 %v1281, %v1256
        %v1309 = vadd.f32 %v1281, %v1259
        %v1310 = vadd.f32 %v1281, %v1264
        %v1311 = vadd.f32 %v1281, %v1267
        %v1312 = vadd.f32 %v1281, %v1272
        %v1313 = vadd.f32 %v1281, %v1275
        %v1314 = vld [vmem:[#allocation2 + $0xd0] sm:$0xf]
        %v1315 = vld [vmem:[#allocation2 + $0xd4] sm:$0xf]
        %v1316 = vld [vmem:[#allocation2 + $0xd8] sm:$0xf]
        %v1317 = vld [vmem:[#allocation2 + $0xdc] sm:$0xf]
        %v1318 = vld [vmem:[#allocation2 + $0xe0] sm:$0xf]
        %v1319 = vld [vmem:[#allocation2 + $0xe4] sm:$0xf]
        %v1320 = vld [vmem:[#allocation2 + $0xe8] sm:$0xf]
        %v1321 = vld [vmem:[#allocation2 + $0xec] sm:$0xf]
        %v1322 = vld [vmem:[#allocation2 + $0xf0] sm:$0xf]
        %v1323 = vld [vmem:[#allocation2 + $0xf4] sm:$0xf]
        %v1324 = vld [vmem:[#allocation2 + $0xf8] sm:$0xf]
        %v1325 = vld [vmem:[#allocation2 + $0xfc] sm:$0xf]
        %v1326 = vld [vmem:[#allocation2 + $0x100] sm:$0xf]
        %v1327 = vld [vmem:[#allocation2 + $0x104] sm:$0xf]
        %v1328 = vld [vmem:[#allocation2 + $0x108] sm:$0xf]
        %v1329 = vld [vmem:[#allocation2 + $0x10c] sm:$0xf]
        %v1330 = vld [vmem:[#allocation2 + $0x200] sm:$0xf]
        %v1331 = vld [vmem:[#allocation2 + $0x204] sm:$0xf]
        %v1332 = vld [vmem:[#allocation2 + $0x208] sm:$0xf]
        %v1333 = vld [vmem:[#allocation2 + $0x20c] sm:$0xf]
        %v1334 = vld [vmem:[#allocation2 + $0x210] sm:$0xf]
        %v1335 = vld [vmem:[#allocation2 + $0x214] sm:$0xf]
        %v1336 = vld [vmem:[#allocation2 + $0x218] sm:$0xf]
        %v1337 = vld [vmem:[#allocation2 + $0x21c] sm:$0xf]
        %v1338 = vld [vmem:[#allocation2 + $0x220] sm:$0xf]
        %v1339 = vld [vmem:[#allocation2 + $0x224] sm:$0xf]
        %v1340 = vld [vmem:[#allocation2 + $0x228] sm:$0xf]
        %v1341 = vld [vmem:[#allocation2 + $0x22c] sm:$0xf]
        %v1342 = vld [vmem:[#allocation2 + $0x230] sm:$0xf]
        %v1343 = vld [vmem:[#allocation2 + $0x234] sm:$0xf]
        %v1344 = vld [vmem:[#allocation2 + $0x238] sm:$0xf]
        %v1345 = vld [vmem:[#allocation2 + $0x23c] sm:$0xf]
        %v1346 = vld [vmem:[#allocation2 + $0x240] sm:$0xf]
        %v1347 = vld [vmem:[#allocation2 + $0x244] sm:$0xf]
        %v1348 = vld [vmem:[#allocation2 + $0x248] sm:$0xf]
        %v1349 = vld [vmem:[#allocation2 + $0x24c] sm:$0xf]
        %v1350 = vld [vmem:[#allocation2 + $0x250] sm:$0xf]
        %v1351 = vld [vmem:[#allocation2 + $0x254] sm:$0xf]
        %v1352 = vld [vmem:[#allocation2 + $0x258] sm:$0xf]
        %v1353 = vld [vmem:[#allocation2 + $0x25c] sm:$0xf]
        %v1354 = vld [vmem:[#allocation2 + $0x260] sm:$0xf]
        %v1355 = vld [vmem:[#allocation2 + $0x264] sm:$0xf]
        %v1356 = vld [vmem:[#allocation2 + $0x268] sm:$0xf]
        %v1357 = vld [vmem:[#allocation2 + $0x26c] sm:$0xf]
        %v1358 = vld [vmem:[#allocation2 + $0x270] sm:$0xf]
        %v1359 = vld [vmem:[#allocation2 + $0x274] sm:$0xf]
        %v1360 = vld [vmem:[#allocation2 + $0x278] sm:$0xf]
        %v1361 = vld [vmem:[#allocation2 + $0x27c] sm:$0xf]
        %v1378 = vunpack.c.l.b16 %v1314
        %v1379 = vunpack.c.l.b16 %v1315
        %v1380 = vunpack.c.l.b16 %v1316
        %v1381 = vunpack.c.l.b16 %v1317
        %v1382 = vunpack.c.l.b16 %v1318
        %v1383 = vunpack.c.l.b16 %v1319
        %v1384 = vunpack.c.l.b16 %v1320
        %v1385 = vunpack.c.l.b16 %v1321
        %v1386 = vunpack.c.l.b16 %v1322
        %v1387 = vunpack.c.l.b16 %v1323
        %v1388 = vunpack.c.l.b16 %v1324
        %v1389 = vunpack.c.l.b16 %v1325
        %v1390 = vunpack.c.l.b16 %v1326
        %v1391 = vunpack.c.l.b16 %v1327
        %v1392 = vunpack.c.l.b16 %v1328
        %v1393 = vunpack.c.l.b16 %v1329
        %v1394 = vpack.c.b16 %v1379, %v1378
        %v1395 = vpack.c.b16 %v1381, %v1380
        %v1396 = vpack.c.b16 %v1383, %v1382
        %v1397 = vpack.c.b16 %v1385, %v1384
        %v1398 = vpack.c.b16 %v1387, %v1386
        %v1399 = vpack.c.b16 %v1389, %v1388
        %v1400 = vpack.c.b16 %v1391, %v1390
        %v1401 = vpack.c.b16 %v1393, %v1392
        %1410 = vmatprep.subr.bf16.mxu0 0
        %1411 = vmatpush1.bf16.msra.mxu0 %v1394
        %1412 = vmatprep.subr.bf16.mxu0 0
        %1413 = vmatpush1.bf16.msra.mxu0 %v1395
        %1414 = vmatprep.subr.bf16.mxu0 0
        %1415 = vmatpush1.bf16.msra.mxu0 %v1396
        %1416 = vmatprep.subr.bf16.mxu0 0
        %1417 = vmatpush1.bf16.msra.mxu0 %v1397
        %1418 = vmatprep.subr.bf16.mxu0 0
        %1419 = vmatpush1.bf16.msra.mxu0 %v1398
        %1420 = vmatprep.subr.bf16.mxu0 0
        %1421 = vmatpush1.bf16.msra.mxu0 %v1399
        %1422 = vmatprep.subr.bf16.mxu0 0
        %1423 = vmatpush1.bf16.msra.mxu0 %v1400
        %1424 = vmatprep.subr.bf16.mxu0 0
        %1425 = vmatpush1.bf16.msra.mxu0 %v1401
        %1426 = vmatprep.subr.bf16.mxu0 0
        %1427 = vmatpush1.bf16.msra.mxu0 0
        %1428 = vmatprep.subr.bf16.mxu0 0
        %1429 = vmatpush1.bf16.msra.mxu0 0
        %1430 = vmatprep.subr.bf16.mxu0 0
        %1431 = vmatpush1.bf16.msra.mxu0 0
        %1432 = vmatprep.subr.bf16.mxu0 0
        %1433 = vmatpush1.bf16.msra.mxu0 0
        %1434 = vmatprep.subr.bf16.mxu0 0
        %1435 = vmatpush1.bf16.msra.mxu0 0
        %1436 = vmatprep.subr.bf16.mxu0 0
        %1437 = vmatpush1.bf16.msra.mxu0 0
        %1438 = vmatprep.subr.bf16.mxu0 0
        %1439 = vmatpush1.bf16.msra.mxu0 0
        %1440 = vmatprep.subr.bf16.mxu0 0
        %1441 = vmatpush1.bf16.msra.mxu0 0
        %1442 = vmatprep.mubr.bf16.mxu0 0
        %1443 = vmatmul.mubr.bf16.gmra.mrb[0].mxu0 %v820
        %v1444 = vpop.f32.mrb[0].mxu0
        %v1445 = vadd.f32 0.0, %v1444
        %v1446 = vpop.f32.mrb[0].mxu0
        %v1447 = vpop.f32.mrb[0].mxu0
        %v1448 = vadd.f32 0.0, %v1447
        %v1449 = vpop.f32.mrb[0].mxu0
        %1450 = vmatprep.mubr.bf16.mxu0 0
        %1451 = vmatmul.mubr.bf16.gmra.mrb[0].mxu0 %v821
        %v1452 = vpop.f32.mrb[0].mxu0
        %v1453 = vadd.f32 0.0, %v1452
        %v1454 = vpop.f32.mrb[0].mxu0
        %v1455 = vpop.f32.mrb[0].mxu0
        %v1456 = vadd.f32 0.0, %v1455
        %v1457 = vpop.f32.mrb[0].mxu0
        %1458 = vmatprep.mubr.bf16.mxu0 0
        %1459 = vmatmul.mubr.bf16.gmra.mrb[0].mxu0 %v822
        %v1460 = vpop.f32.mrb[0].mxu0
        %v1461 = vadd.f32 0.0, %v1460
        %v1462 = vpop.f32.mrb[0].mxu0
        %v1463 = vpop.f32.mrb[0].mxu0
        %v1464 = vadd.f32 0.0, %v1463
        %v1465 = vpop.f32.mrb[0].mxu0
        %1466 = vmatprep.mubr.bf16.mxu0 0
        %1467 = vmatmul.mubr.bf16.gmra.mrb[0].mxu0 %v823
        %v1468 = vpop.f32.mrb[0].mxu0
        %v1469 = vadd.f32 0.0, %v1468
        %v1470 = vpop.f32.mrb[0].mxu0
        %v1471 = vpop.f32.mrb[0].mxu0
        %v1472 = vadd.f32 0.0, %v1471
        %v1473 = vpop.f32.mrb[0].mxu0
        %1474 = vdwg.mxu0
        %v1475 = vpack.c.bf16 %v1448, %v1445
        %v1476 = vpack.c.bf16 %v1456, %v1453
        %v1477 = vpack.c.bf16 %v1464, %v1461
        %v1478 = vpack.c.bf16 %v1472, %v1469
        %v1511 = vunpack.c.l.b16 %v1330
        %v1512 = vunpack.c.l.b16 %v1331
        %v1513 = vunpack.c.l.b16 %v1332
        %v1514 = vunpack.c.l.b16 %v1333
        %v1515 = vunpack.c.l.b16 %v1334
        %v1516 = vunpack.c.l.b16 %v1335
        %v1517 = vunpack.c.l.b16 %v1336
        %v1518 = vunpack.c.l.b16 %v1337
        %v1519 = vunpack.c.l.b16 %v1338
        %v1520 = vunpack.c.l.b16 %v1339
        %v1521 = vunpack.c.l.b16 %v1340
        %v1522 = vunpack.c.l.b16 %v1341
        %v1523 = vunpack.c.l.b16 %v1342
        %v1524 = vunpack.c.l.b16 %v1343
        %v1525 = vunpack.c.l.b16 %v1344
        %v1526 = vunpack.c.l.b16 %v1345
        %v1527 = vunpack.c.l.b16 %v1346
        %v1528 = vunpack.c.l.b16 %v1347
        %v1529 = vunpack.c.l.b16 %v1348
        %v1530 = vunpack.c.l.b16 %v1349
        %v1531 = vunpack.c.l.b16 %v1350
        %v1532 = vunpack.c.l.b16 %v1351
        %v1533 = vunpack.c.l.b16 %v1352
        %v1534 = vunpack.c.l.b16 %v1353
        %v1535 = vunpack.c.l.b16 %v1354
        %v1536 = vunpack.c.l.b16 %v1355
        %v1537 = vunpack.c.l.b16 %v1356
        %v1538 = vunpack.c.l.b16 %v1357
        %v1539 = vunpack.c.l.b16 %v1358
        %v1540 = vunpack.c.l.b16 %v1359
        %v1541 = vunpack.c.l.b16 %v1360
        %v1542 = vunpack.c.l.b16 %v1361
        %v1543 = vpack.c.b16 %v1512, %v1511
        %v1544 = vpack.c.b16 %v1514, %v1513
        %v1545 = vpack.c.b16 %v1516, %v1515
        %v1546 = vpack.c.b16 %v1518, %v1517
        %v1547 = vpack.c.b16 %v1520, %v1519
        %v1548 = vpack.c.b16 %v1522, %v1521
        %v1549 = vpack.c.b16 %v1524, %v1523
        %v1550 = vpack.c.b16 %v1526, %v1525
        %v1551 = vpack.c.b16 %v1528, %v1527
        %v1552 = vpack.c.b16 %v1530, %v1529
        %v1553 = vpack.c.b16 %v1532, %v1531
        %v1554 = vpack.c.b16 %v1534, %v1533
        %v1555 = vpack.c.b16 %v1536, %v1535
        %v1556 = vpack.c.b16 %v1538, %v1537
        %v1557 = vpack.c.b16 %v1540, %v1539
        %v1558 = vpack.c.b16 %v1542, %v1541
        %v1560 = vsel %vm395, %v1543, 0
        %v1563 = vsel %vm395, %v1544, 0
        %v1566 = vsel %vm395, %v1545, 0
        %v1569 = vsel %vm395, %v1546, 0
        %v1572 = vsel %vm395, %v1547, 0
        %v1575 = vsel %vm395, %v1548, 0
        %v1578 = vsel %vm395, %v1549, 0
        %v1581 = vsel %vm395, %v1550, 0
        %v1584 = vsel %vm395, %v1551, 0
        %v1587 = vsel %vm395, %v1552, 0
        %v1590 = vsel %vm395, %v1553, 0
        %v1593 = vsel %vm395, %v1554, 0
        %v1596 = vsel %vm395, %v1555, 0
        %v1599 = vsel %vm395, %v1556, 0
        %v1602 = vsel %vm395, %v1557, 0
        %v1605 = vsel %vm395, %v1558, 0
        %1607 = vmatprep.subr.bf16.mxu0 0
        %1608 = vmatpush1.bf16.msra.mxu0 %v1475
        %1609 = vmatprep.subr.bf16.mxu0 0
        %1610 = vmatpush1.bf16.msra.mxu0 %v1476
        %1611 = vmatprep.subr.bf16.mxu0 0
        %1612 = vmatpush1.bf16.msra.mxu0 %v1477
        %1613 = vmatprep.subr.bf16.mxu0 0
        %1614 = vmatpush1.bf16.msra.mxu0 %v1478
        %1615 = vmatprep.subr.bf16.mxu0 0
        %1616 = vmatpush1.bf16.msra.mxu0 0
        %1617 = vmatprep.subr.bf16.mxu0 0
        %1618 = vmatpush1.bf16.msra.mxu0 0
        %1619 = vmatprep.subr.bf16.mxu0 0
        %1620 = vmatpush1.bf16.msra.mxu0 0
        %1621 = vmatprep.subr.bf16.mxu0 0
        %1622 = vmatpush1.bf16.msra.mxu0 0
        %1623 = vmatprep.subr.bf16.mxu0 0
        %1624 = vmatpush1.bf16.msra.mxu0 0
        %1625 = vmatprep.subr.bf16.mxu0 0
        %1626 = vmatpush1.bf16.msra.mxu0 0
        %1627 = vmatprep.subr.bf16.mxu0 0
        %1628 = vmatpush1.bf16.msra.mxu0 0
        %1629 = vmatprep.subr.bf16.mxu0 0
        %1630 = vmatpush1.bf16.msra.mxu0 0
        %1631 = vmatprep.subr.bf16.mxu0 0
        %1632 = vmatpush1.bf16.msra.mxu0 0
        %1633 = vmatprep.subr.bf16.mxu0 0
        %1634 = vmatpush1.bf16.msra.mxu0 0
        %1635 = vmatprep.subr.bf16.mxu0 0
        %1636 = vmatpush1.bf16.msra.mxu0 0
        %1637 = vmatprep.subr.bf16.mxu0 0
        %1638 = vmatpush1.bf16.msra.mxu0 0
        %1639 = vmatprep.mubr.bf16.mxu0 0
        %1640 = vmatmul.mubr.bf16.gmra.mrb[0].mxu0 %v1560
        %v1641 = vpop.f32.mrb[0].mxu0
        %v1642 = vadd.f32 0.0, %v1641
        %v1643 = vpop.f32.mrb[0].mxu0
        %v1644 = vpop.f32.mrb[0].mxu0
        %v1645 = vadd.f32 0.0, %v1644
        %v1646 = vpop.f32.mrb[0].mxu0
        %1647 = vmatprep.mubr.bf16.mxu0 0
        %1648 = vmatmul.mubr.bf16.gmra.mrb[0].mxu0 %v1563
        %v1649 = vpop.f32.mrb[0].mxu0
        %v1650 = vadd.f32 0.0, %v1649
        %v1651 = vpop.f32.mrb[0].mxu0
        %v1652 = vpop.f32.mrb[0].mxu0
        %v1653 = vadd.f32 0.0, %v1652
        %v1654 = vpop.f32.mrb[0].mxu0
        %1655 = vmatprep.mubr.bf16.mxu0 0
        %1656 = vmatmul.mubr.bf16.gmra.mrb[0].mxu0 %v1566
        %v1657 = vpop.f32.mrb[0].mxu0
        %v1658 = vadd.f32 0.0, %v1657
        %v1659 = vpop.f32.mrb[0].mxu0
        %v1660 = vpop.f32.mrb[0].mxu0
        %v1661 = vadd.f32 0.0, %v1660
        %v1662 = vpop.f32.mrb[0].mxu0
        %1663 = vmatprep.mubr.bf16.mxu0 0
        %1664 = vmatmul.mubr.bf16.gmra.mrb[0].mxu0 %v1569
        %v1665 = vpop.f32.mrb[0].mxu0
        %v1666 = vadd.f32 0.0, %v1665
        %v1667 = vpop.f32.mrb[0].mxu0
        %v1668 = vpop.f32.mrb[0].mxu0
        %v1669 = vadd.f32 0.0, %v1668
        %v1670 = vpop.f32.mrb[0].mxu0
        %1671 = vmatprep.mubr.bf16.mxu0 0
        %1672 = vmatmul.mubr.bf16.gmra.mrb[0].mxu0 %v1572
        %v1673 = vpop.f32.mrb[0].mxu0
        %v1674 = vadd.f32 0.0, %v1673
        %v1675 = vpop.f32.mrb[0].mxu0
        %v1676 = vpop.f32.mrb[0].mxu0
        %v1677 = vadd.f32 0.0, %v1676
        %v1678 = vpop.f32.mrb[0].mxu0
        %1679 = vmatprep.mubr.bf16.mxu0 0
        %1680 = vmatmul.mubr.bf16.gmra.mrb[0].mxu0 %v1575
        %v1681 = vpop.f32.mrb[0].mxu0
        %v1682 = vadd.f32 0.0, %v1681
        %v1683 = vpop.f32.mrb[0].mxu0
        %v1684 = vpop.f32.mrb[0].mxu0
        %v1685 = vadd.f32 0.0, %v1684
        %v1686 = vpop.f32.mrb[0].mxu0
        %1687 = vmatprep.mubr.bf16.mxu0 0
        %1688 = vmatmul.mubr.bf16.gmra.mrb[0].mxu0 %v1578
        %v1689 = vpop.f32.mrb[0].mxu0
        %v1690 = vadd.f32 0.0, %v1689
        %v1691 = vpop.f32.mrb[0].mxu0
        %v1692 = vpop.f32.mrb[0].mxu0
        %v1693 = vadd.f32 0.0, %v1692
        %v1694 = vpop.f32.mrb[0].mxu0
        %1695 = vmatprep.mubr.bf16.mxu0 0
        %1696 = vmatmul.mubr.bf16.gmra.mrb[0].mxu0 %v1581
        %v1697 = vpop.f32.mrb[0].mxu0
        %v1698 = vadd.f32 0.0, %v1697
        %v1699 = vpop.f32.mrb[0].mxu0
        %v1700 = vpop.f32.mrb[0].mxu0
        %v1701 = vadd.f32 0.0, %v1700
        %v1702 = vpop.f32.mrb[0].mxu0
        %1703 = vmatprep.mubr.bf16.mxu0 0
        %1704 = vmatmul.mubr.bf16.gmra.mrb[0].mxu0 %v1584
        %v1705 = vpop.f32.mrb[0].mxu0
        %v1706 = vadd.f32 0.0, %v1705
        %v1707 = vpop.f32.mrb[0].mxu0
        %v1708 = vpop.f32.mrb[0].mxu0
        %v1709 = vadd.f32 0.0, %v1708
        %v1710 = vpop.f32.mrb[0].mxu0
        %1711 = vmatprep.mubr.bf16.mxu0 0
        %1712 = vmatmul.mubr.bf16.gmra.mrb[0].mxu0 %v1587
        %v1713 = vpop.f32.mrb[0].mxu0
        %v1714 = vadd.f32 0.0, %v1713
        %v1715 = vpop.f32.mrb[0].mxu0
        %v1716 = vpop.f32.mrb[0].mxu0
        %v1717 = vadd.f32 0.0, %v1716
        %v1718 = vpop.f32.mrb[0].mxu0
        %1719 = vmatprep.mubr.bf16.mxu0 0
        %1720 = vmatmul.mubr.bf16.gmra.mrb[0].mxu0 %v1590
        %v1721 = vpop.f32.mrb[0].mxu0
        %v1722 = vadd.f32 0.0, %v1721
        %v1723 = vpop.f32.mrb[0].mxu0
        %v1724 = vpop.f32.mrb[0].mxu0
        %v1725 = vadd.f32 0.0, %v1724
        %v1726 = vpop.f32.mrb[0].mxu0
        %1727 = vmatprep.mubr.bf16.mxu0 0
        %1728 = vmatmul.mubr.bf16.gmra.mrb[0].mxu0 %v1593
        %v1729 = vpop.f32.mrb[0].mxu0
        %v1730 = vadd.f32 0.0, %v1729
        %v1731 = vpop.f32.mrb[0].mxu0
        %v1732 = vpop.f32.mrb[0].mxu0
        %v1733 = vadd.f32 0.0, %v1732
        %v1734 = vpop.f32.mrb[0].mxu0
        %1735 = vmatprep.mubr.bf16.mxu0 0
        %1736 = vmatmul.mubr.bf16.gmra.mrb[0].mxu0 %v1596
        %v1737 = vpop.f32.mrb[0].mxu0
        %v1738 = vadd.f32 0.0, %v1737
        %v1739 = vpop.f32.mrb[0].mxu0
        %v1740 = vpop.f32.mrb[0].mxu0
        %v1741 = vadd.f32 0.0, %v1740
        %v1742 = vpop.f32.mrb[0].mxu0
        %1743 = vmatprep.mubr.bf16.mxu0 0
        %1744 = vmatmul.mubr.bf16.gmra.mrb[0].mxu0 %v1599
        %v1745 = vpop.f32.mrb[0].mxu0
        %v1746 = vadd.f32 0.0, %v1745
        %v1747 = vpop.f32.mrb[0].mxu0
        %v1748 = vpop.f32.mrb[0].mxu0
        %v1749 = vadd.f32 0.0, %v1748
        %v1750 = vpop.f32.mrb[0].mxu0
        %1751 = vmatprep.mubr.bf16.mxu0 0
        %1752 = vmatmul.mubr.bf16.gmra.mrb[0].mxu0 %v1602
        %v1753 = vpop.f32.mrb[0].mxu0
        %v1754 = vadd.f32 0.0, %v1753
        %v1755 = vpop.f32.mrb[0].mxu0
        %v1756 = vpop.f32.mrb[0].mxu0
        %v1757 = vadd.f32 0.0, %v1756
        %v1758 = vpop.f32.mrb[0].mxu0
        %1759 = vmatprep.mubr.bf16.mxu0 0
        %1760 = vmatmul.mubr.bf16.gmra.mrb[0].mxu0 %v1605
        %v1761 = vpop.f32.mrb[0].mxu0
        %v1762 = vadd.f32 0.0, %v1761
        %v1763 = vpop.f32.mrb[0].mxu0
        %v1764 = vpop.f32.mrb[0].mxu0
        %v1765 = vadd.f32 0.0, %v1764
        %v1766 = vpop.f32.mrb[0].mxu0
        %1767 = vdwg.mxu0
        %v1768 = vadd.f32 %v1282, %v1642
        %v1769 = vadd.f32 %v1283, %v1645
        %v1770 = vadd.f32 %v1284, %v1650
        %v1771 = vadd.f32 %v1285, %v1653
        %v1772 = vadd.f32 %v1286, %v1658
        %v1773 = vadd.f32 %v1287, %v1661
        %v1774 = vadd.f32 %v1288, %v1666
        %v1775 = vadd.f32 %v1289, %v1669
        %v1776 = vadd.f32 %v1290, %v1674
        %v1777 = vadd.f32 %v1291, %v1677
        %v1778 = vadd.f32 %v1292, %v1682
        %v1779 = vadd.f32 %v1293, %v1685
        %v1780 = vadd.f32 %v1294, %v1690
        %v1781 = vadd.f32 %v1295, %v1693
        %v1782 = vadd.f32 %v1296, %v1698
        %v1783 = vadd.f32 %v1297, %v1701
        %v1784 = vadd.f32 %v1298, %v1706
        %v1785 = vadd.f32 %v1299, %v1709
        %v1786 = vadd.f32 %v1300, %v1714
        %v1787 = vadd.f32 %v1301, %v1717
        %v1788 = vadd.f32 %v1302, %v1722
        %v1789 = vadd.f32 %v1303, %v1725
        %v1790 = vadd.f32 %v1304, %v1730
        %v1791 = vadd.f32 %v1305, %v1733
        %v1792 = vadd.f32 %v1306, %v1738
        %v1793 = vadd.f32 %v1307, %v1741
        %v1794 = vadd.f32 %v1308, %v1746
        %v1795 = vadd.f32 %v1309, %v1749
        %v1796 = vadd.f32 %v1310, %v1754
        %v1797 = vadd.f32 %v1311, %v1757
        %v1798 = vadd.f32 %v1312, %v1762
        %v1799 = vadd.f32 %v1313, %v1765
        %v1800 = vld [vmem:[#allocation2 + $0x110] sm:$0xf]
        %v1801 = vld [vmem:[#allocation2 + $0x114] sm:$0xf]
        %v1802 = vld [vmem:[#allocation2 + $0x118] sm:$0xf]
        %v1803 = vld [vmem:[#allocation2 + $0x11c] sm:$0xf]
        %v1804 = vld [vmem:[#allocation2 + $0x120] sm:$0xf]
        %v1805 = vld [vmem:[#allocation2 + $0x124] sm:$0xf]
        %v1806 = vld [vmem:[#allocation2 + $0x128] sm:$0xf]
        %v1807 = vld [vmem:[#allocation2 + $0x12c] sm:$0xf]
        %v1808 = vld [vmem:[#allocation2 + $0x130] sm:$0xf]
        %v1809 = vld [vmem:[#allocation2 + $0x134] sm:$0xf]
        %v1810 = vld [vmem:[#allocation2 + $0x138] sm:$0xf]
        %v1811 = vld [vmem:[#allocation2 + $0x13c] sm:$0xf]
        %v1812 = vld [vmem:[#allocation2 + $0x140] sm:$0xf]
        %v1813 = vld [vmem:[#allocation2 + $0x144] sm:$0xf]
        %v1814 = vld [vmem:[#allocation2 + $0x148] sm:$0xf]
        %v1815 = vld [vmem:[#allocation2 + $0x14c] sm:$0xf]
        %v1816 = vld [vmem:[#allocation2 + $0x280] sm:$0xf]
        %v1817 = vld [vmem:[#allocation2 + $0x284] sm:$0xf]
        %v1818 = vld [vmem:[#allocation2 + $0x288] sm:$0xf]
        %v1819 = vld [vmem:[#allocation2 + $0x28c] sm:$0xf]
        %v1820 = vld [vmem:[#allocation2 + $0x290] sm:$0xf]
        %v1821 = vld [vmem:[#allocation2 + $0x294] sm:$0xf]
        %v1822 = vld [vmem:[#allocation2 + $0x298] sm:$0xf]
        %v1823 = vld [vmem:[#allocation2 + $0x29c] sm:$0xf]
        %v1824 = vld [vmem:[#allocation2 + $0x2a0] sm:$0xf]
        %v1825 = vld [vmem:[#allocation2 + $0x2a4] sm:$0xf]
        %v1826 = vld [vmem:[#allocation2 + $0x2a8] sm:$0xf]
        %v1827 = vld [vmem:[#allocation2 + $0x2ac] sm:$0xf]
        %v1828 = vld [vmem:[#allocation2 + $0x2b0] sm:$0xf]
        %v1829 = vld [vmem:[#allocation2 + $0x2b4] sm:$0xf]
        %v1830 = vld [vmem:[#allocation2 + $0x2b8] sm:$0xf]
        %v1831 = vld [vmem:[#allocation2 + $0x2bc] sm:$0xf]
        %v1832 = vld [vmem:[#allocation2 + $0x2c0] sm:$0xf]
        %v1833 = vld [vmem:[#allocation2 + $0x2c4] sm:$0xf]
        %v1834 = vld [vmem:[#allocation2 + $0x2c8] sm:$0xf]
        %v1835 = vld [vmem:[#allocation2 + $0x2cc] sm:$0xf]
        %v1836 = vld [vmem:[#allocation2 + $0x2d0] sm:$0xf]
        %v1837 = vld [vmem:[#allocation2 + $0x2d4] sm:$0xf]
        %v1838 = vld [vmem:[#allocation2 + $0x2d8] sm:$0xf]
        %v1839 = vld [vmem:[#allocation2 + $0x2dc] sm:$0xf]
        %v1840 = vld [vmem:[#allocation2 + $0x2e0] sm:$0xf]
        %v1841 = vld [vmem:[#allocation2 + $0x2e4] sm:$0xf]
        %v1842 = vld [vmem:[#allocation2 + $0x2e8] sm:$0xf]
        %v1843 = vld [vmem:[#allocation2 + $0x2ec] sm:$0xf]
        %v1844 = vld [vmem:[#allocation2 + $0x2f0] sm:$0xf]
        %v1845 = vld [vmem:[#allocation2 + $0x2f4] sm:$0xf]
        %v1846 = vld [vmem:[#allocation2 + $0x2f8] sm:$0xf]
        %v1847 = vld [vmem:[#allocation2 + $0x2fc] sm:$0xf]
        %v1864 = vunpack.c.l.b16 %v1800
        %v1865 = vunpack.c.l.b16 %v1801
        %v1866 = vunpack.c.l.b16 %v1802
        %v1867 = vunpack.c.l.b16 %v1803
        %v1868 = vunpack.c.l.b16 %v1804
        %v1869 = vunpack.c.l.b16 %v1805
        %v1870 = vunpack.c.l.b16 %v1806
        %v1871 = vunpack.c.l.b16 %v1807
        %v1872 = vunpack.c.l.b16 %v1808
        %v1873 = vunpack.c.l.b16 %v1809
        %v1874 = vunpack.c.l.b16 %v1810
        %v1875 = vunpack.c.l.b16 %v1811
        %v1876 = vunpack.c.l.b16 %v1812
        %v1877 = vunpack.c.l.b16 %v1813
        %v1878 = vunpack.c.l.b16 %v1814
        %v1879 = vunpack.c.l.b16 %v1815
        %v1880 = vpack.c.b16 %v1865, %v1864
        %v1881 = vpack.c.b16 %v1867, %v1866
        %v1882 = vpack.c.b16 %v1869, %v1868
        %v1883 = vpack.c.b16 %v1871, %v1870
        %v1884 = vpack.c.b16 %v1873, %v1872
        %v1885 = vpack.c.b16 %v1875, %v1874
        %v1886 = vpack.c.b16 %v1877, %v1876
        %v1887 = vpack.c.b16 %v1879, %v1878
        %1896 = vmatprep.subr.bf16.mxu0 0
        %1897 = vmatpush1.bf16.msra.mxu0 %v1880
        %1898 = vmatprep.subr.bf16.mxu0 0
        %1899 = vmatpush1.bf16.msra.mxu0 %v1881
        %1900 = vmatprep.subr.bf16.mxu0 0
        %1901 = vmatpush1.bf16.msra.mxu0 %v1882
        %1902 = vmatprep.subr.bf16.mxu0 0
        %1903 = vmatpush1.bf16.msra.mxu0 %v1883
        %1904 = vmatprep.subr.bf16.mxu0 0
        %1905 = vmatpush1.bf16.msra.mxu0 %v1884
        %1906 = vmatprep.subr.bf16.mxu0 0
        %1907 = vmatpush1.bf16.msra.mxu0 %v1885
        %1908 = vmatprep.subr.bf16.mxu0 0
        %1909 = vmatpush1.bf16.msra.mxu0 %v1886
        %1910 = vmatprep.subr.bf16.mxu0 0
        %1911 = vmatpush1.bf16.msra.mxu0 %v1887
        %1912 = vmatprep.subr.bf16.mxu0 0
        %1913 = vmatpush1.bf16.msra.mxu0 0
        %1914 = vmatprep.subr.bf16.mxu0 0
        %1915 = vmatpush1.bf16.msra.mxu0 0
        %1916 = vmatprep.subr.bf16.mxu0 0
        %1917 = vmatpush1.bf16.msra.mxu0 0
        %1918 = vmatprep.subr.bf16.mxu0 0
        %1919 = vmatpush1.bf16.msra.mxu0 0
        %1920 = vmatprep.subr.bf16.mxu0 0
        %1921 = vmatpush1.bf16.msra.mxu0 0
        %1922 = vmatprep.subr.bf16.mxu0 0
        %1923 = vmatpush1.bf16.msra.mxu0 0
        %1924 = vmatprep.subr.bf16.mxu0 0
        %1925 = vmatpush1.bf16.msra.mxu0 0
        %1926 = vmatprep.subr.bf16.mxu0 0
        %1927 = vmatpush1.bf16.msra.mxu0 0
        %1928 = vmatprep.mubr.bf16.mxu0 0
        %1929 = vmatmul.mubr.bf16.gmra.mrb[0].mxu0 %v820
        %v1930 = vpop.f32.mrb[0].mxu0
        %v1931 = vadd.f32 0.0, %v1930
        %v1932 = vpop.f32.mrb[0].mxu0
        %v1933 = vpop.f32.mrb[0].mxu0
        %v1934 = vadd.f32 0.0, %v1933
        %v1935 = vpop.f32.mrb[0].mxu0
        %1936 = vmatprep.mubr.bf16.mxu0 0
        %1937 = vmatmul.mubr.bf16.gmra.mrb[0].mxu0 %v821
        %v1938 = vpop.f32.mrb[0].mxu0
        %v1939 = vadd.f32 0.0, %v1938
        %v1940 = vpop.f32.mrb[0].mxu0
        %v1941 = vpop.f32.mrb[0].mxu0
        %v1942 = vadd.f32 0.0, %v1941
        %v1943 = vpop.f32.mrb[0].mxu0
        %1944 = vmatprep.mubr.bf16.mxu0 0
        %1945 = vmatmul.mubr.bf16.gmra.mrb[0].mxu0 %v822
        %v1946 = vpop.f32.mrb[0].mxu0
        %v1947 = vadd.f32 0.0, %v1946
        %v1948 = vpop.f32.mrb[0].mxu0
        %v1949 = vpop.f32.mrb[0].mxu0
        %v1950 = vadd.f32 0.0, %v1949
        %v1951 = vpop.f32.mrb[0].mxu0
        %1952 = vmatprep.mubr.bf16.mxu0 0
        %1953 = vmatmul.mubr.bf16.gmra.mrb[0].mxu0 %v823
        %v1954 = vpop.f32.mrb[0].mxu0
        %v1955 = vadd.f32 0.0, %v1954
        %v1956 = vpop.f32.mrb[0].mxu0
        %v1957 = vpop.f32.mrb[0].mxu0
        %v1958 = vadd.f32 0.0, %v1957
        %v1959 = vpop.f32.mrb[0].mxu0
        %1960 = vdwg.mxu0
        %v1961 = vpack.c.bf16 %v1934, %v1931
        %v1962 = vpack.c.bf16 %v1942, %v1939
        %v1963 = vpack.c.bf16 %v1950, %v1947
        %v1964 = vpack.c.bf16 %v1958, %v1955
        %v1997 = vunpack.c.l.b16 %v1816
        %v1998 = vunpack.c.l.b16 %v1817
        %v1999 = vunpack.c.l.b16 %v1818
        %v2000 = vunpack.c.l.b16 %v1819
        %v2001 = vunpack.c.l.b16 %v1820
        %v2002 = vunpack.c.l.b16 %v1821
        %v2003 = vunpack.c.l.b16 %v1822
        %v2004 = vunpack.c.l.b16 %v1823
        %v2005 = vunpack.c.l.b16 %v1824
        %v2006 = vunpack.c.l.b16 %v1825
        %v2007 = vunpack.c.l.b16 %v1826
        %v2008 = vunpack.c.l.b16 %v1827
        %v2009 = vunpack.c.l.b16 %v1828
        %v2010 = vunpack.c.l.b16 %v1829
        %v2011 = vunpack.c.l.b16 %v1830
        %v2012 = vunpack.c.l.b16 %v1831
        %v2013 = vunpack.c.l.b16 %v1832
        %v2014 = vunpack.c.l.b16 %v1833
        %v2015 = vunpack.c.l.b16 %v1834
        %v2016 = vunpack.c.l.b16 %v1835
        %v2017 = vunpack.c.l.b16 %v1836
        %v2018 = vunpack.c.l.b16 %v1837
        %v2019 = vunpack.c.l.b16 %v1838
        %v2020 = vunpack.c.l.b16 %v1839
        %v2021 = vunpack.c.l.b16 %v1840
        %v2022 = vunpack.c.l.b16 %v1841
        %v2023 = vunpack.c.l.b16 %v1842
        %v2024 = vunpack.c.l.b16 %v1843
        %v2025 = vunpack.c.l.b16 %v1844
        %v2026 = vunpack.c.l.b16 %v1845
        %v2027 = vunpack.c.l.b16 %v1846
        %v2028 = vunpack.c.l.b16 %v1847
        %v2029 = vpack.c.b16 %v1998, %v1997
        %v2030 = vpack.c.b16 %v2000, %v1999
        %v2031 = vpack.c.b16 %v2002, %v2001
        %v2032 = vpack.c.b16 %v2004, %v2003
        %v2033 = vpack.c.b16 %v2006, %v2005
        %v2034 = vpack.c.b16 %v2008, %v2007
        %v2035 = vpack.c.b16 %v2010, %v2009
        %v2036 = vpack.c.b16 %v2012, %v2011
        %v2037 = vpack.c.b16 %v2014, %v2013
        %v2038 = vpack.c.b16 %v2016, %v2015
        %v2039 = vpack.c.b16 %v2018, %v2017
        %v2040 = vpack.c.b16 %v2020, %v2019
        %v2041 = vpack.c.b16 %v2022, %v2021
        %v2042 = vpack.c.b16 %v2024, %v2023
        %v2043 = vpack.c.b16 %v2026, %v2025
        %v2044 = vpack.c.b16 %v2028, %v2027
        %v2046 = vsel %vm395, %v2029, 0
        %v2049 = vsel %vm395, %v2030, 0
        %v2052 = vsel %vm395, %v2031, 0
        %v2055 = vsel %vm395, %v2032, 0
        %v2058 = vsel %vm395, %v2033, 0
        %v2061 = vsel %vm395, %v2034, 0
        %v2064 = vsel %vm395, %v2035, 0
        %v2067 = vsel %vm395, %v2036, 0
        %v2070 = vsel %vm395, %v2037, 0
        %v2073 = vsel %vm395, %v2038, 0
        %v2076 = vsel %vm395, %v2039, 0
        %v2079 = vsel %vm395, %v2040, 0
        %v2082 = vsel %vm395, %v2041, 0
        %v2085 = vsel %vm395, %v2042, 0
        %v2088 = vsel %vm395, %v2043, 0
        %v2091 = vsel %vm395, %v2044, 0
        %2093 = vmatprep.subr.bf16.mxu0 0
        %2094 = vmatpush1.bf16.msra.mxu0 %v1961
        %2095 = vmatprep.subr.bf16.mxu0 0
        %2096 = vmatpush1.bf16.msra.mxu0 %v1962
        %2097 = vmatprep.subr.bf16.mxu0 0
        %2098 = vmatpush1.bf16.msra.mxu0 %v1963
        %2099 = vmatprep.subr.bf16.mxu0 0
        %2100 = vmatpush1.bf16.msra.mxu0 %v1964
        %2101 = vmatprep.subr.bf16.mxu0 0
        %2102 = vmatpush1.bf16.msra.mxu0 0
        %2103 = vmatprep.subr.bf16.mxu0 0
        %2104 = vmatpush1.bf16.msra.mxu0 0
        %2105 = vmatprep.subr.bf16.mxu0 0
        %2106 = vmatpush1.bf16.msra.mxu0 0
        %2107 = vmatprep.subr.bf16.mxu0 0
        %2108 = vmatpush1.bf16.msra.mxu0 0
        %2109 = vmatprep.subr.bf16.mxu0 0
        %2110 = vmatpush1.bf16.msra.mxu0 0
        %2111 = vmatprep.subr.bf16.mxu0 0
        %2112 = vmatpush1.bf16.msra.mxu0 0
        %2113 = vmatprep.subr.bf16.mxu0 0
        %2114 = vmatpush1.bf16.msra.mxu0 0
        %2115 = vmatprep.subr.bf16.mxu0 0
        %2116 = vmatpush1.bf16.msra.mxu0 0
        %2117 = vmatprep.subr.bf16.mxu0 0
        %2118 = vmatpush1.bf16.msra.mxu0 0
        %2119 = vmatprep.subr.bf16.mxu0 0
        %2120 = vmatpush1.bf16.msra.mxu0 0
        %2121 = vmatprep.subr.bf16.mxu0 0
        %2122 = vmatpush1.bf16.msra.mxu0 0
        %2123 = vmatprep.subr.bf16.mxu0 0
        %2124 = vmatpush1.bf16.msra.mxu0 0
        %2125 = vmatprep.mubr.bf16.mxu0 0
        %2126 = vmatmul.mubr.bf16.gmra.mrb[0].mxu0 %v2046
        %v2127 = vpop.f32.mrb[0].mxu0
        %v2128 = vadd.f32 0.0, %v2127
        %v2129 = vpop.f32.mrb[0].mxu0
        %v2130 = vpop.f32.mrb[0].mxu0
        %v2131 = vadd.f32 0.0, %v2130
        %v2132 = vpop.f32.mrb[0].mxu0
        %2133 = vmatprep.mubr.bf16.mxu0 0
        %2134 = vmatmul.mubr.bf16.gmra.mrb[0].mxu0 %v2049
        %v2135 = vpop.f32.mrb[0].mxu0
        %v2136 = vadd.f32 0.0, %v2135
        %v2137 = vpop.f32.mrb[0].mxu0
        %v2138 = vpop.f32.mrb[0].mxu0
        %v2139 = vadd.f32 0.0, %v2138
        %v2140 = vpop.f32.mrb[0].mxu0
        %2141 = vmatprep.mubr.bf16.mxu0 0
        %2142 = vmatmul.mubr.bf16.gmra.mrb[0].mxu0 %v2052
        %v2143 = vpop.f32.mrb[0].mxu0
        %v2144 = vadd.f32 0.0, %v2143
        %v2145 = vpop.f32.mrb[0].mxu0
        %v2146 = vpop.f32.mrb[0].mxu0
        %v2147 = vadd.f32 0.0, %v2146
        %v2148 = vpop.f32.mrb[0].mxu0
        %2149 = vmatprep.mubr.bf16.mxu0 0
        %2150 = vmatmul.mubr.bf16.gmra.mrb[0].mxu0 %v2055
        %v2151 = vpop.f32.mrb[0].mxu0
        %v2152 = vadd.f32 0.0, %v2151
        %v2153 = vpop.f32.mrb[0].mxu0
        %v2154 = vpop.f32.mrb[0].mxu0
        %v2155 = vadd.f32 0.0, %v2154
        %v2156 = vpop.f32.mrb[0].mxu0
        %2157 = vmatprep.mubr.bf16.mxu0 0
        %2158 = vmatmul.mubr.bf16.gmra.mrb[0].mxu0 %v2058
        %v2159 = vpop.f32.mrb[0].mxu0
        %v2160 = vadd.f32 0.0, %v2159
        %v2161 = vpop.f32.mrb[0].mxu0
        %v2162 = vpop.f32.mrb[0].mxu0
        %v2163 = vadd.f32 0.0, %v2162
        %v2164 = vpop.f32.mrb[0].mxu0
        %2165 = vmatprep.mubr.bf16.mxu0 0
        %2166 = vmatmul.mubr.bf16.gmra.mrb[0].mxu0 %v2061
        %v2167 = vpop.f32.mrb[0].mxu0
        %v2168 = vadd.f32 0.0, %v2167
        %v2169 = vpop.f32.mrb[0].mxu0
        %v2170 = vpop.f32.mrb[0].mxu0
        %v2171 = vadd.f32 0.0, %v2170
        %v2172 = vpop.f32.mrb[0].mxu0
        %2173 = vmatprep.mubr.bf16.mxu0 0
        %2174 = vmatmul.mubr.bf16.gmra.mrb[0].mxu0 %v2064
        %v2175 = vpop.f32.mrb[0].mxu0
        %v2176 = vadd.f32 0.0, %v2175
        %v2177 = vpop.f32.mrb[0].mxu0
        %v2178 = vpop.f32.mrb[0].mxu0
        %v2179 = vadd.f32 0.0, %v2178
        %v2180 = vpop.f32.mrb[0].mxu0
        %2181 = vmatprep.mubr.bf16.mxu0 0
        %2182 = vmatmul.mubr.bf16.gmra.mrb[0].mxu0 %v2067
        %v2183 = vpop.f32.mrb[0].mxu0
        %v2184 = vadd.f32 0.0, %v2183
        %v2185 = vpop.f32.mrb[0].mxu0
        %v2186 = vpop.f32.mrb[0].mxu0
        %v2187 = vadd.f32 0.0, %v2186
        %v2188 = vpop.f32.mrb[0].mxu0
        %2189 = vmatprep.mubr.bf16.mxu0 0
        %2190 = vmatmul.mubr.bf16.gmra.mrb[0].mxu0 %v2070
        %v2191 = vpop.f32.mrb[0].mxu0
        %v2192 = vadd.f32 0.0, %v2191
        %v2193 = vpop.f32.mrb[0].mxu0
        %v2194 = vpop.f32.mrb[0].mxu0
        %v2195 = vadd.f32 0.0, %v2194
        %v2196 = vpop.f32.mrb[0].mxu0
        %2197 = vmatprep.mubr.bf16.mxu0 0
        %2198 = vmatmul.mubr.bf16.gmra.mrb[0].mxu0 %v2073
        %v2199 = vpop.f32.mrb[0].mxu0
        %v2200 = vadd.f32 0.0, %v2199
        %v2201 = vpop.f32.mrb[0].mxu0
        %v2202 = vpop.f32.mrb[0].mxu0
        %v2203 = vadd.f32 0.0, %v2202
        %v2204 = vpop.f32.mrb[0].mxu0
        %2205 = vmatprep.mubr.bf16.mxu0 0
        %2206 = vmatmul.mubr.bf16.gmra.mrb[0].mxu0 %v2076
        %v2207 = vpop.f32.mrb[0].mxu0
        %v2208 = vadd.f32 0.0, %v2207
        %v2209 = vpop.f32.mrb[0].mxu0
        %v2210 = vpop.f32.mrb[0].mxu0
        %v2211 = vadd.f32 0.0, %v2210
        %v2212 = vpop.f32.mrb[0].mxu0
        %2213 = vmatprep.mubr.bf16.mxu0 0
        %2214 = vmatmul.mubr.bf16.gmra.mrb[0].mxu0 %v2079
        %v2215 = vpop.f32.mrb[0].mxu0
        %v2216 = vadd.f32 0.0, %v2215
        %v2217 = vpop.f32.mrb[0].mxu0
        %v2218 = vpop.f32.mrb[0].mxu0
        %v2219 = vadd.f32 0.0, %v2218
        %v2220 = vpop.f32.mrb[0].mxu0
        %2221 = vmatprep.mubr.bf16.mxu0 0
        %2222 = vmatmul.mubr.bf16.gmra.mrb[0].mxu0 %v2082
        %v2223 = vpop.f32.mrb[0].mxu0
        %v2224 = vadd.f32 0.0, %v2223
        %v2225 = vpop.f32.mrb[0].mxu0
        %v2226 = vpop.f32.mrb[0].mxu0
        %v2227 = vadd.f32 0.0, %v2226
        %v2228 = vpop.f32.mrb[0].mxu0
        %2229 = vmatprep.mubr.bf16.mxu0 0
        %2230 = vmatmul.mubr.bf16.gmra.mrb[0].mxu0 %v2085
        %v2231 = vpop.f32.mrb[0].mxu0
        %v2232 = vadd.f32 0.0, %v2231
        %v2233 = vpop.f32.mrb[0].mxu0
        %v2234 = vpop.f32.mrb[0].mxu0
        %v2235 = vadd.f32 0.0, %v2234
        %v2236 = vpop.f32.mrb[0].mxu0
        %2237 = vmatprep.mubr.bf16.mxu0 0
        %2238 = vmatmul.mubr.bf16.gmra.mrb[0].mxu0 %v2088
        %v2239 = vpop.f32.mrb[0].mxu0
        %v2240 = vadd.f32 0.0, %v2239
        %v2241 = vpop.f32.mrb[0].mxu0
        %v2242 = vpop.f32.mrb[0].mxu0
        %v2243 = vadd.f32 0.0, %v2242
        %v2244 = vpop.f32.mrb[0].mxu0
        %2245 = vmatprep.mubr.bf16.mxu0 0
        %2246 = vmatmul.mubr.bf16.gmra.mrb[0].mxu0 %v2091
        %v2247 = vpop.f32.mrb[0].mxu0
        %v2248 = vadd.f32 0.0, %v2247
        %v2249 = vpop.f32.mrb[0].mxu0
        %v2250 = vpop.f32.mrb[0].mxu0
        %v2251 = vadd.f32 0.0, %v2250
        %v2252 = vpop.f32.mrb[0].mxu0
        %2253 = vdwg.mxu0
        %v2254 = vadd.f32 %v1768, %v2128
        %v2255 = vadd.f32 %v1769, %v2131
        %v2256 = vadd.f32 %v1770, %v2136
        %v2257 = vadd.f32 %v1771, %v2139
        %v2258 = vadd.f32 %v1772, %v2144
        %v2259 = vadd.f32 %v1773, %v2147
        %v2260 = vadd.f32 %v1774, %v2152
        %v2261 = vadd.f32 %v1775, %v2155
        %v2262 = vadd.f32 %v1776, %v2160
        %v2263 = vadd.f32 %v1777, %v2163
        %v2264 = vadd.f32 %v1778, %v2168
        %v2265 = vadd.f32 %v1779, %v2171
        %v2266 = vadd.f32 %v1780, %v2176
        %v2267 = vadd.f32 %v1781, %v2179
        %v2268 = vadd.f32 %v1782, %v2184
        %v2269 = vadd.f32 %v1783, %v2187
        %v2270 = vadd.f32 %v1784, %v2192
        %v2271 = vadd.f32 %v1785, %v2195
        %v2272 = vadd.f32 %v1786, %v2200
        %v2273 = vadd.f32 %v1787, %v2203
        %v2274 = vadd.f32 %v1788, %v2208
        %v2275 = vadd.f32 %v1789, %v2211
        %v2276 = vadd.f32 %v1790, %v2216
        %v2277 = vadd.f32 %v1791, %v2219
        %v2278 = vadd.f32 %v1792, %v2224
        %v2279 = vadd.f32 %v1793, %v2227
        %v2280 = vadd.f32 %v1794, %v2232
        %v2281 = vadd.f32 %v1795, %v2235
        %v2282 = vadd.f32 %v1796, %v2240
        %v2283 = vadd.f32 %v1797, %v2243
        %v2284 = vadd.f32 %v1798, %v2248
        %v2285 = vadd.f32 %v1799, %v2251
        %vm2286 = vcmp.gt.f32.partialorder %v2254, 0.0
        %vm2287 = vcmp.gt.f32.partialorder %v2255, 0.0
        %vm2288 = vcmp.gt.f32.partialorder %v2256, 0.0
        %vm2289 = vcmp.gt.f32.partialorder %v2257, 0.0
        %vm2290 = vcmp.gt.f32.partialorder %v2258, 0.0
        %vm2291 = vcmp.gt.f32.partialorder %v2259, 0.0
        %vm2292 = vcmp.gt.f32.partialorder %v2260, 0.0
        %vm2293 = vcmp.gt.f32.partialorder %v2261, 0.0
        %vm2294 = vcmp.gt.f32.partialorder %v2262, 0.0
        %vm2295 = vcmp.gt.f32.partialorder %v2263, 0.0
        %vm2296 = vcmp.gt.f32.partialorder %v2264, 0.0
        %vm2297 = vcmp.gt.f32.partialorder %v2265, 0.0
        %vm2298 = vcmp.gt.f32.partialorder %v2266, 0.0
        %vm2299 = vcmp.gt.f32.partialorder %v2267, 0.0
        %vm2300 = vcmp.gt.f32.partialorder %v2268, 0.0
        %vm2301 = vcmp.gt.f32.partialorder %v2269, 0.0
        %vm2302 = vcmp.gt.f32.partialorder %v2270, 0.0
        %vm2303 = vcmp.gt.f32.partialorder %v2271, 0.0
        %vm2304 = vcmp.gt.f32.partialorder %v2272, 0.0
        %vm2305 = vcmp.gt.f32.partialorder %v2273, 0.0
        %vm2306 = vcmp.gt.f32.partialorder %v2274, 0.0
        %vm2307 = vcmp.gt.f32.partialorder %v2275, 0.0
        %vm2308 = vcmp.gt.f32.partialorder %v2276, 0.0
        %vm2309 = vcmp.gt.f32.partialorder %v2277, 0.0
        %vm2310 = vcmp.gt.f32.partialorder %v2278, 0.0
        %vm2311 = vcmp.gt.f32.partialorder %v2279, 0.0
        %vm2312 = vcmp.gt.f32.partialorder %v2280, 0.0
        %vm2313 = vcmp.gt.f32.partialorder %v2281, 0.0
        %vm2314 = vcmp.gt.f32.partialorder %v2282, 0.0
        %vm2315 = vcmp.gt.f32.partialorder %v2283, 0.0
        %vm2316 = vcmp.gt.f32.partialorder %v2284, 0.0
        %vm2317 = vcmp.gt.f32.partialorder %v2285, 0.0
        %v2318 = vmul.f32 %v2254, 0.1
        %v2319 = vmul.f32 %v2255, 0.1
        %v2320 = vmul.f32 %v2256, 0.1
        %v2321 = vmul.f32 %v2257, 0.1
        %v2322 = vmul.f32 %v2258, 0.1
        %v2323 = vmul.f32 %v2259, 0.1
        %v2324 = vmul.f32 %v2260, 0.1
        %v2325 = vmul.f32 %v2261, 0.1
        %v2326 = vmul.f32 %v2262, 0.1
        %v2327 = vmul.f32 %v2263, 0.1
        %v2328 = vmul.f32 %v2264, 0.1
        %v2329 = vmul.f32 %v2265, 0.1
        %v2330 = vmul.f32 %v2266, 0.1
        %v2331 = vmul.f32 %v2267, 0.1
        %v2332 = vmul.f32 %v2268, 0.1
        %v2333 = vmul.f32 %v2269, 0.1
        %v2334 = vmul.f32 %v2270, 0.1
        %v2335 = vmul.f32 %v2271, 0.1
        %v2336 = vmul.f32 %v2272, 0.1
        %v2337 = vmul.f32 %v2273, 0.1
        %v2338 = vmul.f32 %v2274, 0.1
        %v2339 = vmul.f32 %v2275, 0.1
        %v2340 = vmul.f32 %v2276, 0.1
        %v2341 = vmul.f32 %v2277, 0.1
        %v2342 = vmul.f32 %v2278, 0.1
        %v2343 = vmul.f32 %v2279, 0.1
        %v2344 = vmul.f32 %v2280, 0.1
        %v2345 = vmul.f32 %v2281, 0.1
        %v2346 = vmul.f32 %v2282, 0.1
        %v2347 = vmul.f32 %v2283, 0.1
        %v2348 = vmul.f32 %v2284, 0.1
        %v2349 = vmul.f32 %v2285, 0.1
        %v2350 = vsel %vm2286, %v2254, %v2318
        %v2351 = vsel %vm2287, %v2255, %v2319
        %v2352 = vsel %vm2288, %v2256, %v2320
        %v2353 = vsel %vm2289, %v2257, %v2321
        %v2354 = vsel %vm2290, %v2258, %v2322
        %v2355 = vsel %vm2291, %v2259, %v2323
        %v2356 = vsel %vm2292, %v2260, %v2324
        %v2357 = vsel %vm2293, %v2261, %v2325
        %v2358 = vsel %vm2294, %v2262, %v2326
        %v2359 = vsel %vm2295, %v2263, %v2327
        %v2360 = vsel %vm2296, %v2264, %v2328
        %v2361 = vsel %vm2297, %v2265, %v2329
        %v2362 = vsel %vm2298, %v2266, %v2330
        %v2363 = vsel %vm2299, %v2267, %v2331
        %v2364 = vsel %vm2300, %v2268, %v2332
        %v2365 = vsel %vm2301, %v2269, %v2333
        %v2366 = vsel %vm2302, %v2270, %v2334
        %v2367 = vsel %vm2303, %v2271, %v2335
        %v2368 = vsel %vm2304, %v2272, %v2336
        %v2369 = vsel %vm2305, %v2273, %v2337
        %v2370 = vsel %vm2306, %v2274, %v2338
        %v2371 = vsel %vm2307, %v2275, %v2339
        %v2372 = vsel %vm2308, %v2276, %v2340
        %v2373 = vsel %vm2309, %v2277, %v2341
        %v2374 = vsel %vm2310, %v2278, %v2342
        %v2375 = vsel %vm2311, %v2279, %v2343
        %v2376 = vsel %vm2312, %v2280, %v2344
        %v2377 = vsel %vm2313, %v2281, %v2345
        %v2378 = vsel %vm2314, %v2282, %v2346
        %v2379 = vsel %vm2315, %v2283, %v2347
        %v2380 = vsel %vm2316, %v2284, %v2348
        %v2381 = vsel %vm2317, %v2285, %v2349
        %v2382 = vpack.c.bf16 %v2351, %v2350
        %v2383 = vpack.c.bf16 %v2353, %v2352
        %v2384 = vpack.c.bf16 %v2355, %v2354
        %v2385 = vpack.c.bf16 %v2357, %v2356
        %v2386 = vpack.c.bf16 %v2359, %v2358
        %v2387 = vpack.c.bf16 %v2361, %v2360
        %v2388 = vpack.c.bf16 %v2363, %v2362
        %v2389 = vpack.c.bf16 %v2365, %v2364
        %v2390 = vpack.c.bf16 %v2367, %v2366
        %v2391 = vpack.c.bf16 %v2369, %v2368
        %v2392 = vpack.c.bf16 %v2371, %v2370
        %v2393 = vpack.c.bf16 %v2373, %v2372
        %v2394 = vpack.c.bf16 %v2375, %v2374
        %v2395 = vpack.c.bf16 %v2377, %v2376
        %v2396 = vpack.c.bf16 %v2379, %v2378
        %v2397 = vpack.c.bf16 %v2381, %v2380
        %v2398 = vlaneseq
        %v2399 = vshrl.u32 %v2398, 7
        %v2400 = vsub.s32 3, %v2399
        %v2401 = vrot.slane %v338, %v2400
        %v2406 = vunpack.c.l.b16 %v326
        %v2407 = vunpack.c.l.b16 %v327
        %v2408 = vunpack.c.l.b16 %v328
        %v2409 = vunpack.c.l.b16 %v329
        %v2410 = vpack.c.b16 %v2407, %v2406
        %v2411 = vpack.c.b16 %v2409, %v2408
        %v2415 = vsel %vm734, %v2382, 0
        %v2418 = vsel %vm734, %v2383, 0
        %v2421 = vsel %vm734, %v2384, 0
        %v2424 = vsel %vm734, %v2385, 0
        %v2427 = vsel %vm734, %v2386, 0
        %v2430 = vsel %vm734, %v2387, 0
        %v2433 = vsel %vm734, %v2388, 0
        %v2436 = vsel %vm734, %v2389, 0
        %v2439 = vsel %vm734, %v2390, 0
        %v2442 = vsel %vm734, %v2391, 0
        %v2445 = vsel %vm734, %v2392, 0
        %v2448 = vsel %vm734, %v2393, 0
        %v2451 = vsel %vm734, %v2394, 0
        %v2454 = vsel %vm734, %v2395, 0
        %v2457 = vsel %vm734, %v2396, 0
        %v2460 = vsel %vm734, %v2397, 0
        %2462 = vmatprep.subr.bf16.mxu0 0
        %2463 = vmatpush1.bf16.msra.mxu0 %v2410
        %2464 = vmatprep.subr.bf16.mxu0 0
        %2465 = vmatpush1.bf16.msra.mxu0 %v2411
        %2466 = vmatprep.subr.bf16.mxu0 0
        %2467 = vmatpush1.bf16.msra.mxu0 0
        %2468 = vmatprep.subr.bf16.mxu0 0
        %2469 = vmatpush1.bf16.msra.mxu0 0
        %2470 = vmatprep.subr.bf16.mxu0 0
        %2471 = vmatpush1.bf16.msra.mxu0 0
        %2472 = vmatprep.subr.bf16.mxu0 0
        %2473 = vmatpush1.bf16.msra.mxu0 0
        %2474 = vmatprep.subr.bf16.mxu0 0
        %2475 = vmatpush1.bf16.msra.mxu0 0
        %2476 = vmatprep.subr.bf16.mxu0 0
        %2477 = vmatpush1.bf16.msra.mxu0 0
        %2478 = vmatprep.subr.bf16.mxu0 0
        %2479 = vmatpush1.bf16.msra.mxu0 0
        %2480 = vmatprep.subr.bf16.mxu0 0
        %2481 = vmatpush1.bf16.msra.mxu0 0
        %2482 = vmatprep.subr.bf16.mxu0 0
        %2483 = vmatpush1.bf16.msra.mxu0 0
        %2484 = vmatprep.subr.bf16.mxu0 0
        %2485 = vmatpush1.bf16.msra.mxu0 0
        %2486 = vmatprep.subr.bf16.mxu0 0
        %2487 = vmatpush1.bf16.msra.mxu0 0
        %2488 = vmatprep.subr.bf16.mxu0 0
        %2489 = vmatpush1.bf16.msra.mxu0 0
        %2490 = vmatprep.subr.bf16.mxu0 0
        %2491 = vmatpush1.bf16.msra.mxu0 0
        %2492 = vmatprep.subr.bf16.mxu0 0
        %2493 = vmatpush1.bf16.msra.mxu0 0
        %2494 = vmatprep.mubr.bf16.mxu0 0
        %2495 = vmatmul.mubr.bf16.gmra.mrb[0].mxu0 %v2415
        %v2496 = vpop.f32.mrb[0].mxu0
        %v2497 = vadd.f32 %v2401, %v2496
        %v2498 = vpop.f32.mrb[0].mxu0
        %v2499 = vpop.f32.mrb[0].mxu0
        %v2500 = vadd.f32 %v2401, %v2499
        %v2501 = vpop.f32.mrb[0].mxu0
        %2502 = vmatprep.mubr.bf16.mxu0 0
        %2503 = vmatmul.mubr.bf16.gmra.mrb[0].mxu0 %v2418
        %v2504 = vpop.f32.mrb[0].mxu0
        %v2505 = vadd.f32 %v2401, %v2504
        %v2506 = vpop.f32.mrb[0].mxu0
        %v2507 = vpop.f32.mrb[0].mxu0
        %v2508 = vadd.f32 %v2401, %v2507
        %v2509 = vpop.f32.mrb[0].mxu0
        %2510 = vmatprep.mubr.bf16.mxu0 0
        %2511 = vmatmul.mubr.bf16.gmra.mrb[0].mxu0 %v2421
        %v2512 = vpop.f32.mrb[0].mxu0
        %v2513 = vadd.f32 %v2401, %v2512
        %v2514 = vpop.f32.mrb[0].mxu0
        %v2515 = vpop.f32.mrb[0].mxu0
        %v2516 = vadd.f32 %v2401, %v2515
        %v2517 = vpop.f32.mrb[0].mxu0
        %2518 = vmatprep.mubr.bf16.mxu0 0
        %2519 = vmatmul.mubr.bf16.gmra.mrb[0].mxu0 %v2424
        %v2520 = vpop.f32.mrb[0].mxu0
        %v2521 = vadd.f32 %v2401, %v2520
        %v2522 = vpop.f32.mrb[0].mxu0
        %v2523 = vpop.f32.mrb[0].mxu0
        %v2524 = vadd.f32 %v2401, %v2523
        %v2525 = vpop.f32.mrb[0].mxu0
        %2526 = vmatprep.mubr.bf16.mxu0 0
        %2527 = vmatmul.mubr.bf16.gmra.mrb[0].mxu0 %v2427
        %v2528 = vpop.f32.mrb[0].mxu0
        %v2529 = vadd.f32 %v2401, %v2528
        %v2530 = vpop.f32.mrb[0].mxu0
        %v2531 = vpop.f32.mrb[0].mxu0
        %v2532 = vadd.f32 %v2401, %v2531
        %v2533 = vpop.f32.mrb[0].mxu0
        %2534 = vmatprep.mubr.bf16.mxu0 0
        %2535 = vmatmul.mubr.bf16.gmra.mrb[0].mxu0 %v2430
        %v2536 = vpop.f32.mrb[0].mxu0
        %v2537 = vadd.f32 %v2401, %v2536
        %v2538 = vpop.f32.mrb[0].mxu0
        %v2539 = vpop.f32.mrb[0].mxu0
        %v2540 = vadd.f32 %v2401, %v2539
        %v2541 = vpop.f32.mrb[0].mxu0
        %2542 = vmatprep.mubr.bf16.mxu0 0
        %2543 = vmatmul.mubr.bf16.gmra.mrb[0].mxu0 %v2433
        %v2544 = vpop.f32.mrb[0].mxu0
        %v2545 = vadd.f32 %v2401, %v2544
        %v2546 = vpop.f32.mrb[0].mxu0
        %v2547 = vpop.f32.mrb[0].mxu0
        %v2548 = vadd.f32 %v2401, %v2547
        %v2549 = vpop.f32.mrb[0].mxu0
        %2550 = vmatprep.mubr.bf16.mxu0 0
        %2551 = vmatmul.mubr.bf16.gmra.mrb[0].mxu0 %v2436
        %v2552 = vpop.f32.mrb[0].mxu0
        %v2553 = vadd.f32 %v2401, %v2552
        %v2554 = vpop.f32.mrb[0].mxu0
        %v2555 = vpop.f32.mrb[0].mxu0
        %v2556 = vadd.f32 %v2401, %v2555
        %v2557 = vpop.f32.mrb[0].mxu0
        %2558 = vmatprep.mubr.bf16.mxu0 0
        %2559 = vmatmul.mubr.bf16.gmra.mrb[0].mxu0 %v2439
        %v2560 = vpop.f32.mrb[0].mxu0
        %v2561 = vadd.f32 %v2401, %v2560
        %v2562 = vpop.f32.mrb[0].mxu0
        %v2563 = vpop.f32.mrb[0].mxu0
        %v2564 = vadd.f32 %v2401, %v2563
        %v2565 = vpop.f32.mrb[0].mxu0
        %2566 = vmatprep.mubr.bf16.mxu0 0
        %2567 = vmatmul.mubr.bf16.gmra.mrb[0].mxu0 %v2442
        %v2568 = vpop.f32.mrb[0].mxu0
        %v2569 = vadd.f32 %v2401, %v2568
        %v2570 = vpop.f32.mrb[0].mxu0
        %v2571 = vpop.f32.mrb[0].mxu0
        %v2572 = vadd.f32 %v2401, %v2571
        %v2573 = vpop.f32.mrb[0].mxu0
        %2574 = vmatprep.mubr.bf16.mxu0 0
        %2575 = vmatmul.mubr.bf16.gmra.mrb[0].mxu0 %v2445
        %v2576 = vpop.f32.mrb[0].mxu0
        %v2577 = vadd.f32 %v2401, %v2576
        %v2578 = vpop.f32.mrb[0].mxu0
        %v2579 = vpop.f32.mrb[0].mxu0
        %v2580 = vadd.f32 %v2401, %v2579
        %v2581 = vpop.f32.mrb[0].mxu0
        %2582 = vmatprep.mubr.bf16.mxu0 0
        %2583 = vmatmul.mubr.bf16.gmra.mrb[0].mxu0 %v2448
        %v2584 = vpop.f32.mrb[0].mxu0
        %v2585 = vadd.f32 %v2401, %v2584
        %v2586 = vpop.f32.mrb[0].mxu0
        %v2587 = vpop.f32.mrb[0].mxu0
        %v2588 = vadd.f32 %v2401, %v2587
        %v2589 = vpop.f32.mrb[0].mxu0
        %2590 = vmatprep.mubr.bf16.mxu0 0
        %2591 = vmatmul.mubr.bf16.gmra.mrb[0].mxu0 %v2451
        %v2592 = vpop.f32.mrb[0].mxu0
        %v2593 = vadd.f32 %v2401, %v2592
        %v2594 = vpop.f32.mrb[0].mxu0
        %v2595 = vpop.f32.mrb[0].mxu0
        %v2596 = vadd.f32 %v2401, %v2595
        %v2597 = vpop.f32.mrb[0].mxu0
        %2598 = vmatprep.mubr.bf16.mxu0 0
        %2599 = vmatmul.mubr.bf16.gmra.mrb[0].mxu0 %v2454
        %v2600 = vpop.f32.mrb[0].mxu0
        %v2601 = vadd.f32 %v2401, %v2600
        %v2602 = vpop.f32.mrb[0].mxu0
        %v2603 = vpop.f32.mrb[0].mxu0
        %v2604 = vadd.f32 %v2401, %v2603
        %v2605 = vpop.f32.mrb[0].mxu0
        %2606 = vmatprep.mubr.bf16.mxu0 0
        %2607 = vmatmul.mubr.bf16.gmra.mrb[0].mxu0 %v2457
        %v2608 = vpop.f32.mrb[0].mxu0
        %v2609 = vadd.f32 %v2401, %v2608
        %v2610 = vpop.f32.mrb[0].mxu0
        %v2611 = vpop.f32.mrb[0].mxu0
        %v2612 = vadd.f32 %v2401, %v2611
        %v2613 = vpop.f32.mrb[0].mxu0
        %2614 = vmatprep.mubr.bf16.mxu0 0
        %2615 = vmatmul.mubr.bf16.gmra.mrb[0].mxu0 %v2460
        %v2616 = vpop.f32.mrb[0].mxu0
        %v2617 = vadd.f32 %v2401, %v2616
        %v2618 = vpop.f32.mrb[0].mxu0
        %v2619 = vpop.f32.mrb[0].mxu0
        %v2620 = vadd.f32 %v2401, %v2619
        %v2621 = vpop.f32.mrb[0].mxu0
        %2622 = vdwg.mxu0
        %v2623 = vtanh.pop %v2497
        %v2624 = vtanh.pop %v2500
        %v2625 = vtanh.pop %v2505
        %v2626 = vtanh.pop %v2508
        %v2627 = vtanh.pop %v2513
        %v2628 = vtanh.pop %v2516
        %v2629 = vtanh.pop %v2521
        %v2630 = vtanh.pop %v2524
        %v2631 = vtanh.pop %v2529
        %v2632 = vtanh.pop %v2532
        %v2633 = vtanh.pop %v2537
        %v2634 = vtanh.pop %v2540
        %v2635 = vtanh.pop %v2545
        %v2636 = vtanh.pop %v2548
        %v2637 = vtanh.pop %v2553
        %v2638 = vtanh.pop %v2556
        %v2639 = vtanh.pop %v2561
        %v2640 = vtanh.pop %v2564
        %v2641 = vtanh.pop %v2569
        %v2642 = vtanh.pop %v2572
        %v2643 = vtanh.pop %v2577
        %v2644 = vtanh.pop %v2580
        %v2645 = vtanh.pop %v2585
        %v2646 = vtanh.pop %v2588
        %v2647 = vtanh.pop %v2593
        %v2648 = vtanh.pop %v2596
        %v2649 = vtanh.pop %v2601
        %v2650 = vtanh.pop %v2604
        %v2651 = vtanh.pop %v2609
        %v2652 = vtanh.pop %v2612
        %v2653 = vtanh.pop %v2617
        %v2654 = vtanh.pop %v2620
        %v2655 = vld [vmem:[#allocation5] sm:$0xff]
        %v2656 = vld [vmem:[#allocation5 + $0x8] sm:$0xff]
        %v2657 = vld [vmem:[#allocation5 + $0x10] sm:$0xff]
        %v2658 = vld [vmem:[#allocation5 + $0x18] sm:$0xff]
        %v2659 = vld [vmem:[#allocation5 + $0x20] sm:$0xff]
        %v2660 = vld [vmem:[#allocation5 + $0x28] sm:$0xff]
        %v2661 = vld [vmem:[#allocation5 + $0x30] sm:$0xff]
        %v2662 = vld [vmem:[#allocation5 + $0x38] sm:$0xff]
        %v2663 = vld [vmem:[#allocation5 + $0x40] sm:$0xff]
        %v2664 = vld [vmem:[#allocation5 + $0x48] sm:$0xff]
        %v2665 = vld [vmem:[#allocation5 + $0x50] sm:$0xff]
        %v2666 = vld [vmem:[#allocation5 + $0x58] sm:$0xff]
        %v2667 = vld [vmem:[#allocation5 + $0x60] sm:$0xff]
        %v2668 = vld [vmem:[#allocation5 + $0x68] sm:$0xff]
        %v2669 = vld [vmem:[#allocation5 + $0x70] sm:$0xff]
        %v2670 = vld [vmem:[#allocation5 + $0x78] sm:$0xff]
        %v2671 = vld [vmem:[#allocation5 + $0x80] sm:$0xff]
        %v2672 = vld [vmem:[#allocation5 + $0x88] sm:$0xff]
        %v2673 = vld [vmem:[#allocation5 + $0x90] sm:$0xff]
        %v2674 = vld [vmem:[#allocation5 + $0x98] sm:$0xff]
        %v2675 = vld [vmem:[#allocation5 + $0xa0] sm:$0xff]
        %v2676 = vld [vmem:[#allocation5 + $0xa8] sm:$0xff]
        %v2677 = vld [vmem:[#allocation5 + $0xb0] sm:$0xff]
        %v2678 = vld [vmem:[#allocation5 + $0xb8] sm:$0xff]
        %v2679 = vld [vmem:[#allocation5 + $0xc0] sm:$0xff]
        %v2680 = vld [vmem:[#allocation5 + $0xc8] sm:$0xff]
        %v2681 = vld [vmem:[#allocation5 + $0xd0] sm:$0xff]
        %v2682 = vld [vmem:[#allocation5 + $0xd8] sm:$0xff]
        %v2683 = vld [vmem:[#allocation5 + $0xe0] sm:$0xff]
        %v2684 = vld [vmem:[#allocation5 + $0xe8] sm:$0xff]
        %v2685 = vld [vmem:[#allocation5 + $0xf0] sm:$0xff]
        %v2686 = vld [vmem:[#allocation5 + $0xf8] sm:$0xff]
        %v2687 = vld [vmem:[#allocation5 + $0x100] sm:$0xff]
        %v2688 = vld [vmem:[#allocation5 + $0x108] sm:$0xff]
        %v2689 = vld [vmem:[#allocation5 + $0x110] sm:$0xff]
        %v2690 = vld [vmem:[#allocation5 + $0x118] sm:$0xff]
        %v2691 = vld [vmem:[#allocation5 + $0x120] sm:$0xff]
        %v2692 = vld [vmem:[#allocation5 + $0x128] sm:$0xff]
        %v2693 = vld [vmem:[#allocation5 + $0x130] sm:$0xff]
        %v2694 = vld [vmem:[#allocation5 + $0x138] sm:$0xff]
        %v2695 = vld [vmem:[#allocation5 + $0x140] sm:$0xff]
        %v2696 = vld [vmem:[#allocation5 + $0x148] sm:$0xff]
        %v2697 = vld [vmem:[#allocation5 + $0x150] sm:$0xff]
        %v2698 = vld [vmem:[#allocation5 + $0x158] sm:$0xff]
        %v2699 = vld [vmem:[#allocation5 + $0x160] sm:$0xff]
        %v2700 = vld [vmem:[#allocation5 + $0x168] sm:$0xff]
        %v2701 = vld [vmem:[#allocation5 + $0x170] sm:$0xff]
        %v2702 = vld [vmem:[#allocation5 + $0x178] sm:$0xff]
        %v2703 = vld [vmem:[#allocation5 + $0x180] sm:$0xff]
        %v2704 = vld [vmem:[#allocation5 + $0x188] sm:$0xff]
        %v2705 = vld [vmem:[#allocation5 + $0x190] sm:$0xff]
        %v2706 = vld [vmem:[#allocation5 + $0x198] sm:$0xff]
        %v2707 = vld [vmem:[#allocation5 + $0x1a0] sm:$0xff]
        %v2708 = vld [vmem:[#allocation5 + $0x1a8] sm:$0xff]
        %v2709 = vld [vmem:[#allocation5 + $0x1b0] sm:$0xff]
        %v2710 = vld [vmem:[#allocation5 + $0x1b8] sm:$0xff]
        %v2711 = vld [vmem:[#allocation5 + $0x1c0] sm:$0xff]
        %v2712 = vld [vmem:[#allocation5 + $0x1c8] sm:$0xff]
        %v2713 = vld [vmem:[#allocation5 + $0x1d0] sm:$0xff]
        %v2714 = vld [vmem:[#allocation5 + $0x1d8] sm:$0xff]
        %v2715 = vld [vmem:[#allocation5 + $0x1e0] sm:$0xff]
        %v2716 = vld [vmem:[#allocation5 + $0x1e8] sm:$0xff]
        %v2717 = vld [vmem:[#allocation5 + $0x1f0] sm:$0xff]
        %v2718 = vld [vmem:[#allocation5 + $0x1f8] sm:$0xff]
        %v2719 = vld [vmem:[#allocation5 + $0x200] sm:$0xff]
        %v2720 = vld [vmem:[#allocation5 + $0x208] sm:$0xff]
        %v2721 = vld [vmem:[#allocation5 + $0x210] sm:$0xff]
        %v2722 = vld [vmem:[#allocation5 + $0x218] sm:$0xff]
        %v2724 = vsel %vm616, %v2623, 0
        %v2727 = vsel %vm616, %v2624, 0
        %v2730 = vsel %vm616, %v2625, 0
        %v2733 = vsel %vm616, %v2626, 0
        %v2736 = vsel %vm616, %v2627, 0
        %v2739 = vsel %vm616, %v2628, 0
        %v2742 = vsel %vm616, %v2629, 0
        %v2745 = vsel %vm616, %v2630, 0
        %v2748 = vsel %vm616, %v2631, 0
        %v2751 = vsel %vm616, %v2632, 0
        %v2754 = vsel %vm616, %v2633, 0
        %v2757 = vsel %vm616, %v2634, 0
        %v2760 = vsel %vm616, %v2635, 0
        %v2763 = vsel %vm616, %v2636, 0
        %v2766 = vsel %vm616, %v2637, 0
        %v2769 = vsel %vm616, %v2638, 0
        %v2772 = vsel %vm616, %v2639, 0
        %v2775 = vsel %vm616, %v2640, 0
        %v2778 = vsel %vm616, %v2641, 0
        %v2781 = vsel %vm616, %v2642, 0
        %v2784 = vsel %vm616, %v2643, 0
        %v2787 = vsel %vm616, %v2644, 0
        %v2790 = vsel %vm616, %v2645, 0
        %v2793 = vsel %vm616, %v2646, 0
        %v2796 = vsel %vm616, %v2647, 0
        %v2799 = vsel %vm616, %v2648, 0
        %v2802 = vsel %vm616, %v2649, 0
        %v2805 = vsel %vm616, %v2650, 0
        %v2808 = vsel %vm616, %v2651, 0
        %v2811 = vsel %vm616, %v2652, 0
        %v2814 = vsel %vm616, %v2653, 0
        %v2817 = vsel %vm616, %v2654, 0
        %2819 = vmatprep.subr.mxu0 %v2656
        %2820 = vmatpush1.msra.mxu0 %v2655
        %2821 = vmatprep.subr.mxu0 0.0
        %2822 = vmatpush1.msra.mxu0 0.0
        %2823 = vmatprep.subr.mxu0 0.0
        %2824 = vmatpush1.msra.mxu0 0.0
        %2825 = vmatprep.subr.mxu0 0.0
        %2826 = vmatpush1.msra.mxu0 0.0
        %2827 = vmatprep.subr.mxu0 0.0
        %2828 = vmatpush1.msra.mxu0 0.0
        %2829 = vmatprep.subr.mxu0 0.0
        %2830 = vmatpush1.msra.mxu0 0.0
        %2831 = vmatprep.subr.mxu0 0.0
        %2832 = vmatpush1.msra.mxu0 0.0
        %2833 = vmatprep.subr.mxu0 0.0
        %2834 = vmatpush1.msra.mxu0 0.0
        %2835 = vmatprep.subr.mxu0 0.0
        %2836 = vmatpush1.msra.mxu0 0.0
        %2837 = vmatprep.subr.mxu0 0.0
        %2838 = vmatpush1.msra.mxu0 0.0
        %2839 = vmatprep.subr.mxu0 0.0
        %2840 = vmatpush1.msra.mxu0 0.0
        %2841 = vmatprep.subr.mxu0 0.0
        %2842 = vmatpush1.msra.mxu0 0.0
        %2843 = vmatprep.subr.mxu0 0.0
        %2844 = vmatpush1.msra.mxu0 0.0
        %2845 = vmatprep.subr.mxu0 0.0
        %2846 = vmatpush1.msra.mxu0 0.0
        %2847 = vmatprep.subr.mxu0 0.0
        %2848 = vmatpush1.msra.mxu0 0.0
        %2849 = vmatprep.subr.mxu0 0.0
        %2850 = vmatpush1.msra.mxu0 0.0
        %2851 = vmatprep.subr.mxu0 0.0
        %2852 = vmatpush1.msra.mxu0 0.0
        %2853 = vmatprep.subr.mxu0 0.0
        %2854 = vmatpush1.msra.mxu0 0.0
        %2855 = vmatprep.subr.mxu0 0.0
        %2856 = vmatpush1.msra.mxu0 0.0
        %2857 = vmatprep.subr.mxu0 0.0
        %2858 = vmatpush1.msra.mxu0 0.0
        %2859 = vmatprep.subr.mxu0 0.0
        %2860 = vmatpush1.msra.mxu0 0.0
        %2861 = vmatprep.subr.mxu0 0.0
        %2862 = vmatpush1.msra.mxu0 0.0
        %2863 = vmatprep.subr.mxu0 0.0
        %2864 = vmatpush1.msra.mxu0 0.0
        %2865 = vmatprep.subr.mxu0 0.0
        %2866 = vmatpush1.msra.mxu0 0.0
        %2867 = vmatprep.subr.mxu0 0.0
        %2868 = vmatpush1.msra.mxu0 0.0
        %2869 = vmatprep.subr.mxu0 0.0
        %2870 = vmatpush1.msra.mxu0 0.0
        %2871 = vmatprep.subr.mxu0 0.0
        %2872 = vmatpush1.msra.mxu0 0.0
        %2873 = vmatprep.subr.mxu0 0.0
        %2874 = vmatpush1.msra.mxu0 0.0
        %2875 = vmatprep.subr.mxu0 0.0
        %2876 = vmatpush1.msra.mxu0 0.0
        %2877 = vmatprep.subr.mxu0 0.0
        %2878 = vmatpush1.msra.mxu0 0.0
        %2879 = vmatprep.subr.mxu0 0.0
        %2880 = vmatpush1.msra.mxu0 0.0
        %2881 = vmatprep.subr.mxu0 0.0
        %2882 = vmatpush1.msra.mxu0 0.0
        %2883 = vmatprep.mubr.f32.mxu0 0.0
        %2884 = vmatmul.mubr.f32.gmra.mrb[0].mxu0 %v2724
        %v2885 = vpop.f32.mrb[0].mxu0
        %v2886 = vadd.f32 0.0, %v2885
        %v2887 = vpop.f32.mrb[0].mxu0
        %v2888 = vadd.f32 0.0, %v2887
        %2889 = vmatprep.mubr.f32.mxu0 0.0
        %2890 = vmatmul.mubr.f32.gmra.mrb[0].mxu0 %v2727
        %v2891 = vpop.f32.mrb[0].mxu0
        %v2892 = vadd.f32 0.0, %v2891
        %v2893 = vpop.f32.mrb[0].mxu0
        %v2894 = vadd.f32 0.0, %v2893
        %2895 = vmatprep.mubr.f32.mxu0 0.0
        %2896 = vmatmul.mubr.f32.gmra.mrb[0].mxu0 %v2730
        %v2897 = vpop.f32.mrb[0].mxu0
        %v2898 = vadd.f32 0.0, %v2897
        %v2899 = vpop.f32.mrb[0].mxu0
        %v2900 = vadd.f32 0.0, %v2899
        %2901 = vmatprep.mubr.f32.mxu0 0.0
        %2902 = vmatmul.mubr.f32.gmra.mrb[0].mxu0 %v2733
        %v2903 = vpop.f32.mrb[0].mxu0
        %v2904 = vadd.f32 0.0, %v2903
        %v2905 = vpop.f32.mrb[0].mxu0
        %v2906 = vadd.f32 0.0, %v2905
        %2907 = vmatprep.mubr.f32.mxu0 0.0
        %2908 = vmatmul.mubr.f32.gmra.mrb[0].mxu0 %v2736
        %v2909 = vpop.f32.mrb[0].mxu0
        %v2910 = vadd.f32 0.0, %v2909
        %v2911 = vpop.f32.mrb[0].mxu0
        %v2912 = vadd.f32 0.0, %v2911
        %2913 = vmatprep.mubr.f32.mxu0 0.0
        %2914 = vmatmul.mubr.f32.gmra.mrb[0].mxu0 %v2739
        %v2915 = vpop.f32.mrb[0].mxu0
        %v2916 = vadd.f32 0.0, %v2915
        %v2917 = vpop.f32.mrb[0].mxu0
        %v2918 = vadd.f32 0.0, %v2917
        %2919 = vmatprep.mubr.f32.mxu0 0.0
        %2920 = vmatmul.mubr.f32.gmra.mrb[0].mxu0 %v2742
        %v2921 = vpop.f32.mrb[0].mxu0
        %v2922 = vadd.f32 0.0, %v2921
        %v2923 = vpop.f32.mrb[0].mxu0
        %v2924 = vadd.f32 0.0, %v2923
        %2925 = vmatprep.mubr.f32.mxu0 0.0
        %2926 = vmatmul.mubr.f32.gmra.mrb[0].mxu0 %v2745
        %v2927 = vpop.f32.mrb[0].mxu0
        %v2928 = vadd.f32 0.0, %v2927
        %v2929 = vpop.f32.mrb[0].mxu0
        %v2930 = vadd.f32 0.0, %v2929
        %2931 = vmatprep.mubr.f32.mxu0 0.0
        %2932 = vmatmul.mubr.f32.gmra.mrb[0].mxu0 %v2748
        %v2933 = vpop.f32.mrb[0].mxu0
        %v2934 = vadd.f32 0.0, %v2933
        %v2935 = vpop.f32.mrb[0].mxu0
        %v2936 = vadd.f32 0.0, %v2935
        %2937 = vmatprep.mubr.f32.mxu0 0.0
        %2938 = vmatmul.mubr.f32.gmra.mrb[0].mxu0 %v2751
        %v2939 = vpop.f32.mrb[0].mxu0
        %v2940 = vadd.f32 0.0, %v2939
        %v2941 = vpop.f32.mrb[0].mxu0
        %v2942 = vadd.f32 0.0, %v2941
        %2943 = vmatprep.mubr.f32.mxu0 0.0
        %2944 = vmatmul.mubr.f32.gmra.mrb[0].mxu0 %v2754
        %v2945 = vpop.f32.mrb[0].mxu0
        %v2946 = vadd.f32 0.0, %v2945
        %v2947 = vpop.f32.mrb[0].mxu0
        %v2948 = vadd.f32 0.0, %v2947
        %2949 = vmatprep.mubr.f32.mxu0 0.0
        %2950 = vmatmul.mubr.f32.gmra.mrb[0].mxu0 %v2757
        %v2951 = vpop.f32.mrb[0].mxu0
        %v2952 = vadd.f32 0.0, %v2951
        %v2953 = vpop.f32.mrb[0].mxu0
        %v2954 = vadd.f32 0.0, %v2953
        %2955 = vmatprep.mubr.f32.mxu0 0.0
        %2956 = vmatmul.mubr.f32.gmra.mrb[0].mxu0 %v2760
        %v2957 = vpop.f32.mrb[0].mxu0
        %v2958 = vadd.f32 0.0, %v2957
        %v2959 = vpop.f32.mrb[0].mxu0
        %v2960 = vadd.f32 0.0, %v2959
        %2961 = vmatprep.mubr.f32.mxu0 0.0
        %2962 = vmatmul.mubr.f32.gmra.mrb[0].mxu0 %v2763
        %v2963 = vpop.f32.mrb[0].mxu0
        %v2964 = vadd.f32 0.0, %v2963
        %v2965 = vpop.f32.mrb[0].mxu0
        %v2966 = vadd.f32 0.0, %v2965
        %2967 = vmatprep.mubr.f32.mxu0 0.0
        %2968 = vmatmul.mubr.f32.gmra.mrb[0].mxu0 %v2766
        %v2969 = vpop.f32.mrb[0].mxu0
        %v2970 = vadd.f32 0.0, %v2969
        %v2971 = vpop.f32.mrb[0].mxu0
        %v2972 = vadd.f32 0.0, %v2971
        %2973 = vmatprep.mubr.f32.mxu0 0.0
        %2974 = vmatmul.mubr.f32.gmra.mrb[0].mxu0 %v2769
        %v2975 = vpop.f32.mrb[0].mxu0
        %v2976 = vadd.f32 0.0, %v2975
        %v2977 = vpop.f32.mrb[0].mxu0
        %v2978 = vadd.f32 0.0, %v2977
        %2979 = vmatprep.mubr.f32.mxu0 0.0
        %2980 = vmatmul.mubr.f32.gmra.mrb[0].mxu0 %v2772
        %v2981 = vpop.f32.mrb[0].mxu0
        %v2982 = vadd.f32 0.0, %v2981
        %v2983 = vpop.f32.mrb[0].mxu0
        %v2984 = vadd.f32 0.0, %v2983
        %2985 = vmatprep.mubr.f32.mxu0 0.0
        %2986 = vmatmul.mubr.f32.gmra.mrb[0].mxu0 %v2775
        %v2987 = vpop.f32.mrb[0].mxu0
        %v2988 = vadd.f32 0.0, %v2987
        %v2989 = vpop.f32.mrb[0].mxu0
        %v2990 = vadd.f32 0.0, %v2989
        %2991 = vmatprep.mubr.f32.mxu0 0.0
        %2992 = vmatmul.mubr.f32.gmra.mrb[0].mxu0 %v2778
        %v2993 = vpop.f32.mrb[0].mxu0
        %v2994 = vadd.f32 0.0, %v2993
        %v2995 = vpop.f32.mrb[0].mxu0
        %v2996 = vadd.f32 0.0, %v2995
        %2997 = vmatprep.mubr.f32.mxu0 0.0
        %2998 = vmatmul.mubr.f32.gmra.mrb[0].mxu0 %v2781
        %v2999 = vpop.f32.mrb[0].mxu0
        %v3000 = vadd.f32 0.0, %v2999
        %v3001 = vpop.f32.mrb[0].mxu0
        %v3002 = vadd.f32 0.0, %v3001
        %3003 = vmatprep.mubr.f32.mxu0 0.0
        %3004 = vmatmul.mubr.f32.gmra.mrb[0].mxu0 %v2784
        %v3005 = vpop.f32.mrb[0].mxu0
        %v3006 = vadd.f32 0.0, %v3005
        %v3007 = vpop.f32.mrb[0].mxu0
        %v3008 = vadd.f32 0.0, %v3007
        %3009 = vmatprep.mubr.f32.mxu0 0.0
        %3010 = vmatmul.mubr.f32.gmra.mrb[0].mxu0 %v2787
        %v3011 = vpop.f32.mrb[0].mxu0
        %v3012 = vadd.f32 0.0, %v3011
        %v3013 = vpop.f32.mrb[0].mxu0
        %v3014 = vadd.f32 0.0, %v3013
        %3015 = vmatprep.mubr.f32.mxu0 0.0
        %3016 = vmatmul.mubr.f32.gmra.mrb[0].mxu0 %v2790
        %v3017 = vpop.f32.mrb[0].mxu0
        %v3018 = vadd.f32 0.0, %v3017
        %v3019 = vpop.f32.mrb[0].mxu0
        %v3020 = vadd.f32 0.0, %v3019
        %3021 = vmatprep.mubr.f32.mxu0 0.0
        %3022 = vmatmul.mubr.f32.gmra.mrb[0].mxu0 %v2793
        %v3023 = vpop.f32.mrb[0].mxu0
        %v3024 = vadd.f32 0.0, %v3023
        %v3025 = vpop.f32.mrb[0].mxu0
        %v3026 = vadd.f32 0.0, %v3025
        %3027 = vmatprep.mubr.f32.mxu0 0.0
        %3028 = vmatmul.mubr.f32.gmra.mrb[0].mxu0 %v2796
        %v3029 = vpop.f32.mrb[0].mxu0
        %v3030 = vadd.f32 0.0, %v3029
        %v3031 = vpop.f32.mrb[0].mxu0
        %v3032 = vadd.f32 0.0, %v3031
        %3033 = vmatprep.mubr.f32.mxu0 0.0
        %3034 = vmatmul.mubr.f32.gmra.mrb[0].mxu0 %v2799
        %v3035 = vpop.f32.mrb[0].mxu0
        %v3036 = vadd.f32 0.0, %v3035
        %v3037 = vpop.f32.mrb[0].mxu0
        %v3038 = vadd.f32 0.0, %v3037
        %3039 = vmatprep.mubr.f32.mxu0 0.0
        %3040 = vmatmul.mubr.f32.gmra.mrb[0].mxu0 %v2802
        %v3041 = vpop.f32.mrb[0].mxu0
        %v3042 = vadd.f32 0.0, %v3041
        %v3043 = vpop.f32.mrb[0].mxu0
        %v3044 = vadd.f32 0.0, %v3043
        %3045 = vmatprep.mubr.f32.mxu0 0.0
        %3046 = vmatmul.mubr.f32.gmra.mrb[0].mxu0 %v2805
        %v3047 = vpop.f32.mrb[0].mxu0
        %v3048 = vadd.f32 0.0, %v3047
        %v3049 = vpop.f32.mrb[0].mxu0
        %v3050 = vadd.f32 0.0, %v3049
        %3051 = vmatprep.mubr.f32.mxu0 0.0
        %3052 = vmatmul.mubr.f32.gmra.mrb[0].mxu0 %v2808
        %v3053 = vpop.f32.mrb[0].mxu0
        %v3054 = vadd.f32 0.0, %v3053
        %v3055 = vpop.f32.mrb[0].mxu0
        %v3056 = vadd.f32 0.0, %v3055
        %3057 = vmatprep.mubr.f32.mxu0 0.0
        %3058 = vmatmul.mubr.f32.gmra.mrb[0].mxu0 %v2811
        %v3059 = vpop.f32.mrb[0].mxu0
        %v3060 = vadd.f32 0.0, %v3059
        %v3061 = vpop.f32.mrb[0].mxu0
        %v3062 = vadd.f32 0.0, %v3061
        %3063 = vmatprep.mubr.f32.mxu0 0.0
        %3064 = vmatmul.mubr.f32.gmra.mrb[0].mxu0 %v2814
        %v3065 = vpop.f32.mrb[0].mxu0
        %v3066 = vadd.f32 0.0, %v3065
        %v3067 = vpop.f32.mrb[0].mxu0
        %v3068 = vadd.f32 0.0, %v3067
        %3069 = vmatprep.mubr.f32.mxu0 0.0
        %3070 = vmatmul.mubr.f32.gmra.mrb[0].mxu0 %v2817
        %v3071 = vpop.f32.mrb[0].mxu0
        %v3072 = vadd.f32 0.0, %v3071
        %v3073 = vpop.f32.mrb[0].mxu0
        %v3074 = vadd.f32 0.0, %v3073
        %3075 = vdwg.mxu0
        %v3076 = vmul.f32 %v2886, %v2659
        %v3077 = vmul.f32 %v2888, %v2660
        %v3078 = vmul.f32 %v2892, %v2661
        %v3079 = vmul.f32 %v2894, %v2662
        %v3080 = vmul.f32 %v2898, %v2663
        %v3081 = vmul.f32 %v2900, %v2664
        %v3082 = vmul.f32 %v2904, %v2665
        %v3083 = vmul.f32 %v2906, %v2666
        %v3084 = vmul.f32 %v2910, %v2667
        %v3085 = vmul.f32 %v2912, %v2668
        %v3086 = vmul.f32 %v2916, %v2669
        %v3087 = vmul.f32 %v2918, %v2670
        %v3088 = vmul.f32 %v2922, %v2671
        %v3089 = vmul.f32 %v2924, %v2672
        %v3090 = vmul.f32 %v2928, %v2673
        %v3091 = vmul.f32 %v2930, %v2674
        %v3092 = vmul.f32 %v2934, %v2675
        %v3093 = vmul.f32 %v2936, %v2676
        %v3094 = vmul.f32 %v2940, %v2677
        %v3095 = vmul.f32 %v2942, %v2678
        %v3096 = vmul.f32 %v2946, %v2679
        %v3097 = vmul.f32 %v2948, %v2680
        %v3098 = vmul.f32 %v2952, %v2681
        %v3099 = vmul.f32 %v2954, %v2682
        %v3100 = vmul.f32 %v2958, %v2683
        %v3101 = vmul.f32 %v2960, %v2684
        %v3102 = vmul.f32 %v2964, %v2685
        %v3103 = vmul.f32 %v2966, %v2686
        %v3104 = vmul.f32 %v2970, %v2687
        %v3105 = vmul.f32 %v2972, %v2688
        %v3106 = vmul.f32 %v2976, %v2689
        %v3107 = vmul.f32 %v2978, %v2690
        %v3108 = vmul.f32 %v2982, %v2691
        %v3109 = vmul.f32 %v2984, %v2692
        %v3110 = vmul.f32 %v2988, %v2693
        %v3111 = vmul.f32 %v2990, %v2694
        %v3112 = vmul.f32 %v2994, %v2695
        %v3113 = vmul.f32 %v2996, %v2696
        %v3114 = vmul.f32 %v3000, %v2697
        %v3115 = vmul.f32 %v3002, %v2698
        %v3116 = vmul.f32 %v3006, %v2699
        %v3117 = vmul.f32 %v3008, %v2700
        %v3118 = vmul.f32 %v3012, %v2701
        %v3119 = vmul.f32 %v3014, %v2702
        %v3120 = vmul.f32 %v3018, %v2703
        %v3121 = vmul.f32 %v3020, %v2704
        %v3122 = vmul.f32 %v3024, %v2705
        %v3123 = vmul.f32 %v3026, %v2706
        %v3124 = vmul.f32 %v3030, %v2707
        %v3125 = vmul.f32 %v3032, %v2708
        %v3126 = vmul.f32 %v3036, %v2709
        %v3127 = vmul.f32 %v3038, %v2710
        %v3128 = vmul.f32 %v3042, %v2711
        %v3129 = vmul.f32 %v3044, %v2712
        %v3130 = vmul.f32 %v3048, %v2713
        %v3131 = vmul.f32 %v3050, %v2714
        %v3132 = vmul.f32 %v3054, %v2715
        %v3133 = vmul.f32 %v3056, %v2716
        %v3134 = vmul.f32 %v3060, %v2717
        %v3135 = vmul.f32 %v3062, %v2718
        %v3136 = vmul.f32 %v3066, %v2719
        %v3137 = vmul.f32 %v3068, %v2720
        %v3138 = vmul.f32 %v3072, %v2721
        %v3139 = vmul.f32 %v3074, %v2722
        %3140 = vmatprep.subr.mxu0 %v3077
        %3141 = vmatpush1.msra.mxu0 %v3076
        %3142 = vmatprep.subr.mxu0 %v3079
        %3143 = vmatpush1.msra.mxu0 %v3078
        %3144 = vmatprep.subr.mxu0 %v3081
        %3145 = vmatpush1.msra.mxu0 %v3080
        %3146 = vmatprep.subr.mxu0 %v3083
        %3147 = vmatpush1.msra.mxu0 %v3082
        %3148 = vmatprep.subr.mxu0 %v3085
        %3149 = vmatpush1.msra.mxu0 %v3084
        %3150 = vmatprep.subr.mxu0 %v3087
        %3151 = vmatpush1.msra.mxu0 %v3086
        %3152 = vmatprep.subr.mxu0 %v3089
        %3153 = vmatpush1.msra.mxu0 %v3088
        %3154 = vmatprep.subr.mxu0 %v3091
        %3155 = vmatpush1.msra.mxu0 %v3090
        %3156 = vmatprep.subr.mxu0 %v3093
        %3157 = vmatpush1.msra.mxu0 %v3092
        %3158 = vmatprep.subr.mxu0 %v3095
        %3159 = vmatpush1.msra.mxu0 %v3094
        %3160 = vmatprep.subr.mxu0 %v3097
        %3161 = vmatpush1.msra.mxu0 %v3096
        %3162 = vmatprep.subr.mxu0 %v3099
        %3163 = vmatpush1.msra.mxu0 %v3098
        %3164 = vmatprep.subr.mxu0 %v3101
        %3165 = vmatpush1.msra.mxu0 %v3100
        %3166 = vmatprep.subr.mxu0 %v3103
        %3167 = vmatpush1.msra.mxu0 %v3102
        %3168 = vmatprep.subr.mxu0 %v3105
        %3169 = vmatpush1.msra.mxu0 %v3104
        %3170 = vmatprep.subr.mxu0 %v3107
        %3171 = vmatpush1.msra.mxu0 %v3106
        %3172 = vmatprep.subr.mxu0 %v3109
        %3173 = vmatpush1.msra.mxu0 %v3108
        %3174 = vmatprep.subr.mxu0 %v3111
        %3175 = vmatpush1.msra.mxu0 %v3110
        %3176 = vmatprep.subr.mxu0 %v3113
        %3177 = vmatpush1.msra.mxu0 %v3112
        %3178 = vmatprep.subr.mxu0 %v3115
        %3179 = vmatpush1.msra.mxu0 %v3114
        %3180 = vmatprep.subr.mxu0 %v3117
        %3181 = vmatpush1.msra.mxu0 %v3116
        %3182 = vmatprep.subr.mxu0 %v3119
        %3183 = vmatpush1.msra.mxu0 %v3118
        %3184 = vmatprep.subr.mxu0 %v3121
        %3185 = vmatpush1.msra.mxu0 %v3120
        %3186 = vmatprep.subr.mxu0 %v3123
        %3187 = vmatpush1.msra.mxu0 %v3122
        %3188 = vmatprep.subr.mxu0 %v3125
        %3189 = vmatpush1.msra.mxu0 %v3124
        %3190 = vmatprep.subr.mxu0 %v3127
        %3191 = vmatpush1.msra.mxu0 %v3126
        %3192 = vmatprep.subr.mxu0 %v3129
        %3193 = vmatpush1.msra.mxu0 %v3128
        %3194 = vmatprep.subr.mxu0 %v3131
        %3195 = vmatpush1.msra.mxu0 %v3130
        %3196 = vmatprep.subr.mxu0 %v3133
        %3197 = vmatpush1.msra.mxu0 %v3132
        %3198 = vmatprep.subr.mxu0 %v3135
        %3199 = vmatpush1.msra.mxu0 %v3134
        %3200 = vmatprep.subr.mxu0 %v3137
        %3201 = vmatpush1.msra.mxu0 %v3136
        %3202 = vmatprep.subr.mxu0 %v3139
        %3203 = vmatpush1.msra.mxu0 %v3138
        %3204 = vmatprep.mubr.f32.mxu0 %v2658
        %3205 = vmatmul.mubr.f32.gmra.mrb[0].mxu0 %v2657
        %v3206 = vpop.f32.mrb[0].mxu0
        %v3207 = vadd.f32 0.0, %v3206
        %v3208 = vpop.f32.mrb[0].mxu0
        %v3209 = vadd.f32 0.0, %v3208
        %3210 = vdwg.mxu0
        %v3211 = vmul.f32 %v3207, %v3207
        %v3212 = vmul.f32 %v3209, %v3209
        %v3213 = vadd.f32 %v3211, %v3212
        %3214 = vadd.xlane.f32.xlu0 %v3213
        %v3215 = vpop.xlane.xlu0 %3214
        %v3216 = vrcp.pop 256.0
        %v3217 = vmul.f32 %v3215, %v3216
        %v3218 = vadd.f32 %v3217, 1e-09
        %v3219 = vlog2.pop %v3218
        %v3220 = vmul.f32 %v3219, 0.6931472
        %v3221 = vmul.f32 %v3220, 0.4342945
        %v3222 = vmul.f32 %v3221, 10.0
        %v3223 = vadd.f32 %v3222, -0.691
        %v3224 = vsub.f32 -24.0, %v3223
        %v3225 = vrcp.pop 20.0
        %v3226 = vmul.f32 %v3224, %v3225
        %v3227 = vpow.f32 10.0, %v3226
        %v3228 = vmul.f32 %v3207, %v3227
        %v3229 = vmul.f32 %v3209, %v3227
        %3230 = vst [vmem:[%s271] sm:$0xff] %v3228
        %3231 = vst [vmem:[%s271 + $0x8] sm:$0xff] %v3229
        %s3232 = smul.u32 8, %s22
        %p3233 = scmp.lt.s32.totalorder %s3232, 15
        %s3234 = scalar_select %p3233, %s3232, 15
        %s3235 = smul.addr %s3234, 8
        %s3236 = scalar_lea.vmem %s4, %s3235
        %s3237 = sand.u32 %s150, 1
        %s3238 = scalar_lea.sflag [#allocation4], %s3237
        %s3239 = sand.u32 %s150, 1
        %s3240 = smul.addr %s3239, 16
        %s3241 = scalar_lea.vmem [#allocation7], %s3240
        // Predicated region
        $region45: #{_forward_arrays.1} parent=35 // pred_check
          %p3242 = pneg %p134
        $region46: #{_forward_arrays.1} parent=35 // pred_check_branch
          %3244 = sbr.rel (%p3242) target = $region48
        $region47: #{_forward_arrays.1} parent=35 // pred_region
          %s3245 = smul.u32 8, %s22
        $region48: #{_forward_arrays.1} parent=35 // pred_fallthru
          _
        // Predicated region
        $region49: #{_forward_arrays.1} parent=35 // pred_check
          %p3246 = pneg %p160
        $region50: #{_forward_arrays.1} parent=35 // pred_check_branch
          %3248 = sbr.rel (%p3246) target = $region52
        $region51: #{_forward_arrays.1} parent=35 // pred_region
          %s3250 = ssub.s32 256, 256
          %3251 = vsyncadd %s3238, %s3250
          %s3252 = smul.addr %s22, 2
          %s3253 = smul.addr %s3252, 128
          %s3254 = scalar_lea.hbm %s5, %s3253
          %s3256 = sshll.u32 %s3241, 4
          %s3257 = int_to_ptr.vmem [resolvable:$true] %s3256
          %3259 = dma.vmem_to_hbm [thread:$0]  %s3257, 256, %s3254, %s3238
        $region52: #{_forward_arrays.1} parent=35 // pred_fallthru
          _
      $region36: #{_forward_arrays.1} parent=5 // pred_fallthru
        _
      %p3260 = scmp.le.s32.totalorder 2, %s17
      // Predicated region
      $region53: #{_forward_arrays.1} parent=5 // pred_check
        %p3261 = pneg %p3260
      $region54: #{_forward_arrays.1} parent=5 // pred_check_branch
        %3263 = sbr.rel (%p3261) target = $region56
      $region55: #{_forward_arrays.1} parent=5 // pred_region
        %s3264 = ssub.s32 %s17, 2
        // Predicated region
        $region57: #{_forward_arrays.1} parent=55 // pred_check
          %p3265 = pneg %p140
        $region58: #{_forward_arrays.1} parent=55 // pred_check_branch
          %3267 = sbr.rel (%p3265) target = $region60
        $region59: #{_forward_arrays.1} parent=55 // pred_region
          %s3268 = smul.u32 8, %s23
          %p3269 = scmp.lt.s32.totalorder %s3268, 15
          %s3270 = scalar_select %p3269, %s3268, 15
          %s3271 = smul.addr %s3270, 8
          %s3272 = scalar_lea.vmem %s4, %s3271
        $region60: #{_forward_arrays.1} parent=55 // pred_fallthru
          _
        // Predicated region
        $region61: #{_forward_arrays.1} parent=55 // pred_check
          %p3273 = pneg %p166
        $region62: #{_forward_arrays.1} parent=55 // pred_check_branch
          %3275 = sbr.rel (%p3273) target = $region64
        $region63: #{_forward_arrays.1} parent=55 // pred_region
          %s3276 = sand.u32 %s151, 1
          %s3277 = scalar_lea.sflag [#allocation4], %s3276
          %s3278 = sand.u32 %s151, 1
          %s3279 = smul.addr %s3278, 16
          %s3280 = scalar_lea.vmem [#allocation7], %s3279
          %3281 = dma.done %s3277, 256
        $region64: #{_forward_arrays.1} parent=55 // pred_fallthru
          _
      $region56: #{_forward_arrays.1} parent=5 // pred_fallthru
        _
    $region6: #{_forward_arrays.1} parent=1 // loop_footer
      %s21 = sadd.s32 1, %s17
    $region7: #{_forward_arrays.1} parent=1 // loop_footer_branch
      %16 = sbr.rel target = $region3
    $region8: #{_forward_arrays.1} parent=1 // loop_exit
      _
    %3282 = vsyncpa [#allocation3], 1
    %s3283 = scalar_lea.sflag [#allocation3], 1
    %3284 = vsyncpa %s3283, 1
    %3285 = vsyncpa [#allocation6], 1
    %3286 = vsyncpa [#allocation4], 1
    %s3287 = scalar_lea.sflag [#allocation4], 1
    %3288 = vsyncpa %s3287, 1

</llo_original>
